<compile_context>
chip_gen: v7x
topology: tpu7x:2x2x1
jax: 0.10.0
libtpu: 0.0.40
codegen_flags: <defaults>
</compile_context>

<pallas_src>
import math
from functools import partial

import jax
import jax.numpy as jnp
from jax.experimental import pallas as pl
from jax.experimental.pallas import tpu as pltpu


def _vmem_capacity_bytes():
    try:
        info = pltpu.get_tpu_info()
        cap = getattr(info, "vmem_capacity_bytes", None)
        if cap:
            return int(cap)
    except Exception:
        pass
    return 64 * 1024 * 1024  # conservative (v7x-sized) fallback


def _pick_row_tile(ho, wo, cin, cout, wci, budget_bytes, max_unroll=32):
    """Output rows per grid step.

    Layout rule: th == ho (block == whole image, block dims equal array dims)
    or (th * wo) % 128 == 0 (lane-dense input/output blocks).
    Budget rule: double-buffered f32 in+out slabs fit `budget_bytes`.
    The per-row loop is statically unrolled, so th is also capped.
    """
    per_row = 8 * (2 * cin * wci) + 8 * (cout * wo)  # 2 bufs * 4 B * (in + out)
    fit = max(1, budget_bytes // per_row)
    step = 128 // math.gcd(128, wo)  # smallest th with (th * wo) % 128 == 0
    limit = min(ho, max_unroll, fit)
    if step <= limit:
        return (limit // step) * step
    # No lane-aligned tile fits the caps: whole-image rows for small images,
    # otherwise the smallest lane-aligned tile.
    if ho <= max(max_unroll, step):
        return ho
    return min(ho, step)


def _ensure_parallel_steps(th, ho, wo, n, min_steps=4):
    """Shrink th (staying layout-legal) so the grid has a few steps: gives both
    v7x TensorCores work and lets the double-buffer pipeline overlap DMAs."""
    steps = n * (-(-ho // th))
    if steps >= min_steps or th <= 1:
        return th
    step = 128 // math.gcd(128, wo)
    target = max(1, (n * ho + min_steps - 1) // min_steps)
    cand = (min(th, target) // step) * step
    if cand == 0 and step < th:
        cand = step
    if 0 < cand < th:
        return cand
    return th


def _down_kernel(w_ref, s_ref, x_ref, o_ref, *, th, wci, wo):
    # w_ref: (4, Cout, Cin)      resident weight taps [w00, w01, w10, w11]
    # s_ref: (2, W, Wo)          resident 0/1 column-selection matrices
    # x_ref: (1, Cin, 2*th*W)    flat NCHW input rows (th output-row pairs)
    # o_ref: (1, Cout, th*Wo)    flat NCHW output rows (lane-dense)
    w00 = w_ref[0]
    w01 = w_ref[1]
    w10 = w_ref[2]
    w11 = w_ref[3]
    s_even = s_ref[0]
    s_odd = s_ref[1]
    for y in range(th):  # static unroll; th is a small Python int
        base = 2 * y * wci
        a = x_ref[0, :, base:base + wci]             # (Cin, W) input row 2y
        b = x_ref[0, :, base + wci:base + 2 * wci]   # (Cin, W) input row 2y+1
        # Apply the four weight taps to the full-width rows (MXU).
        g_even = (jnp.dot(w00, a, preferred_element_type=jnp.float32) +
                  jnp.dot(w10, b, preferred_element_type=jnp.float32))
        g_odd = (jnp.dot(w01, a, preferred_element_type=jnp.float32) +
                 jnp.dot(w11, b, preferred_element_type=jnp.float32))
        # Even/odd column de-interleave via 0/1 selection matmuls (MXU); avoids
        # lane-strided loads / sublane<->lane reshapes that may not lower.
        row = (jnp.dot(g_even, s_even, preferred_element_type=jnp.float32) +
               jnp.dot(g_odd, s_odd, preferred_element_type=jnp.float32))
        o_ref[0, :, y * wo:(y + 1) * wo] = row.astype(o_ref.dtype)


def downscaling_forward(x_nchw, weight_oihw):
    """torch.nn.Conv2d(C_in, C_out, (2, 2), stride=(2, 2), bias=False).

    x_nchw:      (N, C_in, H, W)      float32
    weight_oihw: (C_out, C_in, 2, 2)  float32 (PyTorch layout)
    returns:     (N, C_out, H//2, W//2) float32
    """
    n, cin, h, w = x_nchw.shape
    cout = weight_oihw.shape[0]
    ho, wo = h // 2, w // 2
    hci, wci = 2 * ho, 2 * wo  # PyTorch drops a trailing odd row/column

    x = x_nchw.astype(jnp.float32)
    if (h, w) != (hci, wci):
        x = x[:, :, :hci, :wci]
    # Free (row-major) flatten: the kernel reads native NCHW rows directly.
    x_flat = x.reshape(n, cin, hci * wci)

    # Weight (Cout, Cin, 2, 2) -> (4, Cout, Cin), tap index t = 2*kh + kw.
    w4 = jnp.transpose(weight_oihw, (2, 3, 0, 1)).reshape(4, cout, cin)
    w4 = w4.astype(jnp.float32)

    # Column selection: s_even[c, x] = [c == 2x], s_odd[c, x] = [c == 2x + 1].
    col = jnp.arange(wci, dtype=jnp.int32)[:, None]
    out_col = jnp.arange(wo, dtype=jnp.int32)[None, :]
    sel = jnp.stack(
        [(col == 2 * out_col).astype(jnp.float32),
         (col == 2 * out_col + 1).astype(jnp.float32)],
        axis=0,
    )  # (2, W, Wo)

    # ---- generation-aware tiling -------------------------------------------
    cap = _vmem_capacity_bytes()               # 128 MiB v5e/v6e, 64 MiB v7x
    vmem_limit = min(int(0.75 * cap), 100 * 1024 * 1024)
    tile_budget = vmem_limit // 2
    th = _pick_row_tile(ho, wo, cin, cout, wci, tile_budget)
    th = _ensure_parallel_steps(th, ho, wo, n)
    # The compiler limit must cover the chosen (double-buffered) blocks plus
    # the resident weight/selection tables and some scratch headroom.
    blk_bytes = (8 * cin * 2 * th * wci + 8 * cout * th * wo +
                 8 * (4 * cout * cin + 2 * wci * wo) + (4 << 20))
    vmem_limit = max(vmem_limit, min(int(0.9 * cap), blk_bytes))

    grid = (n, pl.cdiv(ho, th))

    flops = n * ho * (8 * cout * cin * wci + 4 * cout * wci * wo)
    bytes_accessed = 4 * (n * cin * hci * wci + n * cout * ho * wo
                          + 4 * cout * cin + 2 * wci * wo)
    cost = pl.CostEstimate(flops=flops, transcendentals=0,
                           bytes_accessed=bytes_accessed)

    out_flat = pl.pallas_call(
        partial(_down_kernel, th=th, wci=wci, wo=wo),
        out_shape=jax.ShapeDtypeStruct((n, cout, ho * wo), jnp.float32),
        grid=grid,
        in_specs=[
            # Constant index maps -> weights / selection tables stay resident.
            pl.BlockSpec((4, cout, cin), lambda b, i: (0, 0, 0)),
            pl.BlockSpec((2, wci, wo), lambda b, i: (0, 0, 0)),
            # th output-row pairs of raw NCHW rows, lane-dense minor dim.
            pl.BlockSpec((1, cin, 2 * th * wci), lambda b, i: (b, 0, i)),
        ],
        out_specs=pl.BlockSpec((1, cout, th * wo), lambda b, i: (b, 0, i)),
        compiler_params=pltpu.CompilerParams(
            dimension_semantics=("parallel", "parallel"),
            vmem_limit_bytes=int(vmem_limit),
        ),
        cost_estimate=cost,
    )(w4, sel, x_flat)

    # Free (layout-preserving) reshape back to NCHW.
    return out_flat.reshape(n, cout, ho, wo)


if __name__ == "__main__":
    key = jax.random.PRNGKey(0)
    kx, kw_ = jax.random.split(key)

    n, cin, h, w = 2, 4, 16, 16
    cout = 8

    x = jax.random.normal(kx, (n, cin, h, w), dtype=jnp.float32)
    weight = jax.random.normal(kw_, (cout, cin, 2, 2), dtype=jnp.float32) * 0.1

    fwd = jax.jit(downscaling_forward)
    out = jax.block_until_ready(fwd(x, weight))

    # Reference: XLA conv with the same semantics as torch Conv2d(k=2, s=2).
    ref = jax.lax.conv_general_dilated(
        x, weight, window_strides=(2, 2), padding="VALID",
        dimension_numbers=("NCHW", "OIHW", "NCHW"),
    )
    assert out.shape == (n, cout, h // 2, w // 2), out.shape
    assert jnp.allclose(out, ref, atol=1e-4, rtol=1e-4), float(
        jnp.max(jnp.abs(out - ref)))

    print("KERNEL_OK")
</pallas_src>

<mosaic_0001>
module attributes {stable_mosaic.version = 11 : i64} {
  func.func @_down_kernel(%arg0: i32, %arg1: i32, %arg2: memref<4x8x4xf32, #tpu.memory_space<vmem>>, %arg3: memref<2x16x8xf32, #tpu.memory_space<vmem>>, %arg4: memref<1x4x256xf32, #tpu.memory_space<vmem>>, %arg5: memref<1x8x64xf32, #tpu.memory_space<vmem>>) attributes {dimension_semantics = [#tpu.dimension_semantics<parallel>, #tpu.dimension_semantics<parallel>], iteration_bounds = array<i64: 2, 1>, scalar_prefetch = 0 : i64, scratch_operands = 0 : i64, tpu.core_type = #tpu.core_type<tc>, window_params = [{pipeline_mode = #tpu.pipeline_mode<synchronous>, transform_indices = @transform_0, window_bounds = array<i64: 4, 8, 4>}, {pipeline_mode = #tpu.pipeline_mode<synchronous>, transform_indices = @transform_1, window_bounds = array<i64: 2, 16, 8>}, {transform_indices = @transform_2, window_bounds = array<i64: 1, 4, 256>}, {transform_indices = @transform_3, window_bounds = array<i64: 1, 8, 64>}]} {
    %c0 = arith.constant 0 : index
    %c0_0 = arith.constant 0 : index
    %c0_1 = arith.constant 0 : index
    %0 = vector.load %arg2[%c0, %c0_0, %c0_1] : memref<4x8x4xf32, #tpu.memory_space<vmem>>, vector<1x8x4xf32>
    %1 = vector.shape_cast %0 : vector<1x8x4xf32> to vector<8x4xf32>
    %c1 = arith.constant 1 : index
    %c0_2 = arith.constant 0 : index
    %c0_3 = arith.constant 0 : index
    %2 = vector.load %arg2[%c1, %c0_2, %c0_3] : memref<4x8x4xf32, #tpu.memory_space<vmem>>, vector<1x8x4xf32>
    %3 = vector.shape_cast %2 : vector<1x8x4xf32> to vector<8x4xf32>
    %c2 = arith.constant 2 : index
    %c0_4 = arith.constant 0 : index
    %c0_5 = arith.constant 0 : index
    %4 = vector.load %arg2[%c2, %c0_4, %c0_5] : memref<4x8x4xf32, #tpu.memory_space<vmem>>, vector<1x8x4xf32>
    %5 = vector.shape_cast %4 : vector<1x8x4xf32> to vector<8x4xf32>
    %c3 = arith.constant 3 : index
    %c0_6 = arith.constant 0 : index
    %c0_7 = arith.constant 0 : index
    %6 = vector.load %arg2[%c3, %c0_6, %c0_7] : memref<4x8x4xf32, #tpu.memory_space<vmem>>, vector<1x8x4xf32>
    %7 = vector.shape_cast %6 : vector<1x8x4xf32> to vector<8x4xf32>
    %c0_8 = arith.constant 0 : index
    %c0_9 = arith.constant 0 : index
    %c0_10 = arith.constant 0 : index
    %8 = vector.load %arg3[%c0_8, %c0_9, %c0_10] : memref<2x16x8xf32, #tpu.memory_space<vmem>>, vector<1x16x8xf32>
    %9 = vector.shape_cast %8 : vector<1x16x8xf32> to vector<16x8xf32>
    %c1_11 = arith.constant 1 : index
    %c0_12 = arith.constant 0 : index
    %c0_13 = arith.constant 0 : index
    %10 = vector.load %arg3[%c1_11, %c0_12, %c0_13] : memref<2x16x8xf32, #tpu.memory_space<vmem>>, vector<1x16x8xf32>
    %11 = vector.shape_cast %10 : vector<1x16x8xf32> to vector<16x8xf32>
    %c0_14 = arith.constant 0 : index
    %c0_15 = arith.constant 0 : index
    %c0_16 = arith.constant 0 : index
    %12 = vector.load %arg4[%c0_14, %c0_15, %c0_16] : memref<1x4x256xf32, #tpu.memory_space<vmem>>, vector<1x4x16xf32>
    %13 = vector.shape_cast %12 : vector<1x4x16xf32> to vector<4x16xf32>
    %c0_17 = arith.constant 0 : index
    %c0_18 = arith.constant 0 : index
    %c16 = arith.constant 16 : index
    %14 = vector.load %arg4[%c0_17, %c0_18, %c16] : memref<1x4x256xf32, #tpu.memory_space<vmem>>, vector<1x4x16xf32>
    %15 = vector.shape_cast %14 : vector<1x4x16xf32> to vector<4x16xf32>
    %cst = arith.constant dense<0.000000e+00> : vector<8x16xf32>
    %16 = tpu.matmul %1, %13, %cst {dimension_numbers = #tpu.dot_dimension_numbers<[1], [0], [0], [1], [0, 0, 1, 1], [], []>} : vector<8x4xf32>, vector<4x16xf32>, vector<8x16xf32> -> vector<8x16xf32>
    %cst_19 = arith.constant dense<0.000000e+00> : vector<8x16xf32>
    %17 = tpu.matmul %5, %15, %cst_19 {dimension_numbers = #tpu.dot_dimension_numbers<[1], [0], [0], [1], [0, 0, 1, 1], [], []>} : vector<8x4xf32>, vector<4x16xf32>, vector<8x16xf32> -> vector<8x16xf32>
    %18 = arith.addf %16, %17 : vector<8x16xf32>
    %cst_20 = arith.constant dense<0.000000e+00> : vector<8x16xf32>
    %19 = tpu.matmul %3, %13, %cst_20 {dimension_numbers = #tpu.dot_dimension_numbers<[1], [0], [0], [1], [0, 0, 1, 1], [], []>} : vector<8x4xf32>, vector<4x16xf32>, vector<8x16xf32> -> vector<8x16xf32>
    %cst_21 = arith.constant dense<0.000000e+00> : vector<8x16xf32>
    %20 = tpu.matmul %7, %15, %cst_21 {dimension_numbers = #tpu.dot_dimension_numbers<[1], [0], [0], [1], [0, 0, 1, 1], [], []>} : vector<8x4xf32>, vector<4x16xf32>, vector<8x16xf32> -> vector<8x16xf32>
    %21 = arith.addf %19, %20 : vector<8x16xf32>
    %cst_22 = arith.constant dense<0.000000e+00> : vector<8x8xf32>
    %22 = tpu.matmul %18, %9, %cst_22 {dimension_numbers = #tpu.dot_dimension_numbers<[1], [0], [0], [1], [0, 0, 1, 1], [], []>} : vector<8x16xf32>, vector<16x8xf32>, vector<8x8xf32> -> vector<8x8xf32>
    %cst_23 = arith.constant dense<0.000000e+00> : vector<8x8xf32>
    %23 = tpu.matmul %21, %11, %cst_23 {dimension_numbers = #tpu.dot_dimension_numbers<[1], [0], [0], [1], [0, 0, 1, 1], [], []>} : vector<8x16xf32>, vector<16x8xf32>, vector<8x8xf32> -> vector<8x8xf32>
    %24 = arith.addf %22, %23 : vector<8x8xf32>
    %c0_24 = arith.constant 0 : index
    %c0_25 = arith.constant 0 : index
    %c0_26 = arith.constant 0 : index
    %25 = vector.load %arg5[%c0_24, %c0_25, %c0_26] : memref<1x8x64xf32, #tpu.memory_space<vmem>>, vector<1x8x8xf32>
    %26 = vector.shape_cast %25 : vector<1x8x8xf32> to vector<8x8xf32>
    %27 = vector.shape_cast %24 : vector<8x8xf32> to vector<1x8x8xf32>
    tpu.vector_store %arg5[%c0_24, %c0_25, %c0_26], %27 {strides = array<i32>} : memref<1x8x64xf32, #tpu.memory_space<vmem>>, vector<1x8x8xf32>,
    %c0_27 = arith.constant 0 : index
    %c0_28 = arith.constant 0 : index
    %c32 = arith.constant 32 : index
    %28 = vector.load %arg4[%c0_27, %c0_28, %c32] : memref<1x4x256xf32, #tpu.memory_space<vmem>>, vector<1x4x16xf32>
    %29 = vector.shape_cast %28 : vector<1x4x16xf32> to vector<4x16xf32>
    %c0_29 = arith.constant 0 : index
    %c0_30 = arith.constant 0 : index
    %c48 = arith.constant 48 : index
    %30 = vector.load %arg4[%c0_29, %c0_30, %c48] : memref<1x4x256xf32, #tpu.memory_space<vmem>>, vector<1x4x16xf32>
    %31 = vector.shape_cast %30 : vector<1x4x16xf32> to vector<4x16xf32>
    %cst_31 = arith.constant dense<0.000000e+00> : vector<8x16xf32>
    %32 = tpu.matmul %1, %29, %cst_31 {dimension_numbers = #tpu.dot_dimension_numbers<[1], [0], [0], [1], [0, 0, 1, 1], [], []>} : vector<8x4xf32>, vector<4x16xf32>, vector<8x16xf32> -> vector<8x16xf32>
    %cst_32 = arith.constant dense<0.000000e+00> : vector<8x16xf32>
    %33 = tpu.matmul %5, %31, %cst_32 {dimension_numbers = #tpu.dot_dimension_numbers<[1], [0], [0], [1], [0, 0, 1, 1], [], []>} : vector<8x4xf32>, vector<4x16xf32>, vector<8x16xf32> -> vector<8x16xf32>
    %34 = arith.addf %32, %33 : vector<8x16xf32>
    %cst_33 = arith.constant dense<0.000000e+00> : vector<8x16xf32>
    %35 = tpu.matmul %3, %29, %cst_33 {dimension_numbers = #tpu.dot_dimension_numbers<[1], [0], [0], [1], [0, 0, 1, 1], [], []>} : vector<8x4xf32>, vector<4x16xf32>, vector<8x16xf32> -> vector<8x16xf32>
    %cst_34 = arith.constant dense<0.000000e+00> : vector<8x16xf32>
    %36 = tpu.matmul %7, %31, %cst_34 {dimension_numbers = #tpu.dot_dimension_numbers<[1], [0], [0], [1], [0, 0, 1, 1], [], []>} : vector<8x4xf32>, vector<4x16xf32>, vector<8x16xf32> -> vector<8x16xf32>
    %37 = arith.addf %35, %36 : vector<8x16xf32>
    %cst_35 = arith.constant dense<0.000000e+00> : vector<8x8xf32>
    %38 = tpu.matmul %34, %9, %cst_35 {dimension_numbers = #tpu.dot_dimension_numbers<[1], [0], [0], [1], [0, 0, 1, 1], [], []>} : vector<8x16xf32>, vector<16x8xf32>, vector<8x8xf32> -> vector<8x8xf32>
    %cst_36 = arith.constant dense<0.000000e+00> : vector<8x8xf32>
    %39 = tpu.matmul %37, %11, %cst_36 {dimension_numbers = #tpu.dot_dimension_numbers<[1], [0], [0], [1], [0, 0, 1, 1], [], []>} : vector<8x16xf32>, vector<16x8xf32>, vector<8x8xf32> -> vector<8x8xf32>
    %40 = arith.addf %38, %39 : vector<8x8xf32>
    %c0_37 = arith.constant 0 : index
    %c0_38 = arith.constant 0 : index
    %c8 = arith.constant 8 : index
    %41 = vector.load %arg5[%c0_37, %c0_38, %c8] : memref<1x8x64xf32, #tpu.memory_space<vmem>>, vector<1x8x8xf32>
    %42 = vector.shape_cast %41 : vector<1x8x8xf32> to vector<8x8xf32>
    %43 = vector.shape_cast %40 : vector<8x8xf32> to vector<1x8x8xf32>
    tpu.vector_store %arg5[%c0_37, %c0_38, %c8], %43 {strides = array<i32>} : memref<1x8x64xf32, #tpu.memory_space<vmem>>, vector<1x8x8xf32>,
    %c0_39 = arith.constant 0 : index
    %c0_40 = arith.constant 0 : index
    %c64 = arith.constant 64 : index
    %44 = vector.load %arg4[%c0_39, %c0_40, %c64] : memref<1x4x256xf32, #tpu.memory_space<vmem>>, vector<1x4x16xf32>
    %45 = vector.shape_cast %44 : vector<1x4x16xf32> to vector<4x16xf32>
    %c0_41 = arith.constant 0 : index
    %c0_42 = arith.constant 0 : index
    %c80 = arith.constant 80 : index
    %46 = vector.load %arg4[%c0_41, %c0_42, %c80] : memref<1x4x256xf32, #tpu.memory_space<vmem>>, vector<1x4x16xf32>
    %47 = vector.shape_cast %46 : vector<1x4x16xf32> to vector<4x16xf32>
    %cst_43 = arith.constant dense<0.000000e+00> : vector<8x16xf32>
    %48 = tpu.matmul %1, %45, %cst_43 {dimension_numbers = #tpu.dot_dimension_numbers<[1], [0], [0], [1], [0, 0, 1, 1], [], []>} : vector<8x4xf32>, vector<4x16xf32>, vector<8x16xf32> -> vector<8x16xf32>
    %cst_44 = arith.constant dense<0.000000e+00> : vector<8x16xf32>
    %49 = tpu.matmul %5, %47, %cst_44 {dimension_numbers = #tpu.dot_dimension_numbers<[1], [0], [0], [1], [0, 0, 1, 1], [], []>} : vector<8x4xf32>, vector<4x16xf32>, vector<8x16xf32> -> vector<8x16xf32>
    %50 = arith.addf %48, %49 : vector<8x16xf32>
    %cst_45 = arith.constant dense<0.000000e+00> : vector<8x16xf32>
    %51 = tpu.matmul %3, %45, %cst_45 {dimension_numbers = #tpu.dot_dimension_numbers<[1], [0], [0], [1], [0, 0, 1, 1], [], []>} : vector<8x4xf32>, vector<4x16xf32>, vector<8x16xf32> -> vector<8x16xf32>
    %cst_46 = arith.constant dense<0.000000e+00> : vector<8x16xf32>
    %52 = tpu.matmul %7, %47, %cst_46 {dimension_numbers = #tpu.dot_dimension_numbers<[1], [0], [0], [1], [0, 0, 1, 1], [], []>} : vector<8x4xf32>, vector<4x16xf32>, vector<8x16xf32> -> vector<8x16xf32>
    %53 = arith.addf %51, %52 : vector<8x16xf32>
    %cst_47 = arith.constant dense<0.000000e+00> : vector<8x8xf32>
    %54 = tpu.matmul %50, %9, %cst_47 {dimension_numbers = #tpu.dot_dimension_numbers<[1], [0], [0], [1], [0, 0, 1, 1], [], []>} : vector<8x16xf32>, vector<16x8xf32>, vector<8x8xf32> -> vector<8x8xf32>
    %cst_48 = arith.constant dense<0.000000e+00> : vector<8x8xf32>
    %55 = tpu.matmul %53, %11, %cst_48 {dimension_numbers = #tpu.dot_dimension_numbers<[1], [0], [0], [1], [0, 0, 1, 1], [], []>} : vector<8x16xf32>, vector<16x8xf32>, vector<8x8xf32> -> vector<8x8xf32>
    %56 = arith.addf %54, %55 : vector<8x8xf32>
    %c0_49 = arith.constant 0 : index
    %c0_50 = arith.constant 0 : index
    %c16_51 = arith.constant 16 : index
    %57 = vector.load %arg5[%c0_49, %c0_50, %c16_51] : memref<1x8x64xf32, #tpu.memory_space<vmem>>, vector<1x8x8xf32>
    %58 = vector.shape_cast %57 : vector<1x8x8xf32> to vector<8x8xf32>
    %59 = vector.shape_cast %56 : vector<8x8xf32> to vector<1x8x8xf32>
    tpu.vector_store %arg5[%c0_49, %c0_50, %c16_51], %59 {strides = array<i32>} : memref<1x8x64xf32, #tpu.memory_space<vmem>>, vector<1x8x8xf32>,
    %c0_52 = arith.constant 0 : index
    %c0_53 = arith.constant 0 : index
    %c96 = arith.constant 96 : index
    %60 = vector.load %arg4[%c0_52, %c0_53, %c96] : memref<1x4x256xf32, #tpu.memory_space<vmem>>, vector<1x4x16xf32>
    %61 = vector.shape_cast %60 : vector<1x4x16xf32> to vector<4x16xf32>
    %c0_54 = arith.constant 0 : index
    %c0_55 = arith.constant 0 : index
    %c112 = arith.constant 112 : index
    %62 = vector.load %arg4[%c0_54, %c0_55, %c112] : memref<1x4x256xf32, #tpu.memory_space<vmem>>, vector<1x4x16xf32>
    %63 = vector.shape_cast %62 : vector<1x4x16xf32> to vector<4x16xf32>
    %cst_56 = arith.constant dense<0.000000e+00> : vector<8x16xf32>
    %64 = tpu.matmul %1, %61, %cst_56 {dimension_numbers = #tpu.dot_dimension_numbers<[1], [0], [0], [1], [0, 0, 1, 1], [], []>} : vector<8x4xf32>, vector<4x16xf32>, vector<8x16xf32> -> vector<8x16xf32>
    %cst_57 = arith.constant dense<0.000000e+00> : vector<8x16xf32>
    %65 = tpu.matmul %5, %63, %cst_57 {dimension_numbers = #tpu.dot_dimension_numbers<[1], [0], [0], [1], [0, 0, 1, 1], [], []>} : vector<8x4xf32>, vector<4x16xf32>, vector<8x16xf32> -> vector<8x16xf32>
    %66 = arith.addf %64, %65 : vector<8x16xf32>
    %cst_58 = arith.constant dense<0.000000e+00> : vector<8x16xf32>
    %67 = tpu.matmul %3, %61, %cst_58 {dimension_numbers = #tpu.dot_dimension_numbers<[1], [0], [0], [1], [0, 0, 1, 1], [], []>} : vector<8x4xf32>, vector<4x16xf32>, vector<8x16xf32> -> vector<8x16xf32>
    %cst_59 = arith.constant dense<0.000000e+00> : vector<8x16xf32>
    %68 = tpu.matmul %7, %63, %cst_59 {dimension_numbers = #tpu.dot_dimension_numbers<[1], [0], [0], [1], [0, 0, 1, 1], [], []>} : vector<8x4xf32>, vector<4x16xf32>, vector<8x16xf32> -> vector<8x16xf32>
    %69 = arith.addf %67, %68 : vector<8x16xf32>
    %cst_60 = arith.constant dense<0.000000e+00> : vector<8x8xf32>
    %70 = tpu.matmul %66, %9, %cst_60 {dimension_numbers = #tpu.dot_dimension_numbers<[1], [0], [0], [1], [0, 0, 1, 1], [], []>} : vector<8x16xf32>, vector<16x8xf32>, vector<8x8xf32> -> vector<8x8xf32>
    %cst_61 = arith.constant dense<0.000000e+00> : vector<8x8xf32>
    %71 = tpu.matmul %69, %11, %cst_61 {dimension_numbers = #tpu.dot_dimension_numbers<[1], [0], [0], [1], [0, 0, 1, 1], [], []>} : vector<8x16xf32>, vector<16x8xf32>, vector<8x8xf32> -> vector<8x8xf32>
    %72 = arith.addf %70, %71 : vector<8x8xf32>
    %c0_62 = arith.constant 0 : index
    %c0_63 = arith.constant 0 : index
    %c24 = arith.constant 24 : index
    %73 = vector.load %arg5[%c0_62, %c0_63, %c24] : memref<1x8x64xf32, #tpu.memory_space<vmem>>, vector<1x8x8xf32>
    %74 = vector.shape_cast %73 : vector<1x8x8xf32> to vector<8x8xf32>
    %75 = vector.shape_cast %72 : vector<8x8xf32> to vector<1x8x8xf32>
    tpu.vector_store %arg5[%c0_62, %c0_63, %c24], %75 {strides = array<i32>} : memref<1x8x64xf32, #tpu.memory_space<vmem>>, vector<1x8x8xf32>,
    %c0_64 = arith.constant 0 : index
    %c0_65 = arith.constant 0 : index
    %c128 = arith.constant 128 : index
    %76 = vector.load %arg4[%c0_64, %c0_65, %c128] : memref<1x4x256xf32, #tpu.memory_space<vmem>>, vector<1x4x16xf32>
    %77 = vector.shape_cast %76 : vector<1x4x16xf32> to vector<4x16xf32>
    %c0_66 = arith.constant 0 : index
    %c0_67 = arith.constant 0 : index
    %c144 = arith.constant 144 : index
    %78 = vector.load %arg4[%c0_66, %c0_67, %c144] : memref<1x4x256xf32, #tpu.memory_space<vmem>>, vector<1x4x16xf32>
    %79 = vector.shape_cast %78 : vector<1x4x16xf32> to vector<4x16xf32>
    %cst_68 = arith.constant dense<0.000000e+00> : vector<8x16xf32>
    %80 = tpu.matmul %1, %77, %cst_68 {dimension_numbers = #tpu.dot_dimension_numbers<[1], [0], [0], [1], [0, 0, 1, 1], [], []>} : vector<8x4xf32>, vector<4x16xf32>, vector<8x16xf32> -> vector<8x16xf32>
    %cst_69 = arith.constant dense<0.000000e+00> : vector<8x16xf32>
    %81 = tpu.matmul %5, %79, %cst_69 {dimension_numbers = #tpu.dot_dimension_numbers<[1], [0], [0], [1], [0, 0, 1, 1], [], []>} : vector<8x4xf32>, vector<4x16xf32>, vector<8x16xf32> -> vector<8x16xf32>
    %82 = arith.addf %80, %81 : vector<8x16xf32>
    %cst_70 = arith.constant dense<0.000000e+00> : vector<8x16xf32>
    %83 = tpu.matmul %3, %77, %cst_70 {dimension_numbers = #tpu.dot_dimension_numbers<[1], [0], [0], [1], [0, 0, 1, 1], [], []>} : vector<8x4xf32>, vector<4x16xf32>, vector<8x16xf32> -> vector<8x16xf32>
    %cst_71 = arith.constant dense<0.000000e+00> : vector<8x16xf32>
    %84 = tpu.matmul %7, %79, %cst_71 {dimension_numbers = #tpu.dot_dimension_numbers<[1], [0], [0], [1], [0, 0, 1, 1], [], []>} : vector<8x4xf32>, vector<4x16xf32>, vector<8x16xf32> -> vector<8x16xf32>
    %85 = arith.addf %83, %84 : vector<8x16xf32>
    %cst_72 = arith.constant dense<0.000000e+00> : vector<8x8xf32>
    %86 = tpu.matmul %82, %9, %cst_72 {dimension_numbers = #tpu.dot_dimension_numbers<[1], [0], [0], [1], [0, 0, 1, 1], [], []>} : vector<8x16xf32>, vector<16x8xf32>, vector<8x8xf32> -> vector<8x8xf32>
    %cst_73 = arith.constant dense<0.000000e+00> : vector<8x8xf32>
    %87 = tpu.matmul %85, %11, %cst_73 {dimension_numbers = #tpu.dot_dimension_numbers<[1], [0], [0], [1], [0, 0, 1, 1], [], []>} : vector<8x16xf32>, vector<16x8xf32>, vector<8x8xf32> -> vector<8x8xf32>
    %88 = arith.addf %86, %87 : vector<8x8xf32>
    %c0_74 = arith.constant 0 : index
    %c0_75 = arith.constant 0 : index
    %c32_76 = arith.constant 32 : index
    %89 = vector.load %arg5[%c0_74, %c0_75, %c32_76] : memref<1x8x64xf32, #tpu.memory_space<vmem>>, vector<1x8x8xf32>
    %90 = vector.shape_cast %89 : vector<1x8x8xf32> to vector<8x8xf32>
    %91 = vector.shape_cast %88 : vector<8x8xf32> to vector<1x8x8xf32>
    tpu.vector_store %arg5[%c0_74, %c0_75, %c32_76], %91 {strides = array<i32>} : memref<1x8x64xf32, #tpu.memory_space<vmem>>, vector<1x8x8xf32>,
    %c0_77 = arith.constant 0 : index
    %c0_78 = arith.constant 0 : index
    %c160 = arith.constant 160 : index
    %92 = vector.load %arg4[%c0_77, %c0_78, %c160] : memref<1x4x256xf32, #tpu.memory_space<vmem>>, vector<1x4x16xf32>
    %93 = vector.shape_cast %92 : vector<1x4x16xf32> to vector<4x16xf32>
    %c0_79 = arith.constant 0 : index
    %c0_80 = arith.constant 0 : index
    %c176 = arith.constant 176 : index
    %94 = vector.load %arg4[%c0_79, %c0_80, %c176] : memref<1x4x256xf32, #tpu.memory_space<vmem>>, vector<1x4x16xf32>
    %95 = vector.shape_cast %94 : vector<1x4x16xf32> to vector<4x16xf32>
    %cst_81 = arith.constant dense<0.000000e+00> : vector<8x16xf32>
    %96 = tpu.matmul %1, %93, %cst_81 {dimension_numbers = #tpu.dot_dimension_numbers<[1], [0], [0], [1], [0, 0, 1, 1], [], []>} : vector<8x4xf32>, vector<4x16xf32>, vector<8x16xf32> -> vector<8x16xf32>
    %cst_82 = arith.constant dense<0.000000e+00> : vector<8x16xf32>
    %97 = tpu.matmul %5, %95, %cst_82 {dimension_numbers = #tpu.dot_dimension_numbers<[1], [0], [0], [1], [0, 0, 1, 1], [], []>} : vector<8x4xf32>, vector<4x16xf32>, vector<8x16xf32> -> vector<8x16xf32>
    %98 = arith.addf %96, %97 : vector<8x16xf32>
    %cst_83 = arith.constant dense<0.000000e+00> : vector<8x16xf32>
    %99 = tpu.matmul %3, %93, %cst_83 {dimension_numbers = #tpu.dot_dimension_numbers<[1], [0], [0], [1], [0, 0, 1, 1], [], []>} : vector<8x4xf32>, vector<4x16xf32>, vector<8x16xf32> -> vector<8x16xf32>
    %cst_84 = arith.constant dense<0.000000e+00> : vector<8x16xf32>
    %100 = tpu.matmul %7, %95, %cst_84 {dimension_numbers = #tpu.dot_dimension_numbers<[1], [0], [0], [1], [0, 0, 1, 1], [], []>} : vector<8x4xf32>, vector<4x16xf32>, vector<8x16xf32> -> vector<8x16xf32>
    %101 = arith.addf %99, %100 : vector<8x16xf32>
    %cst_85 = arith.constant dense<0.000000e+00> : vector<8x8xf32>
    %102 = tpu.matmul %98, %9, %cst_85 {dimension_numbers = #tpu.dot_dimension_numbers<[1], [0], [0], [1], [0, 0, 1, 1], [], []>} : vector<8x16xf32>, vector<16x8xf32>, vector<8x8xf32> -> vector<8x8xf32>
    %cst_86 = arith.constant dense<0.000000e+00> : vector<8x8xf32>
    %103 = tpu.matmul %101, %11, %cst_86 {dimension_numbers = #tpu.dot_dimension_numbers<[1], [0], [0], [1], [0, 0, 1, 1], [], []>} : vector<8x16xf32>, vector<16x8xf32>, vector<8x8xf32> -> vector<8x8xf32>
    %104 = arith.addf %102, %103 : vector<8x8xf32>
    %c0_87 = arith.constant 0 : index
    %c0_88 = arith.constant 0 : index
    %c40 = arith.constant 40 : index
    %105 = vector.load %arg5[%c0_87, %c0_88, %c40] : memref<1x8x64xf32, #tpu.memory_space<vmem>>, vector<1x8x8xf32>
    %106 = vector.shape_cast %105 : vector<1x8x8xf32> to vector<8x8xf32>
    %107 = vector.shape_cast %104 : vector<8x8xf32> to vector<1x8x8xf32>
    tpu.vector_store %arg5[%c0_87, %c0_88, %c40], %107 {strides = array<i32>} : memref<1x8x64xf32, #tpu.memory_space<vmem>>, vector<1x8x8xf32>,
    %c0_89 = arith.constant 0 : index
    %c0_90 = arith.constant 0 : index
    %c192 = arith.constant 192 : index
    %108 = vector.load %arg4[%c0_89, %c0_90, %c192] : memref<1x4x256xf32, #tpu.memory_space<vmem>>, vector<1x4x16xf32>
    %109 = vector.shape_cast %108 : vector<1x4x16xf32> to vector<4x16xf32>
    %c0_91 = arith.constant 0 : index
    %c0_92 = arith.constant 0 : index
    %c208 = arith.constant 208 : index
    %110 = vector.load %arg4[%c0_91, %c0_92, %c208] : memref<1x4x256xf32, #tpu.memory_space<vmem>>, vector<1x4x16xf32>
    %111 = vector.shape_cast %110 : vector<1x4x16xf32> to vector<4x16xf32>
    %cst_93 = arith.constant dense<0.000000e+00> : vector<8x16xf32>
    %112 = tpu.matmul %1, %109, %cst_93 {dimension_numbers = #tpu.dot_dimension_numbers<[1], [0], [0], [1], [0, 0, 1, 1], [], []>} : vector<8x4xf32>, vector<4x16xf32>, vector<8x16xf32> -> vector<8x16xf32>
    %cst_94 = arith.constant dense<0.000000e+00> : vector<8x16xf32>
    %113 = tpu.matmul %5, %111, %cst_94 {dimension_numbers = #tpu.dot_dimension_numbers<[1], [0], [0], [1], [0, 0, 1, 1], [], []>} : vector<8x4xf32>, vector<4x16xf32>, vector<8x16xf32> -> vector<8x16xf32>
    %114 = arith.addf %112, %113 : vector<8x16xf32>
    %cst_95 = arith.constant dense<0.000000e+00> : vector<8x16xf32>
    %115 = tpu.matmul %3, %109, %cst_95 {dimension_numbers = #tpu.dot_dimension_numbers<[1], [0], [0], [1], [0, 0, 1, 1], [], []>} : vector<8x4xf32>, vector<4x16xf32>, vector<8x16xf32> -> vector<8x16xf32>
    %cst_96 = arith.constant dense<0.000000e+00> : vector<8x16xf32>
    %116 = tpu.matmul %7, %111, %cst_96 {dimension_numbers = #tpu.dot_dimension_numbers<[1], [0], [0], [1], [0, 0, 1, 1], [], []>} : vector<8x4xf32>, vector<4x16xf32>, vector<8x16xf32> -> vector<8x16xf32>
    %117 = arith.addf %115, %116 : vector<8x16xf32>
    %cst_97 = arith.constant dense<0.000000e+00> : vector<8x8xf32>
    %118 = tpu.matmul %114, %9, %cst_97 {dimension_numbers = #tpu.dot_dimension_numbers<[1], [0], [0], [1], [0, 0, 1, 1], [], []>} : vector<8x16xf32>, vector<16x8xf32>, vector<8x8xf32> -> vector<8x8xf32>
    %cst_98 = arith.constant dense<0.000000e+00> : vector<8x8xf32>
    %119 = tpu.matmul %117, %11, %cst_98 {dimension_numbers = #tpu.dot_dimension_numbers<[1], [0], [0], [1], [0, 0, 1, 1], [], []>} : vector<8x16xf32>, vector<16x8xf32>, vector<8x8xf32> -> vector<8x8xf32>
    %120 = arith.addf %118, %119 : vector<8x8xf32>
    %c0_99 = arith.constant 0 : index
    %c0_100 = arith.constant 0 : index
    %c48_101 = arith.constant 48 : index
    %121 = vector.load %arg5[%c0_99, %c0_100, %c48_101] : memref<1x8x64xf32, #tpu.memory_space<vmem>>, vector<1x8x8xf32>
    %122 = vector.shape_cast %121 : vector<1x8x8xf32> to vector<8x8xf32>
    %123 = vector.shape_cast %120 : vector<8x8xf32> to vector<1x8x8xf32>
    tpu.vector_store %arg5[%c0_99, %c0_100, %c48_101], %123 {strides = array<i32>} : memref<1x8x64xf32, #tpu.memory_space<vmem>>, vector<1x8x8xf32>,
    %c0_102 = arith.constant 0 : index
    %c0_103 = arith.constant 0 : index
    %c224 = arith.constant 224 : index
    %124 = vector.load %arg4[%c0_102, %c0_103, %c224] : memref<1x4x256xf32, #tpu.memory_space<vmem>>, vector<1x4x16xf32>
    %125 = vector.shape_cast %124 : vector<1x4x16xf32> to vector<4x16xf32>
    %c0_104 = arith.constant 0 : index
    %c0_105 = arith.constant 0 : index
    %c240 = arith.constant 240 : index
    %126 = vector.load %arg4[%c0_104, %c0_105, %c240] : memref<1x4x256xf32, #tpu.memory_space<vmem>>, vector<1x4x16xf32>
    %127 = vector.shape_cast %126 : vector<1x4x16xf32> to vector<4x16xf32>
    %cst_106 = arith.constant dense<0.000000e+00> : vector<8x16xf32>
    %128 = tpu.matmul %1, %125, %cst_106 {dimension_numbers = #tpu.dot_dimension_numbers<[1], [0], [0], [1], [0, 0, 1, 1], [], []>} : vector<8x4xf32>, vector<4x16xf32>, vector<8x16xf32> -> vector<8x16xf32>
    %cst_107 = arith.constant dense<0.000000e+00> : vector<8x16xf32>
    %129 = tpu.matmul %5, %127, %cst_107 {dimension_numbers = #tpu.dot_dimension_numbers<[1], [0], [0], [1], [0, 0, 1, 1], [], []>} : vector<8x4xf32>, vector<4x16xf32>, vector<8x16xf32> -> vector<8x16xf32>
    %130 = arith.addf %128, %129 : vector<8x16xf32>
    %cst_108 = arith.constant dense<0.000000e+00> : vector<8x16xf32>
    %131 = tpu.matmul %3, %125, %cst_108 {dimension_numbers = #tpu.dot_dimension_numbers<[1], [0], [0], [1], [0, 0, 1, 1], [], []>} : vector<8x4xf32>, vector<4x16xf32>, vector<8x16xf32> -> vector<8x16xf32>
    %cst_109 = arith.constant dense<0.000000e+00> : vector<8x16xf32>
    %132 = tpu.matmul %7, %127, %cst_109 {dimension_numbers = #tpu.dot_dimension_numbers<[1], [0], [0], [1], [0, 0, 1, 1], [], []>} : vector<8x4xf32>, vector<4x16xf32>, vector<8x16xf32> -> vector<8x16xf32>
    %133 = arith.addf %131, %132 : vector<8x16xf32>
    %cst_110 = arith.constant dense<0.000000e+00> : vector<8x8xf32>
    %134 = tpu.matmul %130, %9, %cst_110 {dimension_numbers = #tpu.dot_dimension_numbers<[1], [0], [0], [1], [0, 0, 1, 1], [], []>} : vector<8x16xf32>, vector<16x8xf32>, vector<8x8xf32> -> vector<8x8xf32>
    %cst_111 = arith.constant dense<0.000000e+00> : vector<8x8xf32>
    %135 = tpu.matmul %133, %11, %cst_111 {dimension_numbers = #tpu.dot_dimension_numbers<[1], [0], [0], [1], [0, 0, 1, 1], [], []>} : vector<8x16xf32>, vector<16x8xf32>, vector<8x8xf32> -> vector<8x8xf32>
    %136 = arith.addf %134, %135 : vector<8x8xf32>
    %c0_112 = arith.constant 0 : index
    %c0_113 = arith.constant 0 : index
    %c56 = arith.constant 56 : index
    %137 = vector.load %arg5[%c0_112, %c0_113, %c56] : memref<1x8x64xf32, #tpu.memory_space<vmem>>, vector<1x8x8xf32>
    %138 = vector.shape_cast %137 : vector<1x8x8xf32> to vector<8x8xf32>
    %139 = vector.shape_cast %136 : vector<8x8xf32> to vector<1x8x8xf32>
    tpu.vector_store %arg5[%c0_112, %c0_113, %c56], %139 {strides = array<i32>} : memref<1x8x64xf32, #tpu.memory_space<vmem>>, vector<1x8x8xf32>,
    return
  }
  func.func @transform_0(%arg0: i32, %arg1: i32) -> (i32, i32, i32) {
    %c0_i32 = arith.constant 0 : i32
    %c0_i32_0 = arith.constant 0 : i32
    %c0_i32_1 = arith.constant 0 : i32
    %c0_i32_2 = arith.constant 0 : i32
    return %c0_i32, %c0_i32_0, %c0_i32_1 : i32, i32, i32
  }
  func.func @transform_1(%arg0: i32, %arg1: i32) -> (i32, i32, i32) {
    %c0_i32 = arith.constant 0 : i32
    %c0_i32_0 = arith.constant 0 : i32
    %c0_i32_1 = arith.constant 0 : i32
    %c0_i32_2 = arith.constant 0 : i32
    return %c0_i32, %c0_i32_0, %c0_i32_1 : i32, i32, i32
  }
  func.func @transform_2(%arg0: i32, %arg1: i32) -> (i32, i32, i32) {
    %c0_i32 = arith.constant 0 : i32
    %c0_i32_0 = arith.constant 0 : i32
    return %arg0, %c0_i32, %arg1 : i32, i32, i32
  }
  func.func @transform_3(%arg0: i32, %arg1: i32) -> (i32, i32, i32) {
    %c0_i32 = arith.constant 0 : i32
    %c0_i32_0 = arith.constant 0 : i32
    return %arg0, %c0_i32, %arg1 : i32, i32, i32
  }
}

</mosaic_0001>

<llo_original>
// kernel: downscaling_forward.1
$region0: #{downscaling_forward.1}
  #allocation0 [shape = 'u32[]', space=smem, size = 0x4, offset = 0x4, fixed_abs, tag = 'smem constant byte address 0x4 - core index']
  #allocation1 [shape = 'u32[144,128]{1,0:T(1,128)}', space=vmem, size = 0x12000, scoped, tag = 'internal scratch']
  %s0 = inlined_call_operand.vmem [shape: f32[4,8,4], index: 0, kind: input, shape index: {}]
  %s1 = inlined_call_operand.vmem [shape: f32[2,16,8], index: 1, kind: input, shape index: {}]
  %s2 = inlined_call_operand.vmem [shape: f32[2,4,256], index: 2, kind: input, shape index: {}]
  %s3 = inlined_call_operand.vmem [shape: f32[2,8,64], index: 3, kind: output, shape index: {}]
  %s4 = sld [smem:[#allocation0]]
  $region45: #{downscaling_forward.1} parent=0
    _
  %s6 = ssub.s32 1, %s4
  %s7 = scalar_select 0, %s6, %s4
  loop: start=0, step=1, limit=4
  $region2: #{downscaling_forward.1} parent=0 // loop_pre_header
    _
  $region3: #{downscaling_forward.1} parent=0 // loop_header
    %s9 = sphi 0, %s13
    %p10 = scmp.ge.s32.totalorder %s9, 4
    %s16 = sphi 0, %s28
    %s17 = sphi 0, %s24
    %s18 = sphi 0, %s16
    %s19 = sphi 0, %s17
    %s20 = sphi 0, %s18
    %s21 = sphi 0, %s19
    %s29 = sphi 0, %s29
    %s31 = sphi 0, %s29
    %s32 = sphi 0, %s31
    %s46 = sphi 0, %s32
    %s50 = sphi 0, %s50
    %s52 = sphi 0, %s50
    %s53 = sphi 0, %s52
    %s67 = sphi 0, %s53
    %s75 = sphi 0, %s77
    %s78 = sphi 0, %s75
    %s79 = sphi 0, %s78
    %s95 = sphi 0, %s79
    %s103 = sphi 0, %s105
    %s106 = sphi 0, %s103
    %s107 = sphi 0, %s106
    %s123 = sphi 0, %s107
  $region4: #{downscaling_forward.1} parent=0 // loop_header_branch
    %12 = sbr.rel (%p10) target = $region8
  $region5: #{downscaling_forward.1} parent=0 // loop_body
    %s14 = ssub.s32 %s9, 1
    %s15 = ssub.s32 %s9, 2
    %s22 = sadd.s32 1, %s17
    %p23 = scmp.ge.s32.totalorder %s22, 1
    %s24 = scalar_select %p23, 0, %s22
    %s25 = sadd.s32 1, %s16
    %s26 = scalar_select %p23, %s25, %s16
    %p27 = scmp.ge.s32.totalorder %s26, 2
    %s28 = scalar_select %p27, 0, %s26
    %s30 = sadd.s32 %s29, 1
    %p33 = scmp.eq.s32.totalorder %s9, 1
    %p34 = scmp.ne.s32.totalorder %s29, %s31
    %p35 = scmp.eq.s32.totalorder %s9, 0
    %p36 = por %p34, %p35
    %p37 = scmp.ne.s32.totalorder %s29, %s31
    %p38 = scmp.eq.s32.totalorder %s14, 1
    %p39 = por %p37, %p38
    %p40 = scmp.ne.s32.totalorder %s31, %s32
    %p41 = scmp.eq.s32.totalorder %s14, 0
    %p42 = por %p40, %p41
    %p43 = scmp.ne.s32.totalorder %s31, %s32
    %p44 = scmp.eq.s32.totalorder %s15, 1
    %p45 = por %p43, %p44
    %p47 = scmp.ne.s32.totalorder %s32, %s46
    %p48 = scmp.eq.s32.totalorder %s15, 0
    %p49 = por %p47, %p48
    %s51 = sadd.s32 %s50, 1
    %p54 = scmp.eq.s32.totalorder %s9, 1
    %p55 = scmp.ne.s32.totalorder %s50, %s52
    %p56 = scmp.eq.s32.totalorder %s9, 0
    %p57 = por %p55, %p56
    %p58 = scmp.ne.s32.totalorder %s50, %s52
    %p59 = scmp.eq.s32.totalorder %s14, 1
    %p60 = por %p58, %p59
    %p61 = scmp.ne.s32.totalorder %s52, %s53
    %p62 = scmp.eq.s32.totalorder %s14, 0
    %p63 = por %p61, %p62
    %p64 = scmp.ne.s32.totalorder %s52, %s53
    %p65 = scmp.eq.s32.totalorder %s15, 1
    %p66 = por %p64, %p65
    %p68 = scmp.ne.s32.totalorder %s53, %s67
    %p69 = scmp.eq.s32.totalorder %s15, 0
    %p70 = por %p68, %p69
    %s71 = ssub.s32 %s16, %s28
    %s72 = ssub.s32 %s17, %s24
    %s73 = sor.u32 %s71, %s72
    %p74 = scmp.eq.s32.totalorder %s73, 0
    %s76 = sadd.s32 %s75, 1
    %s77 = scalar_select %p74, %s75, %s76
    %p80 = pneg %p74
    %p81 = scmp.eq.s32.totalorder %s9, 1
    %p82 = por %p80, %p81
    %p83 = scmp.ne.s32.totalorder %s75, %s78
    %p84 = scmp.eq.s32.totalorder %s9, 0
    %p85 = por %p83, %p84
    %p86 = scmp.ne.s32.totalorder %s75, %s78
    %p87 = scmp.eq.s32.totalorder %s14, 1
    %p88 = por %p86, %p87
    %p89 = scmp.ne.s32.totalorder %s78, %s79
    %p90 = scmp.eq.s32.totalorder %s14, 0
    %p91 = por %p89, %p90
    %p92 = scmp.ne.s32.totalorder %s78, %s79
    %p93 = scmp.eq.s32.totalorder %s15, 1
    %p94 = por %p92, %p93
    %p96 = scmp.ne.s32.totalorder %s79, %s95
    %p97 = scmp.eq.s32.totalorder %s15, 0
    %p98 = por %p96, %p97
    %s99 = ssub.s32 %s16, %s28
    %s100 = ssub.s32 %s17, %s24
    %s101 = sor.u32 %s99, %s100
    %p102 = scmp.eq.s32.totalorder %s101, 0
    %s104 = sadd.s32 %s103, 1
    %s105 = scalar_select %p102, %s103, %s104
    %p108 = pneg %p102
    %p109 = scmp.eq.s32.totalorder %s9, 1
    %p110 = por %p108, %p109
    %p111 = scmp.ne.s32.totalorder %s103, %s106
    %p112 = scmp.eq.s32.totalorder %s9, 0
    %p113 = por %p111, %p112
    %p114 = scmp.ne.s32.totalorder %s103, %s106
    %p115 = scmp.eq.s32.totalorder %s14, 1
    %p116 = por %p114, %p115
    %p117 = scmp.ne.s32.totalorder %s106, %s107
    %p118 = scmp.eq.s32.totalorder %s14, 0
    %p119 = por %p117, %p118
    %p120 = scmp.ne.s32.totalorder %s106, %s107
    %p121 = scmp.eq.s32.totalorder %s15, 1
    %p122 = por %p120, %p121
    %p124 = scmp.ne.s32.totalorder %s107, %s123
    %p125 = scmp.eq.s32.totalorder %s15, 0
    %p126 = por %p124, %p125
    %p127 = scmp.le.s32.totalorder 1, %s9
    %p128 = scmp.lt.s32.totalorder %s9, 3
    %p129 = pnand %p127, %p128
    %p130 = pneg %p129
    // Predicated region
    $region9: #{downscaling_forward.1} parent=5 // pred_check
      _
    $region10: #{downscaling_forward.1} parent=5 // pred_check_branch
      %132 = sbr.rel (%p129) target = $region12
    $region11: #{downscaling_forward.1} parent=5 // pred_region
      %s133 = ssub.s32 %s9, 1
      // Predicated region
      $region13: #{downscaling_forward.1} parent=11 // pred_check
        %p134 = pneg %p42
      $region14: #{downscaling_forward.1} parent=11 // pred_check_branch
        %136 = sbr.rel (%p134) target = $region16
      $region15: #{downscaling_forward.1} parent=11 // pred_region
        _
      $region16: #{downscaling_forward.1} parent=11 // pred_fallthru
        _
      // Predicated region
      $region17: #{downscaling_forward.1} parent=11 // pred_check
        %p137 = pneg %p63
      $region18: #{downscaling_forward.1} parent=11 // pred_check_branch
        %139 = sbr.rel (%p137) target = $region20
      $region19: #{downscaling_forward.1} parent=11 // pred_region
        _
      $region20: #{downscaling_forward.1} parent=11 // pred_fallthru
        _
    $region12: #{downscaling_forward.1} parent=5 // pred_fallthru
      _
    %p140 = scmp.lt.s32.totalorder %s9, 2
    // Predicated region
    $region21: #{downscaling_forward.1} parent=5 // pred_check
      %p141 = pneg %p140
    $region22: #{downscaling_forward.1} parent=5 // pred_check_branch
      %143 = sbr.rel (%p141) target = $region24
    $region23: #{downscaling_forward.1} parent=5 // pred_region
      // Predicated region
      $region25: #{downscaling_forward.1} parent=23 // pred_check
        %p144 = pneg %p85
      $region26: #{downscaling_forward.1} parent=23 // pred_check_branch
        %146 = sbr.rel (%p144) target = $region28
      $region27: #{downscaling_forward.1} parent=23 // pred_region
        %s147 = smul.u32 2, %s17
        %p148 = scmp.lt.s32.totalorder %s16, 1
        %s149 = scalar_select %p148, %s16, 1
        %p150 = scmp.lt.s32.totalorder %s147, 1
        %s151 = scalar_select %p150, %s147, 1
        %s152 = smul.addr %s149, 2
        %s153 = sadd.s32 %s151, %s152
        %s154 = smul.addr %s153, 4
        %s155 = scalar_lea.vmem %s2, %s154
        %s156 = smul.u32 2, %s17
      $region28: #{downscaling_forward.1} parent=23 // pred_fallthru
        _
    $region24: #{downscaling_forward.1} parent=5 // pred_fallthru
      _
    %p157 = scmp.le.s32.totalorder 1, %s9
    %p158 = scmp.lt.s32.totalorder %s9, 3
    %p159 = pnand %p157, %p158
    %p160 = pneg %p159
    // Predicated region
    $region29: #{downscaling_forward.1} parent=5 // pred_check
      _
    $region30: #{downscaling_forward.1} parent=5 // pred_check_branch
      %162 = sbr.rel (%p159) target = $region32
    $region31: #{downscaling_forward.1} parent=5 // pred_region
      %s163 = ssub.s32 %s9, 1
      %p164 = pneg %p42
      %p165 = pneg %p39
      %p166 = pneg %p63
      %p167 = pneg %p60
      %s168 = smul.u32 2, %s19
      %p169 = scmp.lt.s32.totalorder %s18, 1
      %s170 = scalar_select %p169, %s18, 1
      %p171 = scmp.lt.s32.totalorder %s168, 1
      %s172 = scalar_select %p171, %s168, 1
      %s173 = smul.addr %s170, 2
      %s174 = sadd.s32 %s172, %s173
      %s175 = smul.addr %s174, 4
      %s176 = scalar_lea.vmem %s2, %s175
      %p177 = pneg %p91
      %p178 = pneg %p88
      %p179 = pneg %p119
      %p180 = pneg %p116
      %p181 = scmp.lt.s32.totalorder %s18, 1
      %s182 = scalar_select %p181, %s18, 1
      %p183 = scmp.lt.s32.totalorder %s19, 0
      %s184 = scalar_select %p183, %s19, 0
      %s185 = sadd.s32 %s184, %s182
      %s186 = smul.addr %s185, 8
      %s187 = scalar_lea.vmem %s3, %s186
      %s188 = smul.u32 2, %s19
      %p189 = scmp.lt.s32.totalorder %s18, 1
      %s190 = scalar_select %p189, %s18, 1
      %p191 = scmp.lt.s32.totalorder %s188, 1
      %s192 = scalar_select %p191, %s188, 1
      %s193 = smul.addr %s190, 2
      %s194 = sadd.s32 %s192, %s193
      %s195 = smul.addr %s194, 4
      %s196 = scalar_lea.vmem %s2, %s195
      %s197 = smul.u32 2, %s19
      %p198 = scmp.lt.s32.totalorder %s18, 1
      %s199 = scalar_select %p198, %s18, 1
      %p200 = scmp.lt.s32.totalorder %s19, 0
      %s201 = scalar_select %p200, %s19, 0
      %s202 = sadd.s32 %s201, %s199
      %s203 = smul.addr %s202, 8
      %s204 = scalar_lea.vmem %s3, %s203
      %v205 = vld [vmem:[%s0] sm:$0xff]
      %s206 = scalar_lea.vmem %s0, 8
      %v207 = vld [vmem:[%s206] sm:$0xff]
      %s208 = scalar_lea.vmem %s0, 16
      %v209 = vld [vmem:[%s208] sm:$0xff]
      %s210 = scalar_lea.vmem %s0, 24
      %v211 = vld [vmem:[%s210] sm:$0xff]
      %v212 = vld [vmem:[%s1] sm:$0xff]
      %v213 = vld [vmem:[%s1 + $0x8] sm:$0xff]
      %s214 = scalar_lea.vmem %s1, 16
      %v215 = vld [vmem:[%s214] sm:$0xff]
      %v216 = vld [vmem:[%s214 + $0x8] sm:$0xff]
      %v217 = vld [vmem:[%s196] sm:$0xf]
      %219 = vrot.lane.b32.xlu0 %v217, 112
      %v220 = vpop.permute.xlu0 %219
      %vm221 = vcmask 31744
      %v223 = vsel %vm221, %v209, 0
      %vm225 = vcmask 1043456
      %v226 = vsel %vm225, %v220, 0
      %228 = vmatprep.subr.mxu0 0.0
      %229 = vmatpush1.msra.mxu0 %v226
      %230 = vmatprep.subr.mxu0 0.0
      %231 = vmatpush1.msra.mxu0 0.0
      %232 = vmatprep.subr.mxu0 0.0
      %233 = vmatpush1.msra.mxu0 0.0
      %234 = vmatprep.subr.mxu0 0.0
      %235 = vmatpush1.msra.mxu0 0.0
      %236 = vmatprep.subr.mxu0 0.0
      %237 = vmatpush1.msra.mxu0 0.0
      %238 = vmatprep.subr.mxu0 0.0
      %239 = vmatpush1.msra.mxu0 0.0
      %240 = vmatprep.subr.mxu0 0.0
      %241 = vmatpush1.msra.mxu0 0.0
      %242 = vmatprep.subr.mxu0 0.0
      %243 = vmatpush1.msra.mxu0 0.0
      %244 = vmatprep.subr.mxu0 0.0
      %245 = vmatpush1.msra.mxu0 0.0
      %246 = vmatprep.subr.mxu0 0.0
      %247 = vmatpush1.msra.mxu0 0.0
      %248 = vmatprep.subr.mxu0 0.0
      %249 = vmatpush1.msra.mxu0 0.0
      %250 = vmatprep.subr.mxu0 0.0
      %251 = vmatpush1.msra.mxu0 0.0
      %252 = vmatprep.subr.mxu0 0.0
      %253 = vmatpush1.msra.mxu0 0.0
      %254 = vmatprep.subr.mxu0 0.0
      %255 = vmatpush1.msra.mxu0 0.0
      %256 = vmatprep.subr.mxu0 0.0
      %257 = vmatpush1.msra.mxu0 0.0
      %258 = vmatprep.subr.mxu0 0.0
      %259 = vmatpush1.msra.mxu0 0.0
      %260 = vmatprep.subr.mxu0 0.0
      %261 = vmatpush1.msra.mxu0 0.0
      %262 = vmatprep.subr.mxu0 0.0
      %263 = vmatpush1.msra.mxu0 0.0
      %264 = vmatprep.subr.mxu0 0.0
      %265 = vmatpush1.msra.mxu0 0.0
      %266 = vmatprep.subr.mxu0 0.0
      %267 = vmatpush1.msra.mxu0 0.0
      %268 = vmatprep.subr.mxu0 0.0
      %269 = vmatpush1.msra.mxu0 0.0
      %270 = vmatprep.subr.mxu0 0.0
      %271 = vmatpush1.msra.mxu0 0.0
      %272 = vmatprep.subr.mxu0 0.0
      %273 = vmatpush1.msra.mxu0 0.0
      %274 = vmatprep.subr.mxu0 0.0
      %275 = vmatpush1.msra.mxu0 0.0
      %276 = vmatprep.subr.mxu0 0.0
      %277 = vmatpush1.msra.mxu0 0.0
      %278 = vmatprep.subr.mxu0 0.0
      %279 = vmatpush1.msra.mxu0 0.0
      %280 = vmatprep.subr.mxu0 0.0
      %281 = vmatpush1.msra.mxu0 0.0
      %282 = vmatprep.subr.mxu0 0.0
      %283 = vmatpush1.msra.mxu0 0.0
      %284 = vmatprep.subr.mxu0 0.0
      %285 = vmatpush1.msra.mxu0 0.0
      %286 = vmatprep.subr.mxu0 0.0
      %287 = vmatpush1.msra.mxu0 0.0
      %288 = vmatprep.subr.mxu0 0.0
      %289 = vmatpush1.msra.mxu0 0.0
      %290 = vmatprep.subr.mxu0 0.0
      %291 = vmatpush1.msra.mxu0 0.0
      %292 = vmatprep.mubr.f32.mxu0 0.0
      %293 = vmatmul.mubr.f32.gmra.mrb[0].mxu0 %v223
      %v294 = vpop.f32.mrb[0].mxu0
      %v295 = vadd.f32 0.0, %v294
      %v296 = vpop.f32.mrb[0].mxu0
      %297 = vdwg.mxu0
      %v299 = vsel %vm221, %v205, 0
      %v301 = vsel %vm225, %v217, 0
      %303 = vmatprep.subr.mxu0 0.0
      %304 = vmatpush1.msra.mxu0 %v301
      %305 = vmatprep.subr.mxu0 0.0
      %306 = vmatpush1.msra.mxu0 0.0
      %307 = vmatprep.subr.mxu0 0.0
      %308 = vmatpush1.msra.mxu0 0.0
      %309 = vmatprep.subr.mxu0 0.0
      %310 = vmatpush1.msra.mxu0 0.0
      %311 = vmatprep.subr.mxu0 0.0
      %312 = vmatpush1.msra.mxu0 0.0
      %313 = vmatprep.subr.mxu0 0.0
      %314 = vmatpush1.msra.mxu0 0.0
      %315 = vmatprep.subr.mxu0 0.0
      %316 = vmatpush1.msra.mxu0 0.0
      %317 = vmatprep.subr.mxu0 0.0
      %318 = vmatpush1.msra.mxu0 0.0
      %319 = vmatprep.subr.mxu0 0.0
      %320 = vmatpush1.msra.mxu0 0.0
      %321 = vmatprep.subr.mxu0 0.0
      %322 = vmatpush1.msra.mxu0 0.0
      %323 = vmatprep.subr.mxu0 0.0
      %324 = vmatpush1.msra.mxu0 0.0
      %325 = vmatprep.subr.mxu0 0.0
      %326 = vmatpush1.msra.mxu0 0.0
      %327 = vmatprep.subr.mxu0 0.0
      %328 = vmatpush1.msra.mxu0 0.0
      %329 = vmatprep.subr.mxu0 0.0
      %330 = vmatpush1.msra.mxu0 0.0
      %331 = vmatprep.subr.mxu0 0.0
      %332 = vmatpush1.msra.mxu0 0.0
      %333 = vmatprep.subr.mxu0 0.0
      %334 = vmatpush1.msra.mxu0 0.0
      %335 = vmatprep.subr.mxu0 0.0
      %336 = vmatpush1.msra.mxu0 0.0
      %337 = vmatprep.subr.mxu0 0.0
      %338 = vmatpush1.msra.mxu0 0.0
      %339 = vmatprep.subr.mxu0 0.0
      %340 = vmatpush1.msra.mxu0 0.0
      %341 = vmatprep.subr.mxu0 0.0
      %342 = vmatpush1.msra.mxu0 0.0
      %343 = vmatprep.subr.mxu0 0.0
      %344 = vmatpush1.msra.mxu0 0.0
      %345 = vmatprep.subr.mxu0 0.0
      %346 = vmatpush1.msra.mxu0 0.0
      %347 = vmatprep.subr.mxu0 0.0
      %348 = vmatpush1.msra.mxu0 0.0
      %349 = vmatprep.subr.mxu0 0.0
      %350 = vmatpush1.msra.mxu0 0.0
      %351 = vmatprep.subr.mxu0 0.0
      %352 = vmatpush1.msra.mxu0 0.0
      %353 = vmatprep.subr.mxu0 0.0
      %354 = vmatpush1.msra.mxu0 0.0
      %355 = vmatprep.subr.mxu0 0.0
      %356 = vmatpush1.msra.mxu0 0.0
      %357 = vmatprep.subr.mxu0 0.0
      %358 = vmatpush1.msra.mxu0 0.0
      %359 = vmatprep.subr.mxu0 0.0
      %360 = vmatpush1.msra.mxu0 0.0
      %361 = vmatprep.subr.mxu0 0.0
      %362 = vmatpush1.msra.mxu0 0.0
      %363 = vmatprep.subr.mxu0 0.0
      %364 = vmatpush1.msra.mxu0 0.0
      %365 = vmatprep.subr.mxu0 0.0
      %366 = vmatpush1.msra.mxu0 0.0
      %367 = vmatprep.mubr.f32.mxu0 0.0
      %368 = vmatmul.mubr.f32.gmra.mrb[0].mxu0 %v299
      %v369 = vpop.f32.mrb[0].mxu0
      %v370 = vadd.f32 %v295, %v369
      %v371 = vpop.f32.mrb[0].mxu0
      %372 = vdwg.mxu0
      %v374 = vsel %vm221, %v211, 0
      %376 = vmatprep.subr.mxu0 0.0
      %377 = vmatpush1.msra.mxu0 %v226
      %378 = vmatprep.subr.mxu0 0.0
      %379 = vmatpush1.msra.mxu0 0.0
      %380 = vmatprep.subr.mxu0 0.0
      %381 = vmatpush1.msra.mxu0 0.0
      %382 = vmatprep.subr.mxu0 0.0
      %383 = vmatpush1.msra.mxu0 0.0
      %384 = vmatprep.subr.mxu0 0.0
      %385 = vmatpush1.msra.mxu0 0.0
      %386 = vmatprep.subr.mxu0 0.0
      %387 = vmatpush1.msra.mxu0 0.0
      %388 = vmatprep.subr.mxu0 0.0
      %389 = vmatpush1.msra.mxu0 0.0
      %390 = vmatprep.subr.mxu0 0.0
      %391 = vmatpush1.msra.mxu0 0.0
      %392 = vmatprep.subr.mxu0 0.0
      %393 = vmatpush1.msra.mxu0 0.0
      %394 = vmatprep.subr.mxu0 0.0
      %395 = vmatpush1.msra.mxu0 0.0
      %396 = vmatprep.subr.mxu0 0.0
      %397 = vmatpush1.msra.mxu0 0.0
      %398 = vmatprep.subr.mxu0 0.0
      %399 = vmatpush1.msra.mxu0 0.0
      %400 = vmatprep.subr.mxu0 0.0
      %401 = vmatpush1.msra.mxu0 0.0
      %402 = vmatprep.subr.mxu0 0.0
      %403 = vmatpush1.msra.mxu0 0.0
      %404 = vmatprep.subr.mxu0 0.0
      %405 = vmatpush1.msra.mxu0 0.0
      %406 = vmatprep.subr.mxu0 0.0
      %407 = vmatpush1.msra.mxu0 0.0
      %408 = vmatprep.subr.mxu0 0.0
      %409 = vmatpush1.msra.mxu0 0.0
      %410 = vmatprep.subr.mxu0 0.0
      %411 = vmatpush1.msra.mxu0 0.0
      %412 = vmatprep.subr.mxu0 0.0
      %413 = vmatpush1.msra.mxu0 0.0
      %414 = vmatprep.subr.mxu0 0.0
      %415 = vmatpush1.msra.mxu0 0.0
      %416 = vmatprep.subr.mxu0 0.0
      %417 = vmatpush1.msra.mxu0 0.0
      %418 = vmatprep.subr.mxu0 0.0
      %419 = vmatpush1.msra.mxu0 0.0
      %420 = vmatprep.subr.mxu0 0.0
      %421 = vmatpush1.msra.mxu0 0.0
      %422 = vmatprep.subr.mxu0 0.0
      %423 = vmatpush1.msra.mxu0 0.0
      %424 = vmatprep.subr.mxu0 0.0
      %425 = vmatpush1.msra.mxu0 0.0
      %426 = vmatprep.subr.mxu0 0.0
      %427 = vmatpush1.msra.mxu0 0.0
      %428 = vmatprep.subr.mxu0 0.0
      %429 = vmatpush1.msra.mxu0 0.0
      %430 = vmatprep.subr.mxu0 0.0
      %431 = vmatpush1.msra.mxu0 0.0
      %432 = vmatprep.subr.mxu0 0.0
      %433 = vmatpush1.msra.mxu0 0.0
      %434 = vmatprep.subr.mxu0 0.0
      %435 = vmatpush1.msra.mxu0 0.0
      %436 = vmatprep.subr.mxu0 0.0
      %437 = vmatpush1.msra.mxu0 0.0
      %438 = vmatprep.subr.mxu0 0.0
      %439 = vmatpush1.msra.mxu0 0.0
      %440 = vmatprep.mubr.f32.mxu0 0.0
      %441 = vmatmul.mubr.f32.gmra.mrb[0].mxu0 %v374
      %v442 = vpop.f32.mrb[0].mxu0
      %v443 = vadd.f32 0.0, %v442
      %v444 = vpop.f32.mrb[0].mxu0
      %445 = vdwg.mxu0
      %v447 = vsel %vm221, %v207, 0
      %449 = vmatprep.subr.mxu0 0.0
      %450 = vmatpush1.msra.mxu0 %v301
      %451 = vmatprep.subr.mxu0 0.0
      %452 = vmatpush1.msra.mxu0 0.0
      %453 = vmatprep.subr.mxu0 0.0
      %454 = vmatpush1.msra.mxu0 0.0
      %455 = vmatprep.subr.mxu0 0.0
      %456 = vmatpush1.msra.mxu0 0.0
      %457 = vmatprep.subr.mxu0 0.0
      %458 = vmatpush1.msra.mxu0 0.0
      %459 = vmatprep.subr.mxu0 0.0
      %460 = vmatpush1.msra.mxu0 0.0
      %461 = vmatprep.subr.mxu0 0.0
      %462 = vmatpush1.msra.mxu0 0.0
      %463 = vmatprep.subr.mxu0 0.0
      %464 = vmatpush1.msra.mxu0 0.0
      %465 = vmatprep.subr.mxu0 0.0
      %466 = vmatpush1.msra.mxu0 0.0
      %467 = vmatprep.subr.mxu0 0.0
      %468 = vmatpush1.msra.mxu0 0.0
      %469 = vmatprep.subr.mxu0 0.0
      %470 = vmatpush1.msra.mxu0 0.0
      %471 = vmatprep.subr.mxu0 0.0
      %472 = vmatpush1.msra.mxu0 0.0
      %473 = vmatprep.subr.mxu0 0.0
      %474 = vmatpush1.msra.mxu0 0.0
      %475 = vmatprep.subr.mxu0 0.0
      %476 = vmatpush1.msra.mxu0 0.0
      %477 = vmatprep.subr.mxu0 0.0
      %478 = vmatpush1.msra.mxu0 0.0
      %479 = vmatprep.subr.mxu0 0.0
      %480 = vmatpush1.msra.mxu0 0.0
      %481 = vmatprep.subr.mxu0 0.0
      %482 = vmatpush1.msra.mxu0 0.0
      %483 = vmatprep.subr.mxu0 0.0
      %484 = vmatpush1.msra.mxu0 0.0
      %485 = vmatprep.subr.mxu0 0.0
      %486 = vmatpush1.msra.mxu0 0.0
      %487 = vmatprep.subr.mxu0 0.0
      %488 = vmatpush1.msra.mxu0 0.0
      %489 = vmatprep.subr.mxu0 0.0
      %490 = vmatpush1.msra.mxu0 0.0
      %491 = vmatprep.subr.mxu0 0.0
      %492 = vmatpush1.msra.mxu0 0.0
      %493 = vmatprep.subr.mxu0 0.0
      %494 = vmatpush1.msra.mxu0 0.0
      %495 = vmatprep.subr.mxu0 0.0
      %496 = vmatpush1.msra.mxu0 0.0
      %497 = vmatprep.subr.mxu0 0.0
      %498 = vmatpush1.msra.mxu0 0.0
      %499 = vmatprep.subr.mxu0 0.0
      %500 = vmatpush1.msra.mxu0 0.0
      %501 = vmatprep.subr.mxu0 0.0
      %502 = vmatpush1.msra.mxu0 0.0
      %503 = vmatprep.subr.mxu0 0.0
      %504 = vmatpush1.msra.mxu0 0.0
      %505 = vmatprep.subr.mxu0 0.0
      %506 = vmatpush1.msra.mxu0 0.0
      %507 = vmatprep.subr.mxu0 0.0
      %508 = vmatpush1.msra.mxu0 0.0
      %509 = vmatprep.subr.mxu0 0.0
      %510 = vmatpush1.msra.mxu0 0.0
      %511 = vmatprep.subr.mxu0 0.0
      %512 = vmatpush1.msra.mxu0 0.0
      %513 = vmatprep.mubr.f32.mxu0 0.0
      %514 = vmatmul.mubr.f32.gmra.mrb[0].mxu0 %v447
      %v515 = vpop.f32.mrb[0].mxu0
      %v516 = vadd.f32 %v443, %v515
      %v517 = vpop.f32.mrb[0].mxu0
      %518 = vdwg.mxu0
      %vm519 = vcmask 130048
      %v521 = vsel %vm519, %v516, 0
      %523 = vmatprep.subr.mxu0 0.0
      %524 = vmatpush1.msra.mxu0 %v215
      %525 = vmatprep.subr.mxu0 0.0
      %526 = vmatpush1.msra.mxu0 %v216
      %527 = vmatprep.subr.mxu0 0.0
      %528 = vmatpush1.msra.mxu0 0.0
      %529 = vmatprep.subr.mxu0 0.0
      %530 = vmatpush1.msra.mxu0 0.0
      %531 = vmatprep.subr.mxu0 0.0
      %532 = vmatpush1.msra.mxu0 0.0
      %533 = vmatprep.subr.mxu0 0.0
      %534 = vmatpush1.msra.mxu0 0.0
      %535 = vmatprep.subr.mxu0 0.0
      %536 = vmatpush1.msra.mxu0 0.0
      %537 = vmatprep.subr.mxu0 0.0
      %538 = vmatpush1.msra.mxu0 0.0
      %539 = vmatprep.subr.mxu0 0.0
      %540 = vmatpush1.msra.mxu0 0.0
      %541 = vmatprep.subr.mxu0 0.0
      %542 = vmatpush1.msra.mxu0 0.0
      %543 = vmatprep.subr.mxu0 0.0
      %544 = vmatpush1.msra.mxu0 0.0
      %545 = vmatprep.subr.mxu0 0.0
      %546 = vmatpush1.msra.mxu0 0.0
      %547 = vmatprep.subr.mxu0 0.0
      %548 = vmatpush1.msra.mxu0 0.0
      %549 = vmatprep.subr.mxu0 0.0
      %550 = vmatpush1.msra.mxu0 0.0
      %551 = vmatprep.subr.mxu0 0.0
      %552 = vmatpush1.msra.mxu0 0.0
      %553 = vmatprep.subr.mxu0 0.0
      %554 = vmatpush1.msra.mxu0 0.0
      %555 = vmatprep.subr.mxu0 0.0
      %556 = vmatpush1.msra.mxu0 0.0
      %557 = vmatprep.subr.mxu0 0.0
      %558 = vmatpush1.msra.mxu0 0.0
      %559 = vmatprep.subr.mxu0 0.0
      %560 = vmatpush1.msra.mxu0 0.0
      %561 = vmatprep.subr.mxu0 0.0
      %562 = vmatpush1.msra.mxu0 0.0
      %563 = vmatprep.subr.mxu0 0.0
      %564 = vmatpush1.msra.mxu0 0.0
      %565 = vmatprep.subr.mxu0 0.0
      %566 = vmatpush1.msra.mxu0 0.0
      %567 = vmatprep.subr.mxu0 0.0
      %568 = vmatpush1.msra.mxu0 0.0
      %569 = vmatprep.subr.mxu0 0.0
      %570 = vmatpush1.msra.mxu0 0.0
      %571 = vmatprep.subr.mxu0 0.0
      %572 = vmatpush1.msra.mxu0 0.0
      %573 = vmatprep.subr.mxu0 0.0
      %574 = vmatpush1.msra.mxu0 0.0
      %575 = vmatprep.subr.mxu0 0.0
      %576 = vmatpush1.msra.mxu0 0.0
      %577 = vmatprep.subr.mxu0 0.0
      %578 = vmatpush1.msra.mxu0 0.0
      %579 = vmatprep.subr.mxu0 0.0
      %580 = vmatpush1.msra.mxu0 0.0
      %581 = vmatprep.subr.mxu0 0.0
      %582 = vmatpush1.msra.mxu0 0.0
      %583 = vmatprep.subr.mxu0 0.0
      %584 = vmatpush1.msra.mxu0 0.0
      %585 = vmatprep.subr.mxu0 0.0
      %586 = vmatpush1.msra.mxu0 0.0
      %587 = vmatprep.mubr.f32.mxu0 0.0
      %588 = vmatmul.mubr.f32.gmra.mrb[0].mxu0 %v521
      %v589 = vpop.f32.mrb[0].mxu0
      %v590 = vadd.f32 0.0, %v589
      %v591 = vpop.f32.mrb[0].mxu0
      %592 = vdwg.mxu0
      %v594 = vsel %vm519, %v370, 0
      %596 = vmatprep.subr.mxu0 0.0
      %597 = vmatpush1.msra.mxu0 %v212
      %598 = vmatprep.subr.mxu0 0.0
      %599 = vmatpush1.msra.mxu0 %v213
      %600 = vmatprep.subr.mxu0 0.0
      %601 = vmatpush1.msra.mxu0 0.0
      %602 = vmatprep.subr.mxu0 0.0
      %603 = vmatpush1.msra.mxu0 0.0
      %604 = vmatprep.subr.mxu0 0.0
      %605 = vmatpush1.msra.mxu0 0.0
      %606 = vmatprep.subr.mxu0 0.0
      %607 = vmatpush1.msra.mxu0 0.0
      %608 = vmatprep.subr.mxu0 0.0
      %609 = vmatpush1.msra.mxu0 0.0
      %610 = vmatprep.subr.mxu0 0.0
      %611 = vmatpush1.msra.mxu0 0.0
      %612 = vmatprep.subr.mxu0 0.0
      %613 = vmatpush1.msra.mxu0 0.0
      %614 = vmatprep.subr.mxu0 0.0
      %615 = vmatpush1.msra.mxu0 0.0
      %616 = vmatprep.subr.mxu0 0.0
      %617 = vmatpush1.msra.mxu0 0.0
      %618 = vmatprep.subr.mxu0 0.0
      %619 = vmatpush1.msra.mxu0 0.0
      %620 = vmatprep.subr.mxu0 0.0
      %621 = vmatpush1.msra.mxu0 0.0
      %622 = vmatprep.subr.mxu0 0.0
      %623 = vmatpush1.msra.mxu0 0.0
      %624 = vmatprep.subr.mxu0 0.0
      %625 = vmatpush1.msra.mxu0 0.0
      %626 = vmatprep.subr.mxu0 0.0
      %627 = vmatpush1.msra.mxu0 0.0
      %628 = vmatprep.subr.mxu0 0.0
      %629 = vmatpush1.msra.mxu0 0.0
      %630 = vmatprep.subr.mxu0 0.0
      %631 = vmatpush1.msra.mxu0 0.0
      %632 = vmatprep.subr.mxu0 0.0
      %633 = vmatpush1.msra.mxu0 0.0
      %634 = vmatprep.subr.mxu0 0.0
      %635 = vmatpush1.msra.mxu0 0.0
      %636 = vmatprep.subr.mxu0 0.0
      %637 = vmatpush1.msra.mxu0 0.0
      %638 = vmatprep.subr.mxu0 0.0
      %639 = vmatpush1.msra.mxu0 0.0
      %640 = vmatprep.subr.mxu0 0.0
      %641 = vmatpush1.msra.mxu0 0.0
      %642 = vmatprep.subr.mxu0 0.0
      %643 = vmatpush1.msra.mxu0 0.0
      %644 = vmatprep.subr.mxu0 0.0
      %645 = vmatpush1.msra.mxu0 0.0
      %646 = vmatprep.subr.mxu0 0.0
      %647 = vmatpush1.msra.mxu0 0.0
      %648 = vmatprep.subr.mxu0 0.0
      %649 = vmatpush1.msra.mxu0 0.0
      %650 = vmatprep.subr.mxu0 0.0
      %651 = vmatpush1.msra.mxu0 0.0
      %652 = vmatprep.subr.mxu0 0.0
      %653 = vmatpush1.msra.mxu0 0.0
      %654 = vmatprep.subr.mxu0 0.0
      %655 = vmatpush1.msra.mxu0 0.0
      %656 = vmatprep.subr.mxu0 0.0
      %657 = vmatpush1.msra.mxu0 0.0
      %658 = vmatprep.subr.mxu0 0.0
      %659 = vmatpush1.msra.mxu0 0.0
      %660 = vmatprep.mubr.f32.mxu0 0.0
      %661 = vmatmul.mubr.f32.gmra.mrb[0].mxu0 %v594
      %v662 = vpop.f32.mrb[0].mxu0
      %v663 = vadd.f32 %v590, %v662
      %v664 = vpop.f32.mrb[0].mxu0
      %665 = vdwg.mxu0
      %vm666 = vcmask 64512
      %667 = vst.msk [vmem:[%s204] sm:$0xff] %vm666, %v663
      %v668 = vld [vmem:[%s196] sm:$0xf]
      %670 = vrot.lane.b32.xlu0 %v668, 80
      %v671 = vpop.permute.xlu0 %670
      %v672 = vsel %vm225, %v671, 0
      %674 = vmatprep.subr.mxu0 0.0
      %675 = vmatpush1.msra.mxu0 %v672
      %676 = vmatprep.subr.mxu0 0.0
      %677 = vmatpush1.msra.mxu0 0.0
      %678 = vmatprep.subr.mxu0 0.0
      %679 = vmatpush1.msra.mxu0 0.0
      %680 = vmatprep.subr.mxu0 0.0
      %681 = vmatpush1.msra.mxu0 0.0
      %682 = vmatprep.subr.mxu0 0.0
      %683 = vmatpush1.msra.mxu0 0.0
      %684 = vmatprep.subr.mxu0 0.0
      %685 = vmatpush1.msra.mxu0 0.0
      %686 = vmatprep.subr.mxu0 0.0
      %687 = vmatpush1.msra.mxu0 0.0
      %688 = vmatprep.subr.mxu0 0.0
      %689 = vmatpush1.msra.mxu0 0.0
      %690 = vmatprep.subr.mxu0 0.0
      %691 = vmatpush1.msra.mxu0 0.0
      %692 = vmatprep.subr.mxu0 0.0
      %693 = vmatpush1.msra.mxu0 0.0
      %694 = vmatprep.subr.mxu0 0.0
      %695 = vmatpush1.msra.mxu0 0.0
      %696 = vmatprep.subr.mxu0 0.0
      %697 = vmatpush1.msra.mxu0 0.0
      %698 = vmatprep.subr.mxu0 0.0
      %699 = vmatpush1.msra.mxu0 0.0
      %700 = vmatprep.subr.mxu0 0.0
      %701 = vmatpush1.msra.mxu0 0.0
      %702 = vmatprep.subr.mxu0 0.0
      %703 = vmatpush1.msra.mxu0 0.0
      %704 = vmatprep.subr.mxu0 0.0
      %705 = vmatpush1.msra.mxu0 0.0
      %706 = vmatprep.subr.mxu0 0.0
      %707 = vmatpush1.msra.mxu0 0.0
      %708 = vmatprep.subr.mxu0 0.0
      %709 = vmatpush1.msra.mxu0 0.0
      %710 = vmatprep.subr.mxu0 0.0
      %711 = vmatpush1.msra.mxu0 0.0
      %712 = vmatprep.subr.mxu0 0.0
      %713 = vmatpush1.msra.mxu0 0.0
      %714 = vmatprep.subr.mxu0 0.0
      %715 = vmatpush1.msra.mxu0 0.0
      %716 = vmatprep.subr.mxu0 0.0
      %717 = vmatpush1.msra.mxu0 0.0
      %718 = vmatprep.subr.mxu0 0.0
      %719 = vmatpush1.msra.mxu0 0.0
      %720 = vmatprep.subr.mxu0 0.0
      %721 = vmatpush1.msra.mxu0 0.0
      %722 = vmatprep.subr.mxu0 0.0
      %723 = vmatpush1.msra.mxu0 0.0
      %724 = vmatprep.subr.mxu0 0.0
      %725 = vmatpush1.msra.mxu0 0.0
      %726 = vmatprep.subr.mxu0 0.0
      %727 = vmatpush1.msra.mxu0 0.0
      %728 = vmatprep.subr.mxu0 0.0
      %729 = vmatpush1.msra.mxu0 0.0
      %730 = vmatprep.subr.mxu0 0.0
      %731 = vmatpush1.msra.mxu0 0.0
      %732 = vmatprep.subr.mxu0 0.0
      %733 = vmatpush1.msra.mxu0 0.0
      %734 = vmatprep.subr.mxu0 0.0
      %735 = vmatpush1.msra.mxu0 0.0
      %736 = vmatprep.subr.mxu0 0.0
      %737 = vmatpush1.msra.mxu0 0.0
      %738 = vmatprep.mubr.f32.mxu0 0.0
      %739 = vmatmul.mubr.f32.gmra.mrb[0].mxu0 %v223
      %v740 = vpop.f32.mrb[0].mxu0
      %v741 = vadd.f32 0.0, %v740
      %v742 = vpop.f32.mrb[0].mxu0
      %743 = vdwg.mxu0
      %744 = vrot.lane.b32.xlu0 %v668, 96
      %v745 = vpop.permute.xlu0 %744
      %v746 = vsel %vm225, %v745, 0
      %748 = vmatprep.subr.mxu0 0.0
      %749 = vmatpush1.msra.mxu0 %v746
      %750 = vmatprep.subr.mxu0 0.0
      %751 = vmatpush1.msra.mxu0 0.0
      %752 = vmatprep.subr.mxu0 0.0
      %753 = vmatpush1.msra.mxu0 0.0
      %754 = vmatprep.subr.mxu0 0.0
      %755 = vmatpush1.msra.mxu0 0.0
      %756 = vmatprep.subr.mxu0 0.0
      %757 = vmatpush1.msra.mxu0 0.0
      %758 = vmatprep.subr.mxu0 0.0
      %759 = vmatpush1.msra.mxu0 0.0
      %760 = vmatprep.subr.mxu0 0.0
      %761 = vmatpush1.msra.mxu0 0.0
      %762 = vmatprep.subr.mxu0 0.0
      %763 = vmatpush1.msra.mxu0 0.0
      %764 = vmatprep.subr.mxu0 0.0
      %765 = vmatpush1.msra.mxu0 0.0
      %766 = vmatprep.subr.mxu0 0.0
      %767 = vmatpush1.msra.mxu0 0.0
      %768 = vmatprep.subr.mxu0 0.0
      %769 = vmatpush1.msra.mxu0 0.0
      %770 = vmatprep.subr.mxu0 0.0
      %771 = vmatpush1.msra.mxu0 0.0
      %772 = vmatprep.subr.mxu0 0.0
      %773 = vmatpush1.msra.mxu0 0.0
      %774 = vmatprep.subr.mxu0 0.0
      %775 = vmatpush1.msra.mxu0 0.0
      %776 = vmatprep.subr.mxu0 0.0
      %777 = vmatpush1.msra.mxu0 0.0
      %778 = vmatprep.subr.mxu0 0.0
      %779 = vmatpush1.msra.mxu0 0.0
      %780 = vmatprep.subr.mxu0 0.0
      %781 = vmatpush1.msra.mxu0 0.0
      %782 = vmatprep.subr.mxu0 0.0
      %783 = vmatpush1.msra.mxu0 0.0
      %784 = vmatprep.subr.mxu0 0.0
      %785 = vmatpush1.msra.mxu0 0.0
      %786 = vmatprep.subr.mxu0 0.0
      %787 = vmatpush1.msra.mxu0 0.0
      %788 = vmatprep.subr.mxu0 0.0
      %789 = vmatpush1.msra.mxu0 0.0
      %790 = vmatprep.subr.mxu0 0.0
      %791 = vmatpush1.msra.mxu0 0.0
      %792 = vmatprep.subr.mxu0 0.0
      %793 = vmatpush1.msra.mxu0 0.0
      %794 = vmatprep.subr.mxu0 0.0
      %795 = vmatpush1.msra.mxu0 0.0
      %796 = vmatprep.subr.mxu0 0.0
      %797 = vmatpush1.msra.mxu0 0.0
      %798 = vmatprep.subr.mxu0 0.0
      %799 = vmatpush1.msra.mxu0 0.0
      %800 = vmatprep.subr.mxu0 0.0
      %801 = vmatpush1.msra.mxu0 0.0
      %802 = vmatprep.subr.mxu0 0.0
      %803 = vmatpush1.msra.mxu0 0.0
      %804 = vmatprep.subr.mxu0 0.0
      %805 = vmatpush1.msra.mxu0 0.0
      %806 = vmatprep.subr.mxu0 0.0
      %807 = vmatpush1.msra.mxu0 0.0
      %808 = vmatprep.subr.mxu0 0.0
      %809 = vmatpush1.msra.mxu0 0.0
      %810 = vmatprep.subr.mxu0 0.0
      %811 = vmatpush1.msra.mxu0 0.0
      %812 = vmatprep.mubr.f32.mxu0 0.0
      %813 = vmatmul.mubr.f32.gmra.mrb[0].mxu0 %v299
      %v814 = vpop.f32.mrb[0].mxu0
      %v815 = vadd.f32 %v741, %v814
      %v816 = vpop.f32.mrb[0].mxu0
      %817 = vdwg.mxu0
      %818 = vmatprep.subr.mxu0 0.0
      %819 = vmatpush1.msra.mxu0 %v672
      %820 = vmatprep.subr.mxu0 0.0
      %821 = vmatpush1.msra.mxu0 0.0
      %822 = vmatprep.subr.mxu0 0.0
      %823 = vmatpush1.msra.mxu0 0.0
      %824 = vmatprep.subr.mxu0 0.0
      %825 = vmatpush1.msra.mxu0 0.0
      %826 = vmatprep.subr.mxu0 0.0
      %827 = vmatpush1.msra.mxu0 0.0
      %828 = vmatprep.subr.mxu0 0.0
      %829 = vmatpush1.msra.mxu0 0.0
      %830 = vmatprep.subr.mxu0 0.0
      %831 = vmatpush1.msra.mxu0 0.0
      %832 = vmatprep.subr.mxu0 0.0
      %833 = vmatpush1.msra.mxu0 0.0
      %834 = vmatprep.subr.mxu0 0.0
      %835 = vmatpush1.msra.mxu0 0.0
      %836 = vmatprep.subr.mxu0 0.0
      %837 = vmatpush1.msra.mxu0 0.0
      %838 = vmatprep.subr.mxu0 0.0
      %839 = vmatpush1.msra.mxu0 0.0
      %840 = vmatprep.subr.mxu0 0.0
      %841 = vmatpush1.msra.mxu0 0.0
      %842 = vmatprep.subr.mxu0 0.0
      %843 = vmatpush1.msra.mxu0 0.0
      %844 = vmatprep.subr.mxu0 0.0
      %845 = vmatpush1.msra.mxu0 0.0
      %846 = vmatprep.subr.mxu0 0.0
      %847 = vmatpush1.msra.mxu0 0.0
      %848 = vmatprep.subr.mxu0 0.0
      %849 = vmatpush1.msra.mxu0 0.0
      %850 = vmatprep.subr.mxu0 0.0
      %851 = vmatpush1.msra.mxu0 0.0
      %852 = vmatprep.subr.mxu0 0.0
      %853 = vmatpush1.msra.mxu0 0.0
      %854 = vmatprep.subr.mxu0 0.0
      %855 = vmatpush1.msra.mxu0 0.0
      %856 = vmatprep.subr.mxu0 0.0
      %857 = vmatpush1.msra.mxu0 0.0
      %858 = vmatprep.subr.mxu0 0.0
      %859 = vmatpush1.msra.mxu0 0.0
      %860 = vmatprep.subr.mxu0 0.0
      %861 = vmatpush1.msra.mxu0 0.0
      %862 = vmatprep.subr.mxu0 0.0
      %863 = vmatpush1.msra.mxu0 0.0
      %864 = vmatprep.subr.mxu0 0.0
      %865 = vmatpush1.msra.mxu0 0.0
      %866 = vmatprep.subr.mxu0 0.0
      %867 = vmatpush1.msra.mxu0 0.0
      %868 = vmatprep.subr.mxu0 0.0
      %869 = vmatpush1.msra.mxu0 0.0
      %870 = vmatprep.subr.mxu0 0.0
      %871 = vmatpush1.msra.mxu0 0.0
      %872 = vmatprep.subr.mxu0 0.0
      %873 = vmatpush1.msra.mxu0 0.0
      %874 = vmatprep.subr.mxu0 0.0
      %875 = vmatpush1.msra.mxu0 0.0
      %876 = vmatprep.subr.mxu0 0.0
      %877 = vmatpush1.msra.mxu0 0.0
      %878 = vmatprep.subr.mxu0 0.0
      %879 = vmatpush1.msra.mxu0 0.0
      %880 = vmatprep.subr.mxu0 0.0
      %881 = vmatpush1.msra.mxu0 0.0
      %882 = vmatprep.mubr.f32.mxu0 0.0
      %883 = vmatmul.mubr.f32.gmra.mrb[0].mxu0 %v374
      %v884 = vpop.f32.mrb[0].mxu0
      %v885 = vadd.f32 0.0, %v884
      %v886 = vpop.f32.mrb[0].mxu0
      %887 = vdwg.mxu0
      %888 = vmatprep.subr.mxu0 0.0
      %889 = vmatpush1.msra.mxu0 %v746
      %890 = vmatprep.subr.mxu0 0.0
      %891 = vmatpush1.msra.mxu0 0.0
      %892 = vmatprep.subr.mxu0 0.0
      %893 = vmatpush1.msra.mxu0 0.0
      %894 = vmatprep.subr.mxu0 0.0
      %895 = vmatpush1.msra.mxu0 0.0
      %896 = vmatprep.subr.mxu0 0.0
      %897 = vmatpush1.msra.mxu0 0.0
      %898 = vmatprep.subr.mxu0 0.0
      %899 = vmatpush1.msra.mxu0 0.0
      %900 = vmatprep.subr.mxu0 0.0
      %901 = vmatpush1.msra.mxu0 0.0
      %902 = vmatprep.subr.mxu0 0.0
      %903 = vmatpush1.msra.mxu0 0.0
      %904 = vmatprep.subr.mxu0 0.0
      %905 = vmatpush1.msra.mxu0 0.0
      %906 = vmatprep.subr.mxu0 0.0
      %907 = vmatpush1.msra.mxu0 0.0
      %908 = vmatprep.subr.mxu0 0.0
      %909 = vmatpush1.msra.mxu0 0.0
      %910 = vmatprep.subr.mxu0 0.0
      %911 = vmatpush1.msra.mxu0 0.0
      %912 = vmatprep.subr.mxu0 0.0
      %913 = vmatpush1.msra.mxu0 0.0
      %914 = vmatprep.subr.mxu0 0.0
      %915 = vmatpush1.msra.mxu0 0.0
      %916 = vmatprep.subr.mxu0 0.0
      %917 = vmatpush1.msra.mxu0 0.0
      %918 = vmatprep.subr.mxu0 0.0
      %919 = vmatpush1.msra.mxu0 0.0
      %920 = vmatprep.subr.mxu0 0.0
      %921 = vmatpush1.msra.mxu0 0.0
      %922 = vmatprep.subr.mxu0 0.0
      %923 = vmatpush1.msra.mxu0 0.0
      %924 = vmatprep.subr.mxu0 0.0
      %925 = vmatpush1.msra.mxu0 0.0
      %926 = vmatprep.subr.mxu0 0.0
      %927 = vmatpush1.msra.mxu0 0.0
      %928 = vmatprep.subr.mxu0 0.0
      %929 = vmatpush1.msra.mxu0 0.0
      %930 = vmatprep.subr.mxu0 0.0
      %931 = vmatpush1.msra.mxu0 0.0
      %932 = vmatprep.subr.mxu0 0.0
      %933 = vmatpush1.msra.mxu0 0.0
      %934 = vmatprep.subr.mxu0 0.0
      %935 = vmatpush1.msra.mxu0 0.0
      %936 = vmatprep.subr.mxu0 0.0
      %937 = vmatpush1.msra.mxu0 0.0
      %938 = vmatprep.subr.mxu0 0.0
      %939 = vmatpush1.msra.mxu0 0.0
      %940 = vmatprep.subr.mxu0 0.0
      %941 = vmatpush1.msra.mxu0 0.0
      %942 = vmatprep.subr.mxu0 0.0
      %943 = vmatpush1.msra.mxu0 0.0
      %944 = vmatprep.subr.mxu0 0.0
      %945 = vmatpush1.msra.mxu0 0.0
      %946 = vmatprep.subr.mxu0 0.0
      %947 = vmatpush1.msra.mxu0 0.0
      %948 = vmatprep.subr.mxu0 0.0
      %949 = vmatpush1.msra.mxu0 0.0
      %950 = vmatprep.subr.mxu0 0.0
      %951 = vmatpush1.msra.mxu0 0.0
      %952 = vmatprep.mubr.f32.mxu0 0.0
      %953 = vmatmul.mubr.f32.gmra.mrb[0].mxu0 %v447
      %v954 = vpop.f32.mrb[0].mxu0
      %v955 = vadd.f32 %v885, %v954
      %v956 = vpop.f32.mrb[0].mxu0
      %957 = vdwg.mxu0
      %v959 = vsel %vm519, %v955, 0
      %961 = vmatprep.subr.mxu0 0.0
      %962 = vmatpush1.msra.mxu0 %v215
      %963 = vmatprep.subr.mxu0 0.0
      %964 = vmatpush1.msra.mxu0 %v216
      %965 = vmatprep.subr.mxu0 0.0
      %966 = vmatpush1.msra.mxu0 0.0
      %967 = vmatprep.subr.mxu0 0.0
      %968 = vmatpush1.msra.mxu0 0.0
      %969 = vmatprep.subr.mxu0 0.0
      %970 = vmatpush1.msra.mxu0 0.0
      %971 = vmatprep.subr.mxu0 0.0
      %972 = vmatpush1.msra.mxu0 0.0
      %973 = vmatprep.subr.mxu0 0.0
      %974 = vmatpush1.msra.mxu0 0.0
      %975 = vmatprep.subr.mxu0 0.0
      %976 = vmatpush1.msra.mxu0 0.0
      %977 = vmatprep.subr.mxu0 0.0
      %978 = vmatpush1.msra.mxu0 0.0
      %979 = vmatprep.subr.mxu0 0.0
      %980 = vmatpush1.msra.mxu0 0.0
      %981 = vmatprep.subr.mxu0 0.0
      %982 = vmatpush1.msra.mxu0 0.0
      %983 = vmatprep.subr.mxu0 0.0
      %984 = vmatpush1.msra.mxu0 0.0
      %985 = vmatprep.subr.mxu0 0.0
      %986 = vmatpush1.msra.mxu0 0.0
      %987 = vmatprep.subr.mxu0 0.0
      %988 = vmatpush1.msra.mxu0 0.0
      %989 = vmatprep.subr.mxu0 0.0
      %990 = vmatpush1.msra.mxu0 0.0
      %991 = vmatprep.subr.mxu0 0.0
      %992 = vmatpush1.msra.mxu0 0.0
      %993 = vmatprep.subr.mxu0 0.0
      %994 = vmatpush1.msra.mxu0 0.0
      %995 = vmatprep.subr.mxu0 0.0
      %996 = vmatpush1.msra.mxu0 0.0
      %997 = vmatprep.subr.mxu0 0.0
      %998 = vmatpush1.msra.mxu0 0.0
      %999 = vmatprep.subr.mxu0 0.0
      %1000 = vmatpush1.msra.mxu0 0.0
      %1001 = vmatprep.subr.mxu0 0.0
      %1002 = vmatpush1.msra.mxu0 0.0
      %1003 = vmatprep.subr.mxu0 0.0
      %1004 = vmatpush1.msra.mxu0 0.0
      %1005 = vmatprep.subr.mxu0 0.0
      %1006 = vmatpush1.msra.mxu0 0.0
      %1007 = vmatprep.subr.mxu0 0.0
      %1008 = vmatpush1.msra.mxu0 0.0
      %1009 = vmatprep.subr.mxu0 0.0
      %1010 = vmatpush1.msra.mxu0 0.0
      %1011 = vmatprep.subr.mxu0 0.0
      %1012 = vmatpush1.msra.mxu0 0.0
      %1013 = vmatprep.subr.mxu0 0.0
      %1014 = vmatpush1.msra.mxu0 0.0
      %1015 = vmatprep.subr.mxu0 0.0
      %1016 = vmatpush1.msra.mxu0 0.0
      %1017 = vmatprep.subr.mxu0 0.0
      %1018 = vmatpush1.msra.mxu0 0.0
      %1019 = vmatprep.subr.mxu0 0.0
      %1020 = vmatpush1.msra.mxu0 0.0
      %1021 = vmatprep.subr.mxu0 0.0
      %1022 = vmatpush1.msra.mxu0 0.0
      %1023 = vmatprep.subr.mxu0 0.0
      %1024 = vmatpush1.msra.mxu0 0.0
      %1025 = vmatprep.mubr.f32.mxu0 0.0
      %1026 = vmatmul.mubr.f32.gmra.mrb[0].mxu0 %v959
      %v1027 = vpop.f32.mrb[0].mxu0
      %v1028 = vadd.f32 0.0, %v1027
      %v1029 = vpop.f32.mrb[0].mxu0
      %1030 = vdwg.mxu0
      %v1032 = vsel %vm519, %v815, 0
      %1034 = vmatprep.subr.mxu0 0.0
      %1035 = vmatpush1.msra.mxu0 %v212
      %1036 = vmatprep.subr.mxu0 0.0
      %1037 = vmatpush1.msra.mxu0 %v213
      %1038 = vmatprep.subr.mxu0 0.0
      %1039 = vmatpush1.msra.mxu0 0.0
      %1040 = vmatprep.subr.mxu0 0.0
      %1041 = vmatpush1.msra.mxu0 0.0
      %1042 = vmatprep.subr.mxu0 0.0
      %1043 = vmatpush1.msra.mxu0 0.0
      %1044 = vmatprep.subr.mxu0 0.0
      %1045 = vmatpush1.msra.mxu0 0.0
      %1046 = vmatprep.subr.mxu0 0.0
      %1047 = vmatpush1.msra.mxu0 0.0
      %1048 = vmatprep.subr.mxu0 0.0
      %1049 = vmatpush1.msra.mxu0 0.0
      %1050 = vmatprep.subr.mxu0 0.0
      %1051 = vmatpush1.msra.mxu0 0.0
      %1052 = vmatprep.subr.mxu0 0.0
      %1053 = vmatpush1.msra.mxu0 0.0
      %1054 = vmatprep.subr.mxu0 0.0
      %1055 = vmatpush1.msra.mxu0 0.0
      %1056 = vmatprep.subr.mxu0 0.0
      %1057 = vmatpush1.msra.mxu0 0.0
      %1058 = vmatprep.subr.mxu0 0.0
      %1059 = vmatpush1.msra.mxu0 0.0
      %1060 = vmatprep.subr.mxu0 0.0
      %1061 = vmatpush1.msra.mxu0 0.0
      %1062 = vmatprep.subr.mxu0 0.0
      %1063 = vmatpush1.msra.mxu0 0.0
      %1064 = vmatprep.subr.mxu0 0.0
      %1065 = vmatpush1.msra.mxu0 0.0
      %1066 = vmatprep.subr.mxu0 0.0
      %1067 = vmatpush1.msra.mxu0 0.0
      %1068 = vmatprep.subr.mxu0 0.0
      %1069 = vmatpush1.msra.mxu0 0.0
      %1070 = vmatprep.subr.mxu0 0.0
      %1071 = vmatpush1.msra.mxu0 0.0
      %1072 = vmatprep.subr.mxu0 0.0
      %1073 = vmatpush1.msra.mxu0 0.0
      %1074 = vmatprep.subr.mxu0 0.0
      %1075 = vmatpush1.msra.mxu0 0.0
      %1076 = vmatprep.subr.mxu0 0.0
      %1077 = vmatpush1.msra.mxu0 0.0
      %1078 = vmatprep.subr.mxu0 0.0
      %1079 = vmatpush1.msra.mxu0 0.0
      %1080 = vmatprep.subr.mxu0 0.0
      %1081 = vmatpush1.msra.mxu0 0.0
      %1082 = vmatprep.subr.mxu0 0.0
      %1083 = vmatpush1.msra.mxu0 0.0
      %1084 = vmatprep.subr.mxu0 0.0
      %1085 = vmatpush1.msra.mxu0 0.0
      %1086 = vmatprep.subr.mxu0 0.0
      %1087 = vmatpush1.msra.mxu0 0.0
      %1088 = vmatprep.subr.mxu0 0.0
      %1089 = vmatpush1.msra.mxu0 0.0
      %1090 = vmatprep.subr.mxu0 0.0
      %1091 = vmatpush1.msra.mxu0 0.0
      %1092 = vmatprep.subr.mxu0 0.0
      %1093 = vmatpush1.msra.mxu0 0.0
      %1094 = vmatprep.subr.mxu0 0.0
      %1095 = vmatpush1.msra.mxu0 0.0
      %1096 = vmatprep.subr.mxu0 0.0
      %1097 = vmatpush1.msra.mxu0 0.0
      %1098 = vmatprep.mubr.f32.mxu0 0.0
      %1099 = vmatmul.mubr.f32.gmra.mrb[0].mxu0 %v1032
      %v1100 = vpop.f32.mrb[0].mxu0
      %v1101 = vadd.f32 %v1028, %v1100
      %v1102 = vpop.f32.mrb[0].mxu0
      %1103 = vdwg.mxu0
      %1105 = vrot.lane.b32.xlu0 %v1101, 8
      %v1106 = vpop.permute.xlu0 %1105
      %vm1108 = vcmask 130112
      %1109 = vst.msk [vmem:[%s204] sm:$0xff] %vm1108, %v1106
      %v1110 = vld [vmem:[%s196] sm:$0xf]
      %1112 = vrot.lane.b32.xlu0 %v1110, 48
      %v1113 = vpop.permute.xlu0 %1112
      %v1114 = vsel %vm225, %v1113, 0
      %1116 = vmatprep.subr.mxu0 0.0
      %1117 = vmatpush1.msra.mxu0 %v1114
      %1118 = vmatprep.subr.mxu0 0.0
      %1119 = vmatpush1.msra.mxu0 0.0
      %1120 = vmatprep.subr.mxu0 0.0
      %1121 = vmatpush1.msra.mxu0 0.0
      %1122 = vmatprep.subr.mxu0 0.0
      %1123 = vmatpush1.msra.mxu0 0.0
      %1124 = vmatprep.subr.mxu0 0.0
      %1125 = vmatpush1.msra.mxu0 0.0
      %1126 = vmatprep.subr.mxu0 0.0
      %1127 = vmatpush1.msra.mxu0 0.0
      %1128 = vmatprep.subr.mxu0 0.0
      %1129 = vmatpush1.msra.mxu0 0.0
      %1130 = vmatprep.subr.mxu0 0.0
      %1131 = vmatpush1.msra.mxu0 0.0
      %1132 = vmatprep.subr.mxu0 0.0
      %1133 = vmatpush1.msra.mxu0 0.0
      %1134 = vmatprep.subr.mxu0 0.0
      %1135 = vmatpush1.msra.mxu0 0.0
      %1136 = vmatprep.subr.mxu0 0.0
      %1137 = vmatpush1.msra.mxu0 0.0
      %1138 = vmatprep.subr.mxu0 0.0
      %1139 = vmatpush1.msra.mxu0 0.0
      %1140 = vmatprep.subr.mxu0 0.0
      %1141 = vmatpush1.msra.mxu0 0.0
      %1142 = vmatprep.subr.mxu0 0.0
      %1143 = vmatpush1.msra.mxu0 0.0
      %1144 = vmatprep.subr.mxu0 0.0
      %1145 = vmatpush1.msra.mxu0 0.0
      %1146 = vmatprep.subr.mxu0 0.0
      %1147 = vmatpush1.msra.mxu0 0.0
      %1148 = vmatprep.subr.mxu0 0.0
      %1149 = vmatpush1.msra.mxu0 0.0
      %1150 = vmatprep.subr.mxu0 0.0
      %1151 = vmatpush1.msra.mxu0 0.0
      %1152 = vmatprep.subr.mxu0 0.0
      %1153 = vmatpush1.msra.mxu0 0.0
      %1154 = vmatprep.subr.mxu0 0.0
      %1155 = vmatpush1.msra.mxu0 0.0
      %1156 = vmatprep.subr.mxu0 0.0
      %1157 = vmatpush1.msra.mxu0 0.0
      %1158 = vmatprep.subr.mxu0 0.0
      %1159 = vmatpush1.msra.mxu0 0.0
      %1160 = vmatprep.subr.mxu0 0.0
      %1161 = vmatpush1.msra.mxu0 0.0
      %1162 = vmatprep.subr.mxu0 0.0
      %1163 = vmatpush1.msra.mxu0 0.0
      %1164 = vmatprep.subr.mxu0 0.0
      %1165 = vmatpush1.msra.mxu0 0.0
      %1166 = vmatprep.subr.mxu0 0.0
      %1167 = vmatpush1.msra.mxu0 0.0
      %1168 = vmatprep.subr.mxu0 0.0
      %1169 = vmatpush1.msra.mxu0 0.0
      %1170 = vmatprep.subr.mxu0 0.0
      %1171 = vmatpush1.msra.mxu0 0.0
      %1172 = vmatprep.subr.mxu0 0.0
      %1173 = vmatpush1.msra.mxu0 0.0
      %1174 = vmatprep.subr.mxu0 0.0
      %1175 = vmatpush1.msra.mxu0 0.0
      %1176 = vmatprep.subr.mxu0 0.0
      %1177 = vmatpush1.msra.mxu0 0.0
      %1178 = vmatprep.subr.mxu0 0.0
      %1179 = vmatpush1.msra.mxu0 0.0
      %1180 = vmatprep.mubr.f32.mxu0 0.0
      %1181 = vmatmul.mubr.f32.gmra.mrb[0].mxu0 %v223
      %v1182 = vpop.f32.mrb[0].mxu0
      %v1183 = vadd.f32 0.0, %v1182
      %v1184 = vpop.f32.mrb[0].mxu0
      %1185 = vdwg.mxu0
      %1186 = vrot.lane.b32.xlu0 %v1110, 64
      %v1187 = vpop.permute.xlu0 %1186
      %v1188 = vsel %vm225, %v1187, 0
      %1190 = vmatprep.subr.mxu0 0.0
      %1191 = vmatpush1.msra.mxu0 %v1188
      %1192 = vmatprep.subr.mxu0 0.0
      %1193 = vmatpush1.msra.mxu0 0.0
      %1194 = vmatprep.subr.mxu0 0.0
      %1195 = vmatpush1.msra.mxu0 0.0
      %1196 = vmatprep.subr.mxu0 0.0
      %1197 = vmatpush1.msra.mxu0 0.0
      %1198 = vmatprep.subr.mxu0 0.0
      %1199 = vmatpush1.msra.mxu0 0.0
      %1200 = vmatprep.subr.mxu0 0.0
      %1201 = vmatpush1.msra.mxu0 0.0
      %1202 = vmatprep.subr.mxu0 0.0
      %1203 = vmatpush1.msra.mxu0 0.0
      %1204 = vmatprep.subr.mxu0 0.0
      %1205 = vmatpush1.msra.mxu0 0.0
      %1206 = vmatprep.subr.mxu0 0.0
      %1207 = vmatpush1.msra.mxu0 0.0
      %1208 = vmatprep.subr.mxu0 0.0
      %1209 = vmatpush1.msra.mxu0 0.0
      %1210 = vmatprep.subr.mxu0 0.0
      %1211 = vmatpush1.msra.mxu0 0.0
      %1212 = vmatprep.subr.mxu0 0.0
      %1213 = vmatpush1.msra.mxu0 0.0
      %1214 = vmatprep.subr.mxu0 0.0
      %1215 = vmatpush1.msra.mxu0 0.0
      %1216 = vmatprep.subr.mxu0 0.0
      %1217 = vmatpush1.msra.mxu0 0.0
      %1218 = vmatprep.subr.mxu0 0.0
      %1219 = vmatpush1.msra.mxu0 0.0
      %1220 = vmatprep.subr.mxu0 0.0
      %1221 = vmatpush1.msra.mxu0 0.0
      %1222 = vmatprep.subr.mxu0 0.0
      %1223 = vmatpush1.msra.mxu0 0.0
      %1224 = vmatprep.subr.mxu0 0.0
      %1225 = vmatpush1.msra.mxu0 0.0
      %1226 = vmatprep.subr.mxu0 0.0
      %1227 = vmatpush1.msra.mxu0 0.0
      %1228 = vmatprep.subr.mxu0 0.0
      %1229 = vmatpush1.msra.mxu0 0.0
      %1230 = vmatprep.subr.mxu0 0.0
      %1231 = vmatpush1.msra.mxu0 0.0
      %1232 = vmatprep.subr.mxu0 0.0
      %1233 = vmatpush1.msra.mxu0 0.0
      %1234 = vmatprep.subr.mxu0 0.0
      %1235 = vmatpush1.msra.mxu0 0.0
      %1236 = vmatprep.subr.mxu0 0.0
      %1237 = vmatpush1.msra.mxu0 0.0
      %1238 = vmatprep.subr.mxu0 0.0
      %1239 = vmatpush1.msra.mxu0 0.0
      %1240 = vmatprep.subr.mxu0 0.0
      %1241 = vmatpush1.msra.mxu0 0.0
      %1242 = vmatprep.subr.mxu0 0.0
      %1243 = vmatpush1.msra.mxu0 0.0
      %1244 = vmatprep.subr.mxu0 0.0
      %1245 = vmatpush1.msra.mxu0 0.0
      %1246 = vmatprep.subr.mxu0 0.0
      %1247 = vmatpush1.msra.mxu0 0.0
      %1248 = vmatprep.subr.mxu0 0.0
      %1249 = vmatpush1.msra.mxu0 0.0
      %1250 = vmatprep.subr.mxu0 0.0
      %1251 = vmatpush1.msra.mxu0 0.0
      %1252 = vmatprep.subr.mxu0 0.0
      %1253 = vmatpush1.msra.mxu0 0.0
      %1254 = vmatprep.mubr.f32.mxu0 0.0
      %1255 = vmatmul.mubr.f32.gmra.mrb[0].mxu0 %v299
      %v1256 = vpop.f32.mrb[0].mxu0
      %v1257 = vadd.f32 %v1183, %v1256
      %v1258 = vpop.f32.mrb[0].mxu0
      %1259 = vdwg.mxu0
      %1260 = vmatprep.subr.mxu0 0.0
      %1261 = vmatpush1.msra.mxu0 %v1114
      %1262 = vmatprep.subr.mxu0 0.0
      %1263 = vmatpush1.msra.mxu0 0.0
      %1264 = vmatprep.subr.mxu0 0.0
      %1265 = vmatpush1.msra.mxu0 0.0
      %1266 = vmatprep.subr.mxu0 0.0
      %1267 = vmatpush1.msra.mxu0 0.0
      %1268 = vmatprep.subr.mxu0 0.0
      %1269 = vmatpush1.msra.mxu0 0.0
      %1270 = vmatprep.subr.mxu0 0.0
      %1271 = vmatpush1.msra.mxu0 0.0
      %1272 = vmatprep.subr.mxu0 0.0
      %1273 = vmatpush1.msra.mxu0 0.0
      %1274 = vmatprep.subr.mxu0 0.0
      %1275 = vmatpush1.msra.mxu0 0.0
      %1276 = vmatprep.subr.mxu0 0.0
      %1277 = vmatpush1.msra.mxu0 0.0
      %1278 = vmatprep.subr.mxu0 0.0
      %1279 = vmatpush1.msra.mxu0 0.0
      %1280 = vmatprep.subr.mxu0 0.0
      %1281 = vmatpush1.msra.mxu0 0.0
      %1282 = vmatprep.subr.mxu0 0.0
      %1283 = vmatpush1.msra.mxu0 0.0
      %1284 = vmatprep.subr.mxu0 0.0
      %1285 = vmatpush1.msra.mxu0 0.0
      %1286 = vmatprep.subr.mxu0 0.0
      %1287 = vmatpush1.msra.mxu0 0.0
      %1288 = vmatprep.subr.mxu0 0.0
      %1289 = vmatpush1.msra.mxu0 0.0
      %1290 = vmatprep.subr.mxu0 0.0
      %1291 = vmatpush1.msra.mxu0 0.0
      %1292 = vmatprep.subr.mxu0 0.0
      %1293 = vmatpush1.msra.mxu0 0.0
      %1294 = vmatprep.subr.mxu0 0.0
      %1295 = vmatpush1.msra.mxu0 0.0
      %1296 = vmatprep.subr.mxu0 0.0
      %1297 = vmatpush1.msra.mxu0 0.0
      %1298 = vmatprep.subr.mxu0 0.0
      %1299 = vmatpush1.msra.mxu0 0.0
      %1300 = vmatprep.subr.mxu0 0.0
      %1301 = vmatpush1.msra.mxu0 0.0
      %1302 = vmatprep.subr.mxu0 0.0
      %1303 = vmatpush1.msra.mxu0 0.0
      %1304 = vmatprep.subr.mxu0 0.0
      %1305 = vmatpush1.msra.mxu0 0.0
      %1306 = vmatprep.subr.mxu0 0.0
      %1307 = vmatpush1.msra.mxu0 0.0
      %1308 = vmatprep.subr.mxu0 0.0
      %1309 = vmatpush1.msra.mxu0 0.0
      %1310 = vmatprep.subr.mxu0 0.0
      %1311 = vmatpush1.msra.mxu0 0.0
      %1312 = vmatprep.subr.mxu0 0.0
      %1313 = vmatpush1.msra.mxu0 0.0
      %1314 = vmatprep.subr.mxu0 0.0
      %1315 = vmatpush1.msra.mxu0 0.0
      %1316 = vmatprep.subr.mxu0 0.0
      %1317 = vmatpush1.msra.mxu0 0.0
      %1318 = vmatprep.subr.mxu0 0.0
      %1319 = vmatpush1.msra.mxu0 0.0
      %1320 = vmatprep.subr.mxu0 0.0
      %1321 = vmatpush1.msra.mxu0 0.0
      %1322 = vmatprep.subr.mxu0 0.0
      %1323 = vmatpush1.msra.mxu0 0.0
      %1324 = vmatprep.mubr.f32.mxu0 0.0
      %1325 = vmatmul.mubr.f32.gmra.mrb[0].mxu0 %v374
      %v1326 = vpop.f32.mrb[0].mxu0
      %v1327 = vadd.f32 0.0, %v1326
      %v1328 = vpop.f32.mrb[0].mxu0
      %1329 = vdwg.mxu0
      %1330 = vmatprep.subr.mxu0 0.0
      %1331 = vmatpush1.msra.mxu0 %v1188
      %1332 = vmatprep.subr.mxu0 0.0
      %1333 = vmatpush1.msra.mxu0 0.0
      %1334 = vmatprep.subr.mxu0 0.0
      %1335 = vmatpush1.msra.mxu0 0.0
      %1336 = vmatprep.subr.mxu0 0.0
      %1337 = vmatpush1.msra.mxu0 0.0
      %1338 = vmatprep.subr.mxu0 0.0
      %1339 = vmatpush1.msra.mxu0 0.0
      %1340 = vmatprep.subr.mxu0 0.0
      %1341 = vmatpush1.msra.mxu0 0.0
      %1342 = vmatprep.subr.mxu0 0.0
      %1343 = vmatpush1.msra.mxu0 0.0
      %1344 = vmatprep.subr.mxu0 0.0
      %1345 = vmatpush1.msra.mxu0 0.0
      %1346 = vmatprep.subr.mxu0 0.0
      %1347 = vmatpush1.msra.mxu0 0.0
      %1348 = vmatprep.subr.mxu0 0.0
      %1349 = vmatpush1.msra.mxu0 0.0
      %1350 = vmatprep.subr.mxu0 0.0
      %1351 = vmatpush1.msra.mxu0 0.0
      %1352 = vmatprep.subr.mxu0 0.0
      %1353 = vmatpush1.msra.mxu0 0.0
      %1354 = vmatprep.subr.mxu0 0.0
      %1355 = vmatpush1.msra.mxu0 0.0
      %1356 = vmatprep.subr.mxu0 0.0
      %1357 = vmatpush1.msra.mxu0 0.0
      %1358 = vmatprep.subr.mxu0 0.0
      %1359 = vmatpush1.msra.mxu0 0.0
      %1360 = vmatprep.subr.mxu0 0.0
      %1361 = vmatpush1.msra.mxu0 0.0
      %1362 = vmatprep.subr.mxu0 0.0
      %1363 = vmatpush1.msra.mxu0 0.0
      %1364 = vmatprep.subr.mxu0 0.0
      %1365 = vmatpush1.msra.mxu0 0.0
      %1366 = vmatprep.subr.mxu0 0.0
      %1367 = vmatpush1.msra.mxu0 0.0
      %1368 = vmatprep.subr.mxu0 0.0
      %1369 = vmatpush1.msra.mxu0 0.0
      %1370 = vmatprep.subr.mxu0 0.0
      %1371 = vmatpush1.msra.mxu0 0.0
      %1372 = vmatprep.subr.mxu0 0.0
      %1373 = vmatpush1.msra.mxu0 0.0
      %1374 = vmatprep.subr.mxu0 0.0
      %1375 = vmatpush1.msra.mxu0 0.0
      %1376 = vmatprep.subr.mxu0 0.0
      %1377 = vmatpush1.msra.mxu0 0.0
      %1378 = vmatprep.subr.mxu0 0.0
      %1379 = vmatpush1.msra.mxu0 0.0
      %1380 = vmatprep.subr.mxu0 0.0
      %1381 = vmatpush1.msra.mxu0 0.0
      %1382 = vmatprep.subr.mxu0 0.0
      %1383 = vmatpush1.msra.mxu0 0.0
      %1384 = vmatprep.subr.mxu0 0.0
      %1385 = vmatpush1.msra.mxu0 0.0
      %1386 = vmatprep.subr.mxu0 0.0
      %1387 = vmatpush1.msra.mxu0 0.0
      %1388 = vmatprep.subr.mxu0 0.0
      %1389 = vmatpush1.msra.mxu0 0.0
      %1390 = vmatprep.subr.mxu0 0.0
      %1391 = vmatpush1.msra.mxu0 0.0
      %1392 = vmatprep.subr.mxu0 0.0
      %1393 = vmatpush1.msra.mxu0 0.0
      %1394 = vmatprep.mubr.f32.mxu0 0.0
      %1395 = vmatmul.mubr.f32.gmra.mrb[0].mxu0 %v447
      %v1396 = vpop.f32.mrb[0].mxu0
      %v1397 = vadd.f32 %v1327, %v1396
      %v1398 = vpop.f32.mrb[0].mxu0
      %1399 = vdwg.mxu0
      %v1401 = vsel %vm519, %v1397, 0
      %1403 = vmatprep.subr.mxu0 0.0
      %1404 = vmatpush1.msra.mxu0 %v215
      %1405 = vmatprep.subr.mxu0 0.0
      %1406 = vmatpush1.msra.mxu0 %v216
      %1407 = vmatprep.subr.mxu0 0.0
      %1408 = vmatpush1.msra.mxu0 0.0
      %1409 = vmatprep.subr.mxu0 0.0
      %1410 = vmatpush1.msra.mxu0 0.0
      %1411 = vmatprep.subr.mxu0 0.0
      %1412 = vmatpush1.msra.mxu0 0.0
      %1413 = vmatprep.subr.mxu0 0.0
      %1414 = vmatpush1.msra.mxu0 0.0
      %1415 = vmatprep.subr.mxu0 0.0
      %1416 = vmatpush1.msra.mxu0 0.0
      %1417 = vmatprep.subr.mxu0 0.0
      %1418 = vmatpush1.msra.mxu0 0.0
      %1419 = vmatprep.subr.mxu0 0.0
      %1420 = vmatpush1.msra.mxu0 0.0
      %1421 = vmatprep.subr.mxu0 0.0
      %1422 = vmatpush1.msra.mxu0 0.0
      %1423 = vmatprep.subr.mxu0 0.0
      %1424 = vmatpush1.msra.mxu0 0.0
      %1425 = vmatprep.subr.mxu0 0.0
      %1426 = vmatpush1.msra.mxu0 0.0
      %1427 = vmatprep.subr.mxu0 0.0
      %1428 = vmatpush1.msra.mxu0 0.0
      %1429 = vmatprep.subr.mxu0 0.0
      %1430 = vmatpush1.msra.mxu0 0.0
      %1431 = vmatprep.subr.mxu0 0.0
      %1432 = vmatpush1.msra.mxu0 0.0
      %1433 = vmatprep.subr.mxu0 0.0
      %1434 = vmatpush1.msra.mxu0 0.0
      %1435 = vmatprep.subr.mxu0 0.0
      %1436 = vmatpush1.msra.mxu0 0.0
      %1437 = vmatprep.subr.mxu0 0.0
      %1438 = vmatpush1.msra.mxu0 0.0
      %1439 = vmatprep.subr.mxu0 0.0
      %1440 = vmatpush1.msra.mxu0 0.0
      %1441 = vmatprep.subr.mxu0 0.0
      %1442 = vmatpush1.msra.mxu0 0.0
      %1443 = vmatprep.subr.mxu0 0.0
      %1444 = vmatpush1.msra.mxu0 0.0
      %1445 = vmatprep.subr.mxu0 0.0
      %1446 = vmatpush1.msra.mxu0 0.0
      %1447 = vmatprep.subr.mxu0 0.0
      %1448 = vmatpush1.msra.mxu0 0.0
      %1449 = vmatprep.subr.mxu0 0.0
      %1450 = vmatpush1.msra.mxu0 0.0
      %1451 = vmatprep.subr.mxu0 0.0
      %1452 = vmatpush1.msra.mxu0 0.0
      %1453 = vmatprep.subr.mxu0 0.0
      %1454 = vmatpush1.msra.mxu0 0.0
      %1455 = vmatprep.subr.mxu0 0.0
      %1456 = vmatpush1.msra.mxu0 0.0
      %1457 = vmatprep.subr.mxu0 0.0
      %1458 = vmatpush1.msra.mxu0 0.0
      %1459 = vmatprep.subr.mxu0 0.0
      %1460 = vmatpush1.msra.mxu0 0.0
      %1461 = vmatprep.subr.mxu0 0.0
      %1462 = vmatpush1.msra.mxu0 0.0
      %1463 = vmatprep.subr.mxu0 0.0
      %1464 = vmatpush1.msra.mxu0 0.0
      %1465 = vmatprep.subr.mxu0 0.0
      %1466 = vmatpush1.msra.mxu0 0.0
      %1467 = vmatprep.mubr.f32.mxu0 0.0
      %1468 = vmatmul.mubr.f32.gmra.mrb[0].mxu0 %v1401
      %v1469 = vpop.f32.mrb[0].mxu0
      %v1470 = vadd.f32 0.0, %v1469
      %v1471 = vpop.f32.mrb[0].mxu0
      %1472 = vdwg.mxu0
      %v1474 = vsel %vm519, %v1257, 0
      %1476 = vmatprep.subr.mxu0 0.0
      %1477 = vmatpush1.msra.mxu0 %v212
      %1478 = vmatprep.subr.mxu0 0.0
      %1479 = vmatpush1.msra.mxu0 %v213
      %1480 = vmatprep.subr.mxu0 0.0
      %1481 = vmatpush1.msra.mxu0 0.0
      %1482 = vmatprep.subr.mxu0 0.0
      %1483 = vmatpush1.msra.mxu0 0.0
      %1484 = vmatprep.subr.mxu0 0.0
      %1485 = vmatpush1.msra.mxu0 0.0
      %1486 = vmatprep.subr.mxu0 0.0
      %1487 = vmatpush1.msra.mxu0 0.0
      %1488 = vmatprep.subr.mxu0 0.0
      %1489 = vmatpush1.msra.mxu0 0.0
      %1490 = vmatprep.subr.mxu0 0.0
      %1491 = vmatpush1.msra.mxu0 0.0
      %1492 = vmatprep.subr.mxu0 0.0
      %1493 = vmatpush1.msra.mxu0 0.0
      %1494 = vmatprep.subr.mxu0 0.0
      %1495 = vmatpush1.msra.mxu0 0.0
      %1496 = vmatprep.subr.mxu0 0.0
      %1497 = vmatpush1.msra.mxu0 0.0
      %1498 = vmatprep.subr.mxu0 0.0
      %1499 = vmatpush1.msra.mxu0 0.0
      %1500 = vmatprep.subr.mxu0 0.0
      %1501 = vmatpush1.msra.mxu0 0.0
      %1502 = vmatprep.subr.mxu0 0.0
      %1503 = vmatpush1.msra.mxu0 0.0
      %1504 = vmatprep.subr.mxu0 0.0
      %1505 = vmatpush1.msra.mxu0 0.0
      %1506 = vmatprep.subr.mxu0 0.0
      %1507 = vmatpush1.msra.mxu0 0.0
      %1508 = vmatprep.subr.mxu0 0.0
      %1509 = vmatpush1.msra.mxu0 0.0
      %1510 = vmatprep.subr.mxu0 0.0
      %1511 = vmatpush1.msra.mxu0 0.0
      %1512 = vmatprep.subr.mxu0 0.0
      %1513 = vmatpush1.msra.mxu0 0.0
      %1514 = vmatprep.subr.mxu0 0.0
      %1515 = vmatpush1.msra.mxu0 0.0
      %1516 = vmatprep.subr.mxu0 0.0
      %1517 = vmatpush1.msra.mxu0 0.0
      %1518 = vmatprep.subr.mxu0 0.0
      %1519 = vmatpush1.msra.mxu0 0.0
      %1520 = vmatprep.subr.mxu0 0.0
      %1521 = vmatpush1.msra.mxu0 0.0
      %1522 = vmatprep.subr.mxu0 0.0
      %1523 = vmatpush1.msra.mxu0 0.0
      %1524 = vmatprep.subr.mxu0 0.0
      %1525 = vmatpush1.msra.mxu0 0.0
      %1526 = vmatprep.subr.mxu0 0.0
      %1527 = vmatpush1.msra.mxu0 0.0
      %1528 = vmatprep.subr.mxu0 0.0
      %1529 = vmatpush1.msra.mxu0 0.0
      %1530 = vmatprep.subr.mxu0 0.0
      %1531 = vmatpush1.msra.mxu0 0.0
      %1532 = vmatprep.subr.mxu0 0.0
      %1533 = vmatpush1.msra.mxu0 0.0
      %1534 = vmatprep.subr.mxu0 0.0
      %1535 = vmatpush1.msra.mxu0 0.0
      %1536 = vmatprep.subr.mxu0 0.0
      %1537 = vmatpush1.msra.mxu0 0.0
      %1538 = vmatprep.subr.mxu0 0.0
      %1539 = vmatpush1.msra.mxu0 0.0
      %1540 = vmatprep.mubr.f32.mxu0 0.0
      %1541 = vmatmul.mubr.f32.gmra.mrb[0].mxu0 %v1474
      %v1542 = vpop.f32.mrb[0].mxu0
      %v1543 = vadd.f32 %v1470, %v1542
      %v1544 = vpop.f32.mrb[0].mxu0
      %1545 = vdwg.mxu0
      %1547 = vrot.lane.b32.xlu0 %v1543, 16
      %v1548 = vpop.permute.xlu0 %1547
      %vm1550 = vcmask 195712
      %1551 = vst.msk [vmem:[%s204] sm:$0xff] %vm1550, %v1548
      %v1552 = vld [vmem:[%s196] sm:$0xf]
      %1554 = vrot.lane.b32.xlu0 %v1552, 16
      %v1555 = vpop.permute.xlu0 %1554
      %v1556 = vsel %vm225, %v1555, 0
      %1558 = vmatprep.subr.mxu0 0.0
      %1559 = vmatpush1.msra.mxu0 %v1556
      %1560 = vmatprep.subr.mxu0 0.0
      %1561 = vmatpush1.msra.mxu0 0.0
      %1562 = vmatprep.subr.mxu0 0.0
      %1563 = vmatpush1.msra.mxu0 0.0
      %1564 = vmatprep.subr.mxu0 0.0
      %1565 = vmatpush1.msra.mxu0 0.0
      %1566 = vmatprep.subr.mxu0 0.0
      %1567 = vmatpush1.msra.mxu0 0.0
      %1568 = vmatprep.subr.mxu0 0.0
      %1569 = vmatpush1.msra.mxu0 0.0
      %1570 = vmatprep.subr.mxu0 0.0
      %1571 = vmatpush1.msra.mxu0 0.0
      %1572 = vmatprep.subr.mxu0 0.0
      %1573 = vmatpush1.msra.mxu0 0.0
      %1574 = vmatprep.subr.mxu0 0.0
      %1575 = vmatpush1.msra.mxu0 0.0
      %1576 = vmatprep.subr.mxu0 0.0
      %1577 = vmatpush1.msra.mxu0 0.0
      %1578 = vmatprep.subr.mxu0 0.0
      %1579 = vmatpush1.msra.mxu0 0.0
      %1580 = vmatprep.subr.mxu0 0.0
      %1581 = vmatpush1.msra.mxu0 0.0
      %1582 = vmatprep.subr.mxu0 0.0
      %1583 = vmatpush1.msra.mxu0 0.0
      %1584 = vmatprep.subr.mxu0 0.0
      %1585 = vmatpush1.msra.mxu0 0.0
      %1586 = vmatprep.subr.mxu0 0.0
      %1587 = vmatpush1.msra.mxu0 0.0
      %1588 = vmatprep.subr.mxu0 0.0
      %1589 = vmatpush1.msra.mxu0 0.0
      %1590 = vmatprep.subr.mxu0 0.0
      %1591 = vmatpush1.msra.mxu0 0.0
      %1592 = vmatprep.subr.mxu0 0.0
      %1593 = vmatpush1.msra.mxu0 0.0
      %1594 = vmatprep.subr.mxu0 0.0
      %1595 = vmatpush1.msra.mxu0 0.0
      %1596 = vmatprep.subr.mxu0 0.0
      %1597 = vmatpush1.msra.mxu0 0.0
      %1598 = vmatprep.subr.mxu0 0.0
      %1599 = vmatpush1.msra.mxu0 0.0
      %1600 = vmatprep.subr.mxu0 0.0
      %1601 = vmatpush1.msra.mxu0 0.0
      %1602 = vmatprep.subr.mxu0 0.0
      %1603 = vmatpush1.msra.mxu0 0.0
      %1604 = vmatprep.subr.mxu0 0.0
      %1605 = vmatpush1.msra.mxu0 0.0
      %1606 = vmatprep.subr.mxu0 0.0
      %1607 = vmatpush1.msra.mxu0 0.0
      %1608 = vmatprep.subr.mxu0 0.0
      %1609 = vmatpush1.msra.mxu0 0.0
      %1610 = vmatprep.subr.mxu0 0.0
      %1611 = vmatpush1.msra.mxu0 0.0
      %1612 = vmatprep.subr.mxu0 0.0
      %1613 = vmatpush1.msra.mxu0 0.0
      %1614 = vmatprep.subr.mxu0 0.0
      %1615 = vmatpush1.msra.mxu0 0.0
      %1616 = vmatprep.subr.mxu0 0.0
      %1617 = vmatpush1.msra.mxu0 0.0
      %1618 = vmatprep.subr.mxu0 0.0
      %1619 = vmatpush1.msra.mxu0 0.0
      %1620 = vmatprep.subr.mxu0 0.0
      %1621 = vmatpush1.msra.mxu0 0.0
      %1622 = vmatprep.mubr.f32.mxu0 0.0
      %1623 = vmatmul.mubr.f32.gmra.mrb[0].mxu0 %v223
      %v1624 = vpop.f32.mrb[0].mxu0
      %v1625 = vadd.f32 0.0, %v1624
      %v1626 = vpop.f32.mrb[0].mxu0
      %1627 = vdwg.mxu0
      %1628 = vrot.lane.b32.xlu0 %v1552, 32
      %v1629 = vpop.permute.xlu0 %1628
      %v1630 = vsel %vm225, %v1629, 0
      %1632 = vmatprep.subr.mxu0 0.0
      %1633 = vmatpush1.msra.mxu0 %v1630
      %1634 = vmatprep.subr.mxu0 0.0
      %1635 = vmatpush1.msra.mxu0 0.0
      %1636 = vmatprep.subr.mxu0 0.0
      %1637 = vmatpush1.msra.mxu0 0.0
      %1638 = vmatprep.subr.mxu0 0.0
      %1639 = vmatpush1.msra.mxu0 0.0
      %1640 = vmatprep.subr.mxu0 0.0
      %1641 = vmatpush1.msra.mxu0 0.0
      %1642 = vmatprep.subr.mxu0 0.0
      %1643 = vmatpush1.msra.mxu0 0.0
      %1644 = vmatprep.subr.mxu0 0.0
      %1645 = vmatpush1.msra.mxu0 0.0
      %1646 = vmatprep.subr.mxu0 0.0
      %1647 = vmatpush1.msra.mxu0 0.0
      %1648 = vmatprep.subr.mxu0 0.0
      %1649 = vmatpush1.msra.mxu0 0.0
      %1650 = vmatprep.subr.mxu0 0.0
      %1651 = vmatpush1.msra.mxu0 0.0
      %1652 = vmatprep.subr.mxu0 0.0
      %1653 = vmatpush1.msra.mxu0 0.0
      %1654 = vmatprep.subr.mxu0 0.0
      %1655 = vmatpush1.msra.mxu0 0.0
      %1656 = vmatprep.subr.mxu0 0.0
      %1657 = vmatpush1.msra.mxu0 0.0
      %1658 = vmatprep.subr.mxu0 0.0
      %1659 = vmatpush1.msra.mxu0 0.0
      %1660 = vmatprep.subr.mxu0 0.0
      %1661 = vmatpush1.msra.mxu0 0.0
      %1662 = vmatprep.subr.mxu0 0.0
      %1663 = vmatpush1.msra.mxu0 0.0
      %1664 = vmatprep.subr.mxu0 0.0
      %1665 = vmatpush1.msra.mxu0 0.0
      %1666 = vmatprep.subr.mxu0 0.0
      %1667 = vmatpush1.msra.mxu0 0.0
      %1668 = vmatprep.subr.mxu0 0.0
      %1669 = vmatpush1.msra.mxu0 0.0
      %1670 = vmatprep.subr.mxu0 0.0
      %1671 = vmatpush1.msra.mxu0 0.0
      %1672 = vmatprep.subr.mxu0 0.0
      %1673 = vmatpush1.msra.mxu0 0.0
      %1674 = vmatprep.subr.mxu0 0.0
      %1675 = vmatpush1.msra.mxu0 0.0
      %1676 = vmatprep.subr.mxu0 0.0
      %1677 = vmatpush1.msra.mxu0 0.0
      %1678 = vmatprep.subr.mxu0 0.0
      %1679 = vmatpush1.msra.mxu0 0.0
      %1680 = vmatprep.subr.mxu0 0.0
      %1681 = vmatpush1.msra.mxu0 0.0
      %1682 = vmatprep.subr.mxu0 0.0
      %1683 = vmatpush1.msra.mxu0 0.0
      %1684 = vmatprep.subr.mxu0 0.0
      %1685 = vmatpush1.msra.mxu0 0.0
      %1686 = vmatprep.subr.mxu0 0.0
      %1687 = vmatpush1.msra.mxu0 0.0
      %1688 = vmatprep.subr.mxu0 0.0
      %1689 = vmatpush1.msra.mxu0 0.0
      %1690 = vmatprep.subr.mxu0 0.0
      %1691 = vmatpush1.msra.mxu0 0.0
      %1692 = vmatprep.subr.mxu0 0.0
      %1693 = vmatpush1.msra.mxu0 0.0
      %1694 = vmatprep.subr.mxu0 0.0
      %1695 = vmatpush1.msra.mxu0 0.0
      %1696 = vmatprep.mubr.f32.mxu0 0.0
      %1697 = vmatmul.mubr.f32.gmra.mrb[0].mxu0 %v299
      %v1698 = vpop.f32.mrb[0].mxu0
      %v1699 = vadd.f32 %v1625, %v1698
      %v1700 = vpop.f32.mrb[0].mxu0
      %1701 = vdwg.mxu0
      %1702 = vmatprep.subr.mxu0 0.0
      %1703 = vmatpush1.msra.mxu0 %v1556
      %1704 = vmatprep.subr.mxu0 0.0
      %1705 = vmatpush1.msra.mxu0 0.0
      %1706 = vmatprep.subr.mxu0 0.0
      %1707 = vmatpush1.msra.mxu0 0.0
      %1708 = vmatprep.subr.mxu0 0.0
      %1709 = vmatpush1.msra.mxu0 0.0
      %1710 = vmatprep.subr.mxu0 0.0
      %1711 = vmatpush1.msra.mxu0 0.0
      %1712 = vmatprep.subr.mxu0 0.0
      %1713 = vmatpush1.msra.mxu0 0.0
      %1714 = vmatprep.subr.mxu0 0.0
      %1715 = vmatpush1.msra.mxu0 0.0
      %1716 = vmatprep.subr.mxu0 0.0
      %1717 = vmatpush1.msra.mxu0 0.0
      %1718 = vmatprep.subr.mxu0 0.0
      %1719 = vmatpush1.msra.mxu0 0.0
      %1720 = vmatprep.subr.mxu0 0.0
      %1721 = vmatpush1.msra.mxu0 0.0
      %1722 = vmatprep.subr.mxu0 0.0
      %1723 = vmatpush1.msra.mxu0 0.0
      %1724 = vmatprep.subr.mxu0 0.0
      %1725 = vmatpush1.msra.mxu0 0.0
      %1726 = vmatprep.subr.mxu0 0.0
      %1727 = vmatpush1.msra.mxu0 0.0
      %1728 = vmatprep.subr.mxu0 0.0
      %1729 = vmatpush1.msra.mxu0 0.0
      %1730 = vmatprep.subr.mxu0 0.0
      %1731 = vmatpush1.msra.mxu0 0.0
      %1732 = vmatprep.subr.mxu0 0.0
      %1733 = vmatpush1.msra.mxu0 0.0
      %1734 = vmatprep.subr.mxu0 0.0
      %1735 = vmatpush1.msra.mxu0 0.0
      %1736 = vmatprep.subr.mxu0 0.0
      %1737 = vmatpush1.msra.mxu0 0.0
      %1738 = vmatprep.subr.mxu0 0.0
      %1739 = vmatpush1.msra.mxu0 0.0
      %1740 = vmatprep.subr.mxu0 0.0
      %1741 = vmatpush1.msra.mxu0 0.0
      %1742 = vmatprep.subr.mxu0 0.0
      %1743 = vmatpush1.msra.mxu0 0.0
      %1744 = vmatprep.subr.mxu0 0.0
      %1745 = vmatpush1.msra.mxu0 0.0
      %1746 = vmatprep.subr.mxu0 0.0
      %1747 = vmatpush1.msra.mxu0 0.0
      %1748 = vmatprep.subr.mxu0 0.0
      %1749 = vmatpush1.msra.mxu0 0.0
      %1750 = vmatprep.subr.mxu0 0.0
      %1751 = vmatpush1.msra.mxu0 0.0
      %1752 = vmatprep.subr.mxu0 0.0
      %1753 = vmatpush1.msra.mxu0 0.0
      %1754 = vmatprep.subr.mxu0 0.0
      %1755 = vmatpush1.msra.mxu0 0.0
      %1756 = vmatprep.subr.mxu0 0.0
      %1757 = vmatpush1.msra.mxu0 0.0
      %1758 = vmatprep.subr.mxu0 0.0
      %1759 = vmatpush1.msra.mxu0 0.0
      %1760 = vmatprep.subr.mxu0 0.0
      %1761 = vmatpush1.msra.mxu0 0.0
      %1762 = vmatprep.subr.mxu0 0.0
      %1763 = vmatpush1.msra.mxu0 0.0
      %1764 = vmatprep.subr.mxu0 0.0
      %1765 = vmatpush1.msra.mxu0 0.0
      %1766 = vmatprep.mubr.f32.mxu0 0.0
      %1767 = vmatmul.mubr.f32.gmra.mrb[0].mxu0 %v374
      %v1768 = vpop.f32.mrb[0].mxu0
      %v1769 = vadd.f32 0.0, %v1768
      %v1770 = vpop.f32.mrb[0].mxu0
      %1771 = vdwg.mxu0
      %1772 = vmatprep.subr.mxu0 0.0
      %1773 = vmatpush1.msra.mxu0 %v1630
      %1774 = vmatprep.subr.mxu0 0.0
      %1775 = vmatpush1.msra.mxu0 0.0
      %1776 = vmatprep.subr.mxu0 0.0
      %1777 = vmatpush1.msra.mxu0 0.0
      %1778 = vmatprep.subr.mxu0 0.0
      %1779 = vmatpush1.msra.mxu0 0.0
      %1780 = vmatprep.subr.mxu0 0.0
      %1781 = vmatpush1.msra.mxu0 0.0
      %1782 = vmatprep.subr.mxu0 0.0
      %1783 = vmatpush1.msra.mxu0 0.0
      %1784 = vmatprep.subr.mxu0 0.0
      %1785 = vmatpush1.msra.mxu0 0.0
      %1786 = vmatprep.subr.mxu0 0.0
      %1787 = vmatpush1.msra.mxu0 0.0
      %1788 = vmatprep.subr.mxu0 0.0
      %1789 = vmatpush1.msra.mxu0 0.0
      %1790 = vmatprep.subr.mxu0 0.0
      %1791 = vmatpush1.msra.mxu0 0.0
      %1792 = vmatprep.subr.mxu0 0.0
      %1793 = vmatpush1.msra.mxu0 0.0
      %1794 = vmatprep.subr.mxu0 0.0
      %1795 = vmatpush1.msra.mxu0 0.0
      %1796 = vmatprep.subr.mxu0 0.0
      %1797 = vmatpush1.msra.mxu0 0.0
      %1798 = vmatprep.subr.mxu0 0.0
      %1799 = vmatpush1.msra.mxu0 0.0
      %1800 = vmatprep.subr.mxu0 0.0
      %1801 = vmatpush1.msra.mxu0 0.0
      %1802 = vmatprep.subr.mxu0 0.0
      %1803 = vmatpush1.msra.mxu0 0.0
      %1804 = vmatprep.subr.mxu0 0.0
      %1805 = vmatpush1.msra.mxu0 0.0
      %1806 = vmatprep.subr.mxu0 0.0
      %1807 = vmatpush1.msra.mxu0 0.0
      %1808 = vmatprep.subr.mxu0 0.0
      %1809 = vmatpush1.msra.mxu0 0.0
      %1810 = vmatprep.subr.mxu0 0.0
      %1811 = vmatpush1.msra.mxu0 0.0
      %1812 = vmatprep.subr.mxu0 0.0
      %1813 = vmatpush1.msra.mxu0 0.0
      %1814 = vmatprep.subr.mxu0 0.0
      %1815 = vmatpush1.msra.mxu0 0.0
      %1816 = vmatprep.subr.mxu0 0.0
      %1817 = vmatpush1.msra.mxu0 0.0
      %1818 = vmatprep.subr.mxu0 0.0
      %1819 = vmatpush1.msra.mxu0 0.0
      %1820 = vmatprep.subr.mxu0 0.0
      %1821 = vmatpush1.msra.mxu0 0.0
      %1822 = vmatprep.subr.mxu0 0.0
      %1823 = vmatpush1.msra.mxu0 0.0
      %1824 = vmatprep.subr.mxu0 0.0
      %1825 = vmatpush1.msra.mxu0 0.0
      %1826 = vmatprep.subr.mxu0 0.0
      %1827 = vmatpush1.msra.mxu0 0.0
      %1828 = vmatprep.subr.mxu0 0.0
      %1829 = vmatpush1.msra.mxu0 0.0
      %1830 = vmatprep.subr.mxu0 0.0
      %1831 = vmatpush1.msra.mxu0 0.0
      %1832 = vmatprep.subr.mxu0 0.0
      %1833 = vmatpush1.msra.mxu0 0.0
      %1834 = vmatprep.subr.mxu0 0.0
      %1835 = vmatpush1.msra.mxu0 0.0
      %1836 = vmatprep.mubr.f32.mxu0 0.0
      %1837 = vmatmul.mubr.f32.gmra.mrb[0].mxu0 %v447
      %v1838 = vpop.f32.mrb[0].mxu0
      %v1839 = vadd.f32 %v1769, %v1838
      %v1840 = vpop.f32.mrb[0].mxu0
      %1841 = vdwg.mxu0
      %v1843 = vsel %vm519, %v1839, 0
      %1845 = vmatprep.subr.mxu0 0.0
      %1846 = vmatpush1.msra.mxu0 %v215
      %1847 = vmatprep.subr.mxu0 0.0
      %1848 = vmatpush1.msra.mxu0 %v216
      %1849 = vmatprep.subr.mxu0 0.0
      %1850 = vmatpush1.msra.mxu0 0.0
      %1851 = vmatprep.subr.mxu0 0.0
      %1852 = vmatpush1.msra.mxu0 0.0
      %1853 = vmatprep.subr.mxu0 0.0
      %1854 = vmatpush1.msra.mxu0 0.0
      %1855 = vmatprep.subr.mxu0 0.0
      %1856 = vmatpush1.msra.mxu0 0.0
      %1857 = vmatprep.subr.mxu0 0.0
      %1858 = vmatpush1.msra.mxu0 0.0
      %1859 = vmatprep.subr.mxu0 0.0
      %1860 = vmatpush1.msra.mxu0 0.0
      %1861 = vmatprep.subr.mxu0 0.0
      %1862 = vmatpush1.msra.mxu0 0.0
      %1863 = vmatprep.subr.mxu0 0.0
      %1864 = vmatpush1.msra.mxu0 0.0
      %1865 = vmatprep.subr.mxu0 0.0
      %1866 = vmatpush1.msra.mxu0 0.0
      %1867 = vmatprep.subr.mxu0 0.0
      %1868 = vmatpush1.msra.mxu0 0.0
      %1869 = vmatprep.subr.mxu0 0.0
      %1870 = vmatpush1.msra.mxu0 0.0
      %1871 = vmatprep.subr.mxu0 0.0
      %1872 = vmatpush1.msra.mxu0 0.0
      %1873 = vmatprep.subr.mxu0 0.0
      %1874 = vmatpush1.msra.mxu0 0.0
      %1875 = vmatprep.subr.mxu0 0.0
      %1876 = vmatpush1.msra.mxu0 0.0
      %1877 = vmatprep.subr.mxu0 0.0
      %1878 = vmatpush1.msra.mxu0 0.0
      %1879 = vmatprep.subr.mxu0 0.0
      %1880 = vmatpush1.msra.mxu0 0.0
      %1881 = vmatprep.subr.mxu0 0.0
      %1882 = vmatpush1.msra.mxu0 0.0
      %1883 = vmatprep.subr.mxu0 0.0
      %1884 = vmatpush1.msra.mxu0 0.0
      %1885 = vmatprep.subr.mxu0 0.0
      %1886 = vmatpush1.msra.mxu0 0.0
      %1887 = vmatprep.subr.mxu0 0.0
      %1888 = vmatpush1.msra.mxu0 0.0
      %1889 = vmatprep.subr.mxu0 0.0
      %1890 = vmatpush1.msra.mxu0 0.0
      %1891 = vmatprep.subr.mxu0 0.0
      %1892 = vmatpush1.msra.mxu0 0.0
      %1893 = vmatprep.subr.mxu0 0.0
      %1894 = vmatpush1.msra.mxu0 0.0
      %1895 = vmatprep.subr.mxu0 0.0
      %1896 = vmatpush1.msra.mxu0 0.0
      %1897 = vmatprep.subr.mxu0 0.0
      %1898 = vmatpush1.msra.mxu0 0.0
      %1899 = vmatprep.subr.mxu0 0.0
      %1900 = vmatpush1.msra.mxu0 0.0
      %1901 = vmatprep.subr.mxu0 0.0
      %1902 = vmatpush1.msra.mxu0 0.0
      %1903 = vmatprep.subr.mxu0 0.0
      %1904 = vmatpush1.msra.mxu0 0.0
      %1905 = vmatprep.subr.mxu0 0.0
      %1906 = vmatpush1.msra.mxu0 0.0
      %1907 = vmatprep.subr.mxu0 0.0
      %1908 = vmatpush1.msra.mxu0 0.0
      %1909 = vmatprep.mubr.f32.mxu0 0.0
      %1910 = vmatmul.mubr.f32.gmra.mrb[0].mxu0 %v1843
      %v1911 = vpop.f32.mrb[0].mxu0
      %v1912 = vadd.f32 0.0, %v1911
      %v1913 = vpop.f32.mrb[0].mxu0
      %1914 = vdwg.mxu0
      %v1916 = vsel %vm519, %v1699, 0
      %1918 = vmatprep.subr.mxu0 0.0
      %1919 = vmatpush1.msra.mxu0 %v212
      %1920 = vmatprep.subr.mxu0 0.0
      %1921 = vmatpush1.msra.mxu0 %v213
      %1922 = vmatprep.subr.mxu0 0.0
      %1923 = vmatpush1.msra.mxu0 0.0
      %1924 = vmatprep.subr.mxu0 0.0
      %1925 = vmatpush1.msra.mxu0 0.0
      %1926 = vmatprep.subr.mxu0 0.0
      %1927 = vmatpush1.msra.mxu0 0.0
      %1928 = vmatprep.subr.mxu0 0.0
      %1929 = vmatpush1.msra.mxu0 0.0
      %1930 = vmatprep.subr.mxu0 0.0
      %1931 = vmatpush1.msra.mxu0 0.0
      %1932 = vmatprep.subr.mxu0 0.0
      %1933 = vmatpush1.msra.mxu0 0.0
      %1934 = vmatprep.subr.mxu0 0.0
      %1935 = vmatpush1.msra.mxu0 0.0
      %1936 = vmatprep.subr.mxu0 0.0
      %1937 = vmatpush1.msra.mxu0 0.0
      %1938 = vmatprep.subr.mxu0 0.0
      %1939 = vmatpush1.msra.mxu0 0.0
      %1940 = vmatprep.subr.mxu0 0.0
      %1941 = vmatpush1.msra.mxu0 0.0
      %1942 = vmatprep.subr.mxu0 0.0
      %1943 = vmatpush1.msra.mxu0 0.0
      %1944 = vmatprep.subr.mxu0 0.0
      %1945 = vmatpush1.msra.mxu0 0.0
      %1946 = vmatprep.subr.mxu0 0.0
      %1947 = vmatpush1.msra.mxu0 0.0
      %1948 = vmatprep.subr.mxu0 0.0
      %1949 = vmatpush1.msra.mxu0 0.0
      %1950 = vmatprep.subr.mxu0 0.0
      %1951 = vmatpush1.msra.mxu0 0.0
      %1952 = vmatprep.subr.mxu0 0.0
      %1953 = vmatpush1.msra.mxu0 0.0
      %1954 = vmatprep.subr.mxu0 0.0
      %1955 = vmatpush1.msra.mxu0 0.0
      %1956 = vmatprep.subr.mxu0 0.0
      %1957 = vmatpush1.msra.mxu0 0.0
      %1958 = vmatprep.subr.mxu0 0.0
      %1959 = vmatpush1.msra.mxu0 0.0
      %1960 = vmatprep.subr.mxu0 0.0
      %1961 = vmatpush1.msra.mxu0 0.0
      %1962 = vmatprep.subr.mxu0 0.0
      %1963 = vmatpush1.msra.mxu0 0.0
      %1964 = vmatprep.subr.mxu0 0.0
      %1965 = vmatpush1.msra.mxu0 0.0
      %1966 = vmatprep.subr.mxu0 0.0
      %1967 = vmatpush1.msra.mxu0 0.0
      %1968 = vmatprep.subr.mxu0 0.0
      %1969 = vmatpush1.msra.mxu0 0.0
      %1970 = vmatprep.subr.mxu0 0.0
      %1971 = vmatpush1.msra.mxu0 0.0
      %1972 = vmatprep.subr.mxu0 0.0
      %1973 = vmatpush1.msra.mxu0 0.0
      %1974 = vmatprep.subr.mxu0 0.0
      %1975 = vmatpush1.msra.mxu0 0.0
      %1976 = vmatprep.subr.mxu0 0.0
      %1977 = vmatpush1.msra.mxu0 0.0
      %1978 = vmatprep.subr.mxu0 0.0
      %1979 = vmatpush1.msra.mxu0 0.0
      %1980 = vmatprep.subr.mxu0 0.0
      %1981 = vmatpush1.msra.mxu0 0.0
      %1982 = vmatprep.mubr.f32.mxu0 0.0
      %1983 = vmatmul.mubr.f32.gmra.mrb[0].mxu0 %v1916
      %v1984 = vpop.f32.mrb[0].mxu0
      %v1985 = vadd.f32 %v1912, %v1984
      %v1986 = vpop.f32.mrb[0].mxu0
      %1987 = vdwg.mxu0
      %1989 = vrot.lane.b32.xlu0 %v1985, 24
      %v1990 = vpop.permute.xlu0 %1989
      %vm1992 = vcmask 261312
      %1993 = vst.msk [vmem:[%s204] sm:$0xff] %vm1992, %v1990
      %v1994 = vld [vmem:[%s196 + $0x4] sm:$0xf]
      %1996 = vrot.lane.b32.xlu0 %v1994, 112
      %v1997 = vpop.permute.xlu0 %1996
      %v1998 = vsel %vm225, %v1997, 0
      %2000 = vmatprep.subr.mxu0 0.0
      %2001 = vmatpush1.msra.mxu0 %v1998
      %2002 = vmatprep.subr.mxu0 0.0
      %2003 = vmatpush1.msra.mxu0 0.0
      %2004 = vmatprep.subr.mxu0 0.0
      %2005 = vmatpush1.msra.mxu0 0.0
      %2006 = vmatprep.subr.mxu0 0.0
      %2007 = vmatpush1.msra.mxu0 0.0
      %2008 = vmatprep.subr.mxu0 0.0
      %2009 = vmatpush1.msra.mxu0 0.0
      %2010 = vmatprep.subr.mxu0 0.0
      %2011 = vmatpush1.msra.mxu0 0.0
      %2012 = vmatprep.subr.mxu0 0.0
      %2013 = vmatpush1.msra.mxu0 0.0
      %2014 = vmatprep.subr.mxu0 0.0
      %2015 = vmatpush1.msra.mxu0 0.0
      %2016 = vmatprep.subr.mxu0 0.0
      %2017 = vmatpush1.msra.mxu0 0.0
      %2018 = vmatprep.subr.mxu0 0.0
      %2019 = vmatpush1.msra.mxu0 0.0
      %2020 = vmatprep.subr.mxu0 0.0
      %2021 = vmatpush1.msra.mxu0 0.0
      %2022 = vmatprep.subr.mxu0 0.0
      %2023 = vmatpush1.msra.mxu0 0.0
      %2024 = vmatprep.subr.mxu0 0.0
      %2025 = vmatpush1.msra.mxu0 0.0
      %2026 = vmatprep.subr.mxu0 0.0
      %2027 = vmatpush1.msra.mxu0 0.0
      %2028 = vmatprep.subr.mxu0 0.0
      %2029 = vmatpush1.msra.mxu0 0.0
      %2030 = vmatprep.subr.mxu0 0.0
      %2031 = vmatpush1.msra.mxu0 0.0
      %2032 = vmatprep.subr.mxu0 0.0
      %2033 = vmatpush1.msra.mxu0 0.0
      %2034 = vmatprep.subr.mxu0 0.0
      %2035 = vmatpush1.msra.mxu0 0.0
      %2036 = vmatprep.subr.mxu0 0.0
      %2037 = vmatpush1.msra.mxu0 0.0
      %2038 = vmatprep.subr.mxu0 0.0
      %2039 = vmatpush1.msra.mxu0 0.0
      %2040 = vmatprep.subr.mxu0 0.0
      %2041 = vmatpush1.msra.mxu0 0.0
      %2042 = vmatprep.subr.mxu0 0.0
      %2043 = vmatpush1.msra.mxu0 0.0
      %2044 = vmatprep.subr.mxu0 0.0
      %2045 = vmatpush1.msra.mxu0 0.0
      %2046 = vmatprep.subr.mxu0 0.0
      %2047 = vmatpush1.msra.mxu0 0.0
      %2048 = vmatprep.subr.mxu0 0.0
      %2049 = vmatpush1.msra.mxu0 0.0
      %2050 = vmatprep.subr.mxu0 0.0
      %2051 = vmatpush1.msra.mxu0 0.0
      %2052 = vmatprep.subr.mxu0 0.0
      %2053 = vmatpush1.msra.mxu0 0.0
      %2054 = vmatprep.subr.mxu0 0.0
      %2055 = vmatpush1.msra.mxu0 0.0
      %2056 = vmatprep.subr.mxu0 0.0
      %2057 = vmatpush1.msra.mxu0 0.0
      %2058 = vmatprep.subr.mxu0 0.0
      %2059 = vmatpush1.msra.mxu0 0.0
      %2060 = vmatprep.subr.mxu0 0.0
      %2061 = vmatpush1.msra.mxu0 0.0
      %2062 = vmatprep.subr.mxu0 0.0
      %2063 = vmatpush1.msra.mxu0 0.0
      %2064 = vmatprep.mubr.f32.mxu0 0.0
      %2065 = vmatmul.mubr.f32.gmra.mrb[0].mxu0 %v223
      %v2066 = vpop.f32.mrb[0].mxu0
      %v2067 = vadd.f32 0.0, %v2066
      %v2068 = vpop.f32.mrb[0].mxu0
      %2069 = vdwg.mxu0
      %v2070 = vsel %vm225, %v1994, 0
      %2072 = vmatprep.subr.mxu0 0.0
      %2073 = vmatpush1.msra.mxu0 %v2070
      %2074 = vmatprep.subr.mxu0 0.0
      %2075 = vmatpush1.msra.mxu0 0.0
      %2076 = vmatprep.subr.mxu0 0.0
      %2077 = vmatpush1.msra.mxu0 0.0
      %2078 = vmatprep.subr.mxu0 0.0
      %2079 = vmatpush1.msra.mxu0 0.0
      %2080 = vmatprep.subr.mxu0 0.0
      %2081 = vmatpush1.msra.mxu0 0.0
      %2082 = vmatprep.subr.mxu0 0.0
      %2083 = vmatpush1.msra.mxu0 0.0
      %2084 = vmatprep.subr.mxu0 0.0
      %2085 = vmatpush1.msra.mxu0 0.0
      %2086 = vmatprep.subr.mxu0 0.0
      %2087 = vmatpush1.msra.mxu0 0.0
      %2088 = vmatprep.subr.mxu0 0.0
      %2089 = vmatpush1.msra.mxu0 0.0
      %2090 = vmatprep.subr.mxu0 0.0
      %2091 = vmatpush1.msra.mxu0 0.0
      %2092 = vmatprep.subr.mxu0 0.0
      %2093 = vmatpush1.msra.mxu0 0.0
      %2094 = vmatprep.subr.mxu0 0.0
      %2095 = vmatpush1.msra.mxu0 0.0
      %2096 = vmatprep.subr.mxu0 0.0
      %2097 = vmatpush1.msra.mxu0 0.0
      %2098 = vmatprep.subr.mxu0 0.0
      %2099 = vmatpush1.msra.mxu0 0.0
      %2100 = vmatprep.subr.mxu0 0.0
      %2101 = vmatpush1.msra.mxu0 0.0
      %2102 = vmatprep.subr.mxu0 0.0
      %2103 = vmatpush1.msra.mxu0 0.0
      %2104 = vmatprep.subr.mxu0 0.0
      %2105 = vmatpush1.msra.mxu0 0.0
      %2106 = vmatprep.subr.mxu0 0.0
      %2107 = vmatpush1.msra.mxu0 0.0
      %2108 = vmatprep.subr.mxu0 0.0
      %2109 = vmatpush1.msra.mxu0 0.0
      %2110 = vmatprep.subr.mxu0 0.0
      %2111 = vmatpush1.msra.mxu0 0.0
      %2112 = vmatprep.subr.mxu0 0.0
      %2113 = vmatpush1.msra.mxu0 0.0
      %2114 = vmatprep.subr.mxu0 0.0
      %2115 = vmatpush1.msra.mxu0 0.0
      %2116 = vmatprep.subr.mxu0 0.0
      %2117 = vmatpush1.msra.mxu0 0.0
      %2118 = vmatprep.subr.mxu0 0.0
      %2119 = vmatpush1.msra.mxu0 0.0
      %2120 = vmatprep.subr.mxu0 0.0
      %2121 = vmatpush1.msra.mxu0 0.0
      %2122 = vmatprep.subr.mxu0 0.0
      %2123 = vmatpush1.msra.mxu0 0.0
      %2124 = vmatprep.subr.mxu0 0.0
      %2125 = vmatpush1.msra.mxu0 0.0
      %2126 = vmatprep.subr.mxu0 0.0
      %2127 = vmatpush1.msra.mxu0 0.0
      %2128 = vmatprep.subr.mxu0 0.0
      %2129 = vmatpush1.msra.mxu0 0.0
      %2130 = vmatprep.subr.mxu0 0.0
      %2131 = vmatpush1.msra.mxu0 0.0
      %2132 = vmatprep.subr.mxu0 0.0
      %2133 = vmatpush1.msra.mxu0 0.0
      %2134 = vmatprep.subr.mxu0 0.0
      %2135 = vmatpush1.msra.mxu0 0.0
      %2136 = vmatprep.mubr.f32.mxu0 0.0
      %2137 = vmatmul.mubr.f32.gmra.mrb[0].mxu0 %v299
      %v2138 = vpop.f32.mrb[0].mxu0
      %v2139 = vadd.f32 %v2067, %v2138
      %v2140 = vpop.f32.mrb[0].mxu0
      %2141 = vdwg.mxu0
      %2142 = vmatprep.subr.mxu0 0.0
      %2143 = vmatpush1.msra.mxu0 %v1998
      %2144 = vmatprep.subr.mxu0 0.0
      %2145 = vmatpush1.msra.mxu0 0.0
      %2146 = vmatprep.subr.mxu0 0.0
      %2147 = vmatpush1.msra.mxu0 0.0
      %2148 = vmatprep.subr.mxu0 0.0
      %2149 = vmatpush1.msra.mxu0 0.0
      %2150 = vmatprep.subr.mxu0 0.0
      %2151 = vmatpush1.msra.mxu0 0.0
      %2152 = vmatprep.subr.mxu0 0.0
      %2153 = vmatpush1.msra.mxu0 0.0
      %2154 = vmatprep.subr.mxu0 0.0
      %2155 = vmatpush1.msra.mxu0 0.0
      %2156 = vmatprep.subr.mxu0 0.0
      %2157 = vmatpush1.msra.mxu0 0.0
      %2158 = vmatprep.subr.mxu0 0.0
      %2159 = vmatpush1.msra.mxu0 0.0
      %2160 = vmatprep.subr.mxu0 0.0
      %2161 = vmatpush1.msra.mxu0 0.0
      %2162 = vmatprep.subr.mxu0 0.0
      %2163 = vmatpush1.msra.mxu0 0.0
      %2164 = vmatprep.subr.mxu0 0.0
      %2165 = vmatpush1.msra.mxu0 0.0
      %2166 = vmatprep.subr.mxu0 0.0
      %2167 = vmatpush1.msra.mxu0 0.0
      %2168 = vmatprep.subr.mxu0 0.0
      %2169 = vmatpush1.msra.mxu0 0.0
      %2170 = vmatprep.subr.mxu0 0.0
      %2171 = vmatpush1.msra.mxu0 0.0
      %2172 = vmatprep.subr.mxu0 0.0
      %2173 = vmatpush1.msra.mxu0 0.0
      %2174 = vmatprep.subr.mxu0 0.0
      %2175 = vmatpush1.msra.mxu0 0.0
      %2176 = vmatprep.subr.mxu0 0.0
      %2177 = vmatpush1.msra.mxu0 0.0
      %2178 = vmatprep.subr.mxu0 0.0
      %2179 = vmatpush1.msra.mxu0 0.0
      %2180 = vmatprep.subr.mxu0 0.0
      %2181 = vmatpush1.msra.mxu0 0.0
      %2182 = vmatprep.subr.mxu0 0.0
      %2183 = vmatpush1.msra.mxu0 0.0
      %2184 = vmatprep.subr.mxu0 0.0
      %2185 = vmatpush1.msra.mxu0 0.0
      %2186 = vmatprep.subr.mxu0 0.0
      %2187 = vmatpush1.msra.mxu0 0.0
      %2188 = vmatprep.subr.mxu0 0.0
      %2189 = vmatpush1.msra.mxu0 0.0
      %2190 = vmatprep.subr.mxu0 0.0
      %2191 = vmatpush1.msra.mxu0 0.0
      %2192 = vmatprep.subr.mxu0 0.0
      %2193 = vmatpush1.msra.mxu0 0.0
      %2194 = vmatprep.subr.mxu0 0.0
      %2195 = vmatpush1.msra.mxu0 0.0
      %2196 = vmatprep.subr.mxu0 0.0
      %2197 = vmatpush1.msra.mxu0 0.0
      %2198 = vmatprep.subr.mxu0 0.0
      %2199 = vmatpush1.msra.mxu0 0.0
      %2200 = vmatprep.subr.mxu0 0.0
      %2201 = vmatpush1.msra.mxu0 0.0
      %2202 = vmatprep.subr.mxu0 0.0
      %2203 = vmatpush1.msra.mxu0 0.0
      %2204 = vmatprep.subr.mxu0 0.0
      %2205 = vmatpush1.msra.mxu0 0.0
      %2206 = vmatprep.mubr.f32.mxu0 0.0
      %2207 = vmatmul.mubr.f32.gmra.mrb[0].mxu0 %v374
      %v2208 = vpop.f32.mrb[0].mxu0
      %v2209 = vadd.f32 0.0, %v2208
      %v2210 = vpop.f32.mrb[0].mxu0
      %2211 = vdwg.mxu0
      %2212 = vmatprep.subr.mxu0 0.0
      %2213 = vmatpush1.msra.mxu0 %v2070
      %2214 = vmatprep.subr.mxu0 0.0
      %2215 = vmatpush1.msra.mxu0 0.0
      %2216 = vmatprep.subr.mxu0 0.0
      %2217 = vmatpush1.msra.mxu0 0.0
      %2218 = vmatprep.subr.mxu0 0.0
      %2219 = vmatpush1.msra.mxu0 0.0
      %2220 = vmatprep.subr.mxu0 0.0
      %2221 = vmatpush1.msra.mxu0 0.0
      %2222 = vmatprep.subr.mxu0 0.0
      %2223 = vmatpush1.msra.mxu0 0.0
      %2224 = vmatprep.subr.mxu0 0.0
      %2225 = vmatpush1.msra.mxu0 0.0
      %2226 = vmatprep.subr.mxu0 0.0
      %2227 = vmatpush1.msra.mxu0 0.0
      %2228 = vmatprep.subr.mxu0 0.0
      %2229 = vmatpush1.msra.mxu0 0.0
      %2230 = vmatprep.subr.mxu0 0.0
      %2231 = vmatpush1.msra.mxu0 0.0
      %2232 = vmatprep.subr.mxu0 0.0
      %2233 = vmatpush1.msra.mxu0 0.0
      %2234 = vmatprep.subr.mxu0 0.0
      %2235 = vmatpush1.msra.mxu0 0.0
      %2236 = vmatprep.subr.mxu0 0.0
      %2237 = vmatpush1.msra.mxu0 0.0
      %2238 = vmatprep.subr.mxu0 0.0
      %2239 = vmatpush1.msra.mxu0 0.0
      %2240 = vmatprep.subr.mxu0 0.0
      %2241 = vmatpush1.msra.mxu0 0.0
      %2242 = vmatprep.subr.mxu0 0.0
      %2243 = vmatpush1.msra.mxu0 0.0
      %2244 = vmatprep.subr.mxu0 0.0
      %2245 = vmatpush1.msra.mxu0 0.0
      %2246 = vmatprep.subr.mxu0 0.0
      %2247 = vmatpush1.msra.mxu0 0.0
      %2248 = vmatprep.subr.mxu0 0.0
      %2249 = vmatpush1.msra.mxu0 0.0
      %2250 = vmatprep.subr.mxu0 0.0
      %2251 = vmatpush1.msra.mxu0 0.0
      %2252 = vmatprep.subr.mxu0 0.0
      %2253 = vmatpush1.msra.mxu0 0.0
      %2254 = vmatprep.subr.mxu0 0.0
      %2255 = vmatpush1.msra.mxu0 0.0
      %2256 = vmatprep.subr.mxu0 0.0
      %2257 = vmatpush1.msra.mxu0 0.0
      %2258 = vmatprep.subr.mxu0 0.0
      %2259 = vmatpush1.msra.mxu0 0.0
      %2260 = vmatprep.subr.mxu0 0.0
      %2261 = vmatpush1.msra.mxu0 0.0
      %2262 = vmatprep.subr.mxu0 0.0
      %2263 = vmatpush1.msra.mxu0 0.0
      %2264 = vmatprep.subr.mxu0 0.0
      %2265 = vmatpush1.msra.mxu0 0.0
      %2266 = vmatprep.subr.mxu0 0.0
      %2267 = vmatpush1.msra.mxu0 0.0
      %2268 = vmatprep.subr.mxu0 0.0
      %2269 = vmatpush1.msra.mxu0 0.0
      %2270 = vmatprep.subr.mxu0 0.0
      %2271 = vmatpush1.msra.mxu0 0.0
      %2272 = vmatprep.subr.mxu0 0.0
      %2273 = vmatpush1.msra.mxu0 0.0
      %2274 = vmatprep.subr.mxu0 0.0
      %2275 = vmatpush1.msra.mxu0 0.0
      %2276 = vmatprep.mubr.f32.mxu0 0.0
      %2277 = vmatmul.mubr.f32.gmra.mrb[0].mxu0 %v447
      %v2278 = vpop.f32.mrb[0].mxu0
      %v2279 = vadd.f32 %v2209, %v2278
      %v2280 = vpop.f32.mrb[0].mxu0
      %2281 = vdwg.mxu0
      %v2283 = vsel %vm519, %v2279, 0
      %2285 = vmatprep.subr.mxu0 0.0
      %2286 = vmatpush1.msra.mxu0 %v215
      %2287 = vmatprep.subr.mxu0 0.0
      %2288 = vmatpush1.msra.mxu0 %v216
      %2289 = vmatprep.subr.mxu0 0.0
      %2290 = vmatpush1.msra.mxu0 0.0
      %2291 = vmatprep.subr.mxu0 0.0
      %2292 = vmatpush1.msra.mxu0 0.0
      %2293 = vmatprep.subr.mxu0 0.0
      %2294 = vmatpush1.msra.mxu0 0.0
      %2295 = vmatprep.subr.mxu0 0.0
      %2296 = vmatpush1.msra.mxu0 0.0
      %2297 = vmatprep.subr.mxu0 0.0
      %2298 = vmatpush1.msra.mxu0 0.0
      %2299 = vmatprep.subr.mxu0 0.0
      %2300 = vmatpush1.msra.mxu0 0.0
      %2301 = vmatprep.subr.mxu0 0.0
      %2302 = vmatpush1.msra.mxu0 0.0
      %2303 = vmatprep.subr.mxu0 0.0
      %2304 = vmatpush1.msra.mxu0 0.0
      %2305 = vmatprep.subr.mxu0 0.0
      %2306 = vmatpush1.msra.mxu0 0.0
      %2307 = vmatprep.subr.mxu0 0.0
      %2308 = vmatpush1.msra.mxu0 0.0
      %2309 = vmatprep.subr.mxu0 0.0
      %2310 = vmatpush1.msra.mxu0 0.0
      %2311 = vmatprep.subr.mxu0 0.0
      %2312 = vmatpush1.msra.mxu0 0.0
      %2313 = vmatprep.subr.mxu0 0.0
      %2314 = vmatpush1.msra.mxu0 0.0
      %2315 = vmatprep.subr.mxu0 0.0
      %2316 = vmatpush1.msra.mxu0 0.0
      %2317 = vmatprep.subr.mxu0 0.0
      %2318 = vmatpush1.msra.mxu0 0.0
      %2319 = vmatprep.subr.mxu0 0.0
      %2320 = vmatpush1.msra.mxu0 0.0
      %2321 = vmatprep.subr.mxu0 0.0
      %2322 = vmatpush1.msra.mxu0 0.0
      %2323 = vmatprep.subr.mxu0 0.0
      %2324 = vmatpush1.msra.mxu0 0.0
      %2325 = vmatprep.subr.mxu0 0.0
      %2326 = vmatpush1.msra.mxu0 0.0
      %2327 = vmatprep.subr.mxu0 0.0
      %2328 = vmatpush1.msra.mxu0 0.0
      %2329 = vmatprep.subr.mxu0 0.0
      %2330 = vmatpush1.msra.mxu0 0.0
      %2331 = vmatprep.subr.mxu0 0.0
      %2332 = vmatpush1.msra.mxu0 0.0
      %2333 = vmatprep.subr.mxu0 0.0
      %2334 = vmatpush1.msra.mxu0 0.0
      %2335 = vmatprep.subr.mxu0 0.0
      %2336 = vmatpush1.msra.mxu0 0.0
      %2337 = vmatprep.subr.mxu0 0.0
      %2338 = vmatpush1.msra.mxu0 0.0
      %2339 = vmatprep.subr.mxu0 0.0
      %2340 = vmatpush1.msra.mxu0 0.0
      %2341 = vmatprep.subr.mxu0 0.0
      %2342 = vmatpush1.msra.mxu0 0.0
      %2343 = vmatprep.subr.mxu0 0.0
      %2344 = vmatpush1.msra.mxu0 0.0
      %2345 = vmatprep.subr.mxu0 0.0
      %2346 = vmatpush1.msra.mxu0 0.0
      %2347 = vmatprep.subr.mxu0 0.0
      %2348 = vmatpush1.msra.mxu0 0.0
      %2349 = vmatprep.mubr.f32.mxu0 0.0
      %2350 = vmatmul.mubr.f32.gmra.mrb[0].mxu0 %v2283
      %v2351 = vpop.f32.mrb[0].mxu0
      %v2352 = vadd.f32 0.0, %v2351
      %v2353 = vpop.f32.mrb[0].mxu0
      %2354 = vdwg.mxu0
      %v2356 = vsel %vm519, %v2139, 0
      %2358 = vmatprep.subr.mxu0 0.0
      %2359 = vmatpush1.msra.mxu0 %v212
      %2360 = vmatprep.subr.mxu0 0.0
      %2361 = vmatpush1.msra.mxu0 %v213
      %2362 = vmatprep.subr.mxu0 0.0
      %2363 = vmatpush1.msra.mxu0 0.0
      %2364 = vmatprep.subr.mxu0 0.0
      %2365 = vmatpush1.msra.mxu0 0.0
      %2366 = vmatprep.subr.mxu0 0.0
      %2367 = vmatpush1.msra.mxu0 0.0
      %2368 = vmatprep.subr.mxu0 0.0
      %2369 = vmatpush1.msra.mxu0 0.0
      %2370 = vmatprep.subr.mxu0 0.0
      %2371 = vmatpush1.msra.mxu0 0.0
      %2372 = vmatprep.subr.mxu0 0.0
      %2373 = vmatpush1.msra.mxu0 0.0
      %2374 = vmatprep.subr.mxu0 0.0
      %2375 = vmatpush1.msra.mxu0 0.0
      %2376 = vmatprep.subr.mxu0 0.0
      %2377 = vmatpush1.msra.mxu0 0.0
      %2378 = vmatprep.subr.mxu0 0.0
      %2379 = vmatpush1.msra.mxu0 0.0
      %2380 = vmatprep.subr.mxu0 0.0
      %2381 = vmatpush1.msra.mxu0 0.0
      %2382 = vmatprep.subr.mxu0 0.0
      %2383 = vmatpush1.msra.mxu0 0.0
      %2384 = vmatprep.subr.mxu0 0.0
      %2385 = vmatpush1.msra.mxu0 0.0
      %2386 = vmatprep.subr.mxu0 0.0
      %2387 = vmatpush1.msra.mxu0 0.0
      %2388 = vmatprep.subr.mxu0 0.0
      %2389 = vmatpush1.msra.mxu0 0.0
      %2390 = vmatprep.subr.mxu0 0.0
      %2391 = vmatpush1.msra.mxu0 0.0
      %2392 = vmatprep.subr.mxu0 0.0
      %2393 = vmatpush1.msra.mxu0 0.0
      %2394 = vmatprep.subr.mxu0 0.0
      %2395 = vmatpush1.msra.mxu0 0.0
      %2396 = vmatprep.subr.mxu0 0.0
      %2397 = vmatpush1.msra.mxu0 0.0
      %2398 = vmatprep.subr.mxu0 0.0
      %2399 = vmatpush1.msra.mxu0 0.0
      %2400 = vmatprep.subr.mxu0 0.0
      %2401 = vmatpush1.msra.mxu0 0.0
      %2402 = vmatprep.subr.mxu0 0.0
      %2403 = vmatpush1.msra.mxu0 0.0
      %2404 = vmatprep.subr.mxu0 0.0
      %2405 = vmatpush1.msra.mxu0 0.0
      %2406 = vmatprep.subr.mxu0 0.0
      %2407 = vmatpush1.msra.mxu0 0.0
      %2408 = vmatprep.subr.mxu0 0.0
      %2409 = vmatpush1.msra.mxu0 0.0
      %2410 = vmatprep.subr.mxu0 0.0
      %2411 = vmatpush1.msra.mxu0 0.0
      %2412 = vmatprep.subr.mxu0 0.0
      %2413 = vmatpush1.msra.mxu0 0.0
      %2414 = vmatprep.subr.mxu0 0.0
      %2415 = vmatpush1.msra.mxu0 0.0
      %2416 = vmatprep.subr.mxu0 0.0
      %2417 = vmatpush1.msra.mxu0 0.0
      %2418 = vmatprep.subr.mxu0 0.0
      %2419 = vmatpush1.msra.mxu0 0.0
      %2420 = vmatprep.subr.mxu0 0.0
      %2421 = vmatpush1.msra.mxu0 0.0
      %2422 = vmatprep.mubr.f32.mxu0 0.0
      %2423 = vmatmul.mubr.f32.gmra.mrb[0].mxu0 %v2356
      %v2424 = vpop.f32.mrb[0].mxu0
      %v2425 = vadd.f32 %v2352, %v2424
      %v2426 = vpop.f32.mrb[0].mxu0
      %2427 = vdwg.mxu0
      %2429 = vrot.lane.b32.xlu0 %v2425, 32
      %v2430 = vpop.permute.xlu0 %2429
      %vm2432 = vcmask 326912
      %2433 = vst.msk [vmem:[%s204] sm:$0xff] %vm2432, %v2430
      %v2434 = vld [vmem:[%s196 + $0x4] sm:$0xf]
      %2436 = vrot.lane.b32.xlu0 %v2434, 80
      %v2437 = vpop.permute.xlu0 %2436
      %v2438 = vsel %vm225, %v2437, 0
      %2440 = vmatprep.subr.mxu0 0.0
      %2441 = vmatpush1.msra.mxu0 %v2438
      %2442 = vmatprep.subr.mxu0 0.0
      %2443 = vmatpush1.msra.mxu0 0.0
      %2444 = vmatprep.subr.mxu0 0.0
      %2445 = vmatpush1.msra.mxu0 0.0
      %2446 = vmatprep.subr.mxu0 0.0
      %2447 = vmatpush1.msra.mxu0 0.0
      %2448 = vmatprep.subr.mxu0 0.0
      %2449 = vmatpush1.msra.mxu0 0.0
      %2450 = vmatprep.subr.mxu0 0.0
      %2451 = vmatpush1.msra.mxu0 0.0
      %2452 = vmatprep.subr.mxu0 0.0
      %2453 = vmatpush1.msra.mxu0 0.0
      %2454 = vmatprep.subr.mxu0 0.0
      %2455 = vmatpush1.msra.mxu0 0.0
      %2456 = vmatprep.subr.mxu0 0.0
      %2457 = vmatpush1.msra.mxu0 0.0
      %2458 = vmatprep.subr.mxu0 0.0
      %2459 = vmatpush1.msra.mxu0 0.0
      %2460 = vmatprep.subr.mxu0 0.0
      %2461 = vmatpush1.msra.mxu0 0.0
      %2462 = vmatprep.subr.mxu0 0.0
      %2463 = vmatpush1.msra.mxu0 0.0
      %2464 = vmatprep.subr.mxu0 0.0
      %2465 = vmatpush1.msra.mxu0 0.0
      %2466 = vmatprep.subr.mxu0 0.0
      %2467 = vmatpush1.msra.mxu0 0.0
      %2468 = vmatprep.subr.mxu0 0.0
      %2469 = vmatpush1.msra.mxu0 0.0
      %2470 = vmatprep.subr.mxu0 0.0
      %2471 = vmatpush1.msra.mxu0 0.0
      %2472 = vmatprep.subr.mxu0 0.0
      %2473 = vmatpush1.msra.mxu0 0.0
      %2474 = vmatprep.subr.mxu0 0.0
      %2475 = vmatpush1.msra.mxu0 0.0
      %2476 = vmatprep.subr.mxu0 0.0
      %2477 = vmatpush1.msra.mxu0 0.0
      %2478 = vmatprep.subr.mxu0 0.0
      %2479 = vmatpush1.msra.mxu0 0.0
      %2480 = vmatprep.subr.mxu0 0.0
      %2481 = vmatpush1.msra.mxu0 0.0
      %2482 = vmatprep.subr.mxu0 0.0
      %2483 = vmatpush1.msra.mxu0 0.0
      %2484 = vmatprep.subr.mxu0 0.0
      %2485 = vmatpush1.msra.mxu0 0.0
      %2486 = vmatprep.subr.mxu0 0.0
      %2487 = vmatpush1.msra.mxu0 0.0
      %2488 = vmatprep.subr.mxu0 0.0
      %2489 = vmatpush1.msra.mxu0 0.0
      %2490 = vmatprep.subr.mxu0 0.0
      %2491 = vmatpush1.msra.mxu0 0.0
      %2492 = vmatprep.subr.mxu0 0.0
      %2493 = vmatpush1.msra.mxu0 0.0
      %2494 = vmatprep.subr.mxu0 0.0
      %2495 = vmatpush1.msra.mxu0 0.0
      %2496 = vmatprep.subr.mxu0 0.0
      %2497 = vmatpush1.msra.mxu0 0.0
      %2498 = vmatprep.subr.mxu0 0.0
      %2499 = vmatpush1.msra.mxu0 0.0
      %2500 = vmatprep.subr.mxu0 0.0
      %2501 = vmatpush1.msra.mxu0 0.0
      %2502 = vmatprep.subr.mxu0 0.0
      %2503 = vmatpush1.msra.mxu0 0.0
      %2504 = vmatprep.mubr.f32.mxu0 0.0
      %2505 = vmatmul.mubr.f32.gmra.mrb[0].mxu0 %v223
      %v2506 = vpop.f32.mrb[0].mxu0
      %v2507 = vadd.f32 0.0, %v2506
      %v2508 = vpop.f32.mrb[0].mxu0
      %2509 = vdwg.mxu0
      %2510 = vrot.lane.b32.xlu0 %v2434, 96
      %v2511 = vpop.permute.xlu0 %2510
      %v2512 = vsel %vm225, %v2511, 0
      %2514 = vmatprep.subr.mxu0 0.0
      %2515 = vmatpush1.msra.mxu0 %v2512
      %2516 = vmatprep.subr.mxu0 0.0
      %2517 = vmatpush1.msra.mxu0 0.0
      %2518 = vmatprep.subr.mxu0 0.0
      %2519 = vmatpush1.msra.mxu0 0.0
      %2520 = vmatprep.subr.mxu0 0.0
      %2521 = vmatpush1.msra.mxu0 0.0
      %2522 = vmatprep.subr.mxu0 0.0
      %2523 = vmatpush1.msra.mxu0 0.0
      %2524 = vmatprep.subr.mxu0 0.0
      %2525 = vmatpush1.msra.mxu0 0.0
      %2526 = vmatprep.subr.mxu0 0.0
      %2527 = vmatpush1.msra.mxu0 0.0
      %2528 = vmatprep.subr.mxu0 0.0
      %2529 = vmatpush1.msra.mxu0 0.0
      %2530 = vmatprep.subr.mxu0 0.0
      %2531 = vmatpush1.msra.mxu0 0.0
      %2532 = vmatprep.subr.mxu0 0.0
      %2533 = vmatpush1.msra.mxu0 0.0
      %2534 = vmatprep.subr.mxu0 0.0
      %2535 = vmatpush1.msra.mxu0 0.0
      %2536 = vmatprep.subr.mxu0 0.0
      %2537 = vmatpush1.msra.mxu0 0.0
      %2538 = vmatprep.subr.mxu0 0.0
      %2539 = vmatpush1.msra.mxu0 0.0
      %2540 = vmatprep.subr.mxu0 0.0
      %2541 = vmatpush1.msra.mxu0 0.0
      %2542 = vmatprep.subr.mxu0 0.0
      %2543 = vmatpush1.msra.mxu0 0.0
      %2544 = vmatprep.subr.mxu0 0.0
      %2545 = vmatpush1.msra.mxu0 0.0
      %2546 = vmatprep.subr.mxu0 0.0
      %2547 = vmatpush1.msra.mxu0 0.0
      %2548 = vmatprep.subr.mxu0 0.0
      %2549 = vmatpush1.msra.mxu0 0.0
      %2550 = vmatprep.subr.mxu0 0.0
      %2551 = vmatpush1.msra.mxu0 0.0
      %2552 = vmatprep.subr.mxu0 0.0
      %2553 = vmatpush1.msra.mxu0 0.0
      %2554 = vmatprep.subr.mxu0 0.0
      %2555 = vmatpush1.msra.mxu0 0.0
      %2556 = vmatprep.subr.mxu0 0.0
      %2557 = vmatpush1.msra.mxu0 0.0
      %2558 = vmatprep.subr.mxu0 0.0
      %2559 = vmatpush1.msra.mxu0 0.0
      %2560 = vmatprep.subr.mxu0 0.0
      %2561 = vmatpush1.msra.mxu0 0.0
      %2562 = vmatprep.subr.mxu0 0.0
      %2563 = vmatpush1.msra.mxu0 0.0
      %2564 = vmatprep.subr.mxu0 0.0
      %2565 = vmatpush1.msra.mxu0 0.0
      %2566 = vmatprep.subr.mxu0 0.0
      %2567 = vmatpush1.msra.mxu0 0.0
      %2568 = vmatprep.subr.mxu0 0.0
      %2569 = vmatpush1.msra.mxu0 0.0
      %2570 = vmatprep.subr.mxu0 0.0
      %2571 = vmatpush1.msra.mxu0 0.0
      %2572 = vmatprep.subr.mxu0 0.0
      %2573 = vmatpush1.msra.mxu0 0.0
      %2574 = vmatprep.subr.mxu0 0.0
      %2575 = vmatpush1.msra.mxu0 0.0
      %2576 = vmatprep.subr.mxu0 0.0
      %2577 = vmatpush1.msra.mxu0 0.0
      %2578 = vmatprep.mubr.f32.mxu0 0.0
      %2579 = vmatmul.mubr.f32.gmra.mrb[0].mxu0 %v299
      %v2580 = vpop.f32.mrb[0].mxu0
      %v2581 = vadd.f32 %v2507, %v2580
      %v2582 = vpop.f32.mrb[0].mxu0
      %2583 = vdwg.mxu0
      %2584 = vmatprep.subr.mxu0 0.0
      %2585 = vmatpush1.msra.mxu0 %v2438
      %2586 = vmatprep.subr.mxu0 0.0
      %2587 = vmatpush1.msra.mxu0 0.0
      %2588 = vmatprep.subr.mxu0 0.0
      %2589 = vmatpush1.msra.mxu0 0.0
      %2590 = vmatprep.subr.mxu0 0.0
      %2591 = vmatpush1.msra.mxu0 0.0
      %2592 = vmatprep.subr.mxu0 0.0
      %2593 = vmatpush1.msra.mxu0 0.0
      %2594 = vmatprep.subr.mxu0 0.0
      %2595 = vmatpush1.msra.mxu0 0.0
      %2596 = vmatprep.subr.mxu0 0.0
      %2597 = vmatpush1.msra.mxu0 0.0
      %2598 = vmatprep.subr.mxu0 0.0
      %2599 = vmatpush1.msra.mxu0 0.0
      %2600 = vmatprep.subr.mxu0 0.0
      %2601 = vmatpush1.msra.mxu0 0.0
      %2602 = vmatprep.subr.mxu0 0.0
      %2603 = vmatpush1.msra.mxu0 0.0
      %2604 = vmatprep.subr.mxu0 0.0
      %2605 = vmatpush1.msra.mxu0 0.0
      %2606 = vmatprep.subr.mxu0 0.0
      %2607 = vmatpush1.msra.mxu0 0.0
      %2608 = vmatprep.subr.mxu0 0.0
      %2609 = vmatpush1.msra.mxu0 0.0
      %2610 = vmatprep.subr.mxu0 0.0
      %2611 = vmatpush1.msra.mxu0 0.0
      %2612 = vmatprep.subr.mxu0 0.0
      %2613 = vmatpush1.msra.mxu0 0.0
      %2614 = vmatprep.subr.mxu0 0.0
      %2615 = vmatpush1.msra.mxu0 0.0
      %2616 = vmatprep.subr.mxu0 0.0
      %2617 = vmatpush1.msra.mxu0 0.0
      %2618 = vmatprep.subr.mxu0 0.0
      %2619 = vmatpush1.msra.mxu0 0.0
      %2620 = vmatprep.subr.mxu0 0.0
      %2621 = vmatpush1.msra.mxu0 0.0
      %2622 = vmatprep.subr.mxu0 0.0
      %2623 = vmatpush1.msra.mxu0 0.0
      %2624 = vmatprep.subr.mxu0 0.0
      %2625 = vmatpush1.msra.mxu0 0.0
      %2626 = vmatprep.subr.mxu0 0.0
      %2627 = vmatpush1.msra.mxu0 0.0
      %2628 = vmatprep.subr.mxu0 0.0
      %2629 = vmatpush1.msra.mxu0 0.0
      %2630 = vmatprep.subr.mxu0 0.0
      %2631 = vmatpush1.msra.mxu0 0.0
      %2632 = vmatprep.subr.mxu0 0.0
      %2633 = vmatpush1.msra.mxu0 0.0
      %2634 = vmatprep.subr.mxu0 0.0
      %2635 = vmatpush1.msra.mxu0 0.0
      %2636 = vmatprep.subr.mxu0 0.0
      %2637 = vmatpush1.msra.mxu0 0.0
      %2638 = vmatprep.subr.mxu0 0.0
      %2639 = vmatpush1.msra.mxu0 0.0
      %2640 = vmatprep.subr.mxu0 0.0
      %2641 = vmatpush1.msra.mxu0 0.0
      %2642 = vmatprep.subr.mxu0 0.0
      %2643 = vmatpush1.msra.mxu0 0.0
      %2644 = vmatprep.subr.mxu0 0.0
      %2645 = vmatpush1.msra.mxu0 0.0
      %2646 = vmatprep.subr.mxu0 0.0
      %2647 = vmatpush1.msra.mxu0 0.0
      %2648 = vmatprep.mubr.f32.mxu0 0.0
      %2649 = vmatmul.mubr.f32.gmra.mrb[0].mxu0 %v374
      %v2650 = vpop.f32.mrb[0].mxu0
      %v2651 = vadd.f32 0.0, %v2650
      %v2652 = vpop.f32.mrb[0].mxu0
      %2653 = vdwg.mxu0
      %2654 = vmatprep.subr.mxu0 0.0
      %2655 = vmatpush1.msra.mxu0 %v2512
      %2656 = vmatprep.subr.mxu0 0.0
      %2657 = vmatpush1.msra.mxu0 0.0
      %2658 = vmatprep.subr.mxu0 0.0
      %2659 = vmatpush1.msra.mxu0 0.0
      %2660 = vmatprep.subr.mxu0 0.0
      %2661 = vmatpush1.msra.mxu0 0.0
      %2662 = vmatprep.subr.mxu0 0.0
      %2663 = vmatpush1.msra.mxu0 0.0
      %2664 = vmatprep.subr.mxu0 0.0
      %2665 = vmatpush1.msra.mxu0 0.0
      %2666 = vmatprep.subr.mxu0 0.0
      %2667 = vmatpush1.msra.mxu0 0.0
      %2668 = vmatprep.subr.mxu0 0.0
      %2669 = vmatpush1.msra.mxu0 0.0
      %2670 = vmatprep.subr.mxu0 0.0
      %2671 = vmatpush1.msra.mxu0 0.0
      %2672 = vmatprep.subr.mxu0 0.0
      %2673 = vmatpush1.msra.mxu0 0.0
      %2674 = vmatprep.subr.mxu0 0.0
      %2675 = vmatpush1.msra.mxu0 0.0
      %2676 = vmatprep.subr.mxu0 0.0
      %2677 = vmatpush1.msra.mxu0 0.0
      %2678 = vmatprep.subr.mxu0 0.0
      %2679 = vmatpush1.msra.mxu0 0.0
      %2680 = vmatprep.subr.mxu0 0.0
      %2681 = vmatpush1.msra.mxu0 0.0
      %2682 = vmatprep.subr.mxu0 0.0
      %2683 = vmatpush1.msra.mxu0 0.0
      %2684 = vmatprep.subr.mxu0 0.0
      %2685 = vmatpush1.msra.mxu0 0.0
      %2686 = vmatprep.subr.mxu0 0.0
      %2687 = vmatpush1.msra.mxu0 0.0
      %2688 = vmatprep.subr.mxu0 0.0
      %2689 = vmatpush1.msra.mxu0 0.0
      %2690 = vmatprep.subr.mxu0 0.0
      %2691 = vmatpush1.msra.mxu0 0.0
      %2692 = vmatprep.subr.mxu0 0.0
      %2693 = vmatpush1.msra.mxu0 0.0
      %2694 = vmatprep.subr.mxu0 0.0
      %2695 = vmatpush1.msra.mxu0 0.0
      %2696 = vmatprep.subr.mxu0 0.0
      %2697 = vmatpush1.msra.mxu0 0.0
      %2698 = vmatprep.subr.mxu0 0.0
      %2699 = vmatpush1.msra.mxu0 0.0
      %2700 = vmatprep.subr.mxu0 0.0
      %2701 = vmatpush1.msra.mxu0 0.0
      %2702 = vmatprep.subr.mxu0 0.0
      %2703 = vmatpush1.msra.mxu0 0.0
      %2704 = vmatprep.subr.mxu0 0.0
      %2705 = vmatpush1.msra.mxu0 0.0
      %2706 = vmatprep.subr.mxu0 0.0
      %2707 = vmatpush1.msra.mxu0 0.0
      %2708 = vmatprep.subr.mxu0 0.0
      %2709 = vmatpush1.msra.mxu0 0.0
      %2710 = vmatprep.subr.mxu0 0.0
      %2711 = vmatpush1.msra.mxu0 0.0
      %2712 = vmatprep.subr.mxu0 0.0
      %2713 = vmatpush1.msra.mxu0 0.0
      %2714 = vmatprep.subr.mxu0 0.0
      %2715 = vmatpush1.msra.mxu0 0.0
      %2716 = vmatprep.subr.mxu0 0.0
      %2717 = vmatpush1.msra.mxu0 0.0
      %2718 = vmatprep.mubr.f32.mxu0 0.0
      %2719 = vmatmul.mubr.f32.gmra.mrb[0].mxu0 %v447
      %v2720 = vpop.f32.mrb[0].mxu0
      %v2721 = vadd.f32 %v2651, %v2720
      %v2722 = vpop.f32.mrb[0].mxu0
      %2723 = vdwg.mxu0
      %v2725 = vsel %vm519, %v2721, 0
      %2727 = vmatprep.subr.mxu0 0.0
      %2728 = vmatpush1.msra.mxu0 %v215
      %2729 = vmatprep.subr.mxu0 0.0
      %2730 = vmatpush1.msra.mxu0 %v216
      %2731 = vmatprep.subr.mxu0 0.0
      %2732 = vmatpush1.msra.mxu0 0.0
      %2733 = vmatprep.subr.mxu0 0.0
      %2734 = vmatpush1.msra.mxu0 0.0
      %2735 = vmatprep.subr.mxu0 0.0
      %2736 = vmatpush1.msra.mxu0 0.0
      %2737 = vmatprep.subr.mxu0 0.0
      %2738 = vmatpush1.msra.mxu0 0.0
      %2739 = vmatprep.subr.mxu0 0.0
      %2740 = vmatpush1.msra.mxu0 0.0
      %2741 = vmatprep.subr.mxu0 0.0
      %2742 = vmatpush1.msra.mxu0 0.0
      %2743 = vmatprep.subr.mxu0 0.0
      %2744 = vmatpush1.msra.mxu0 0.0
      %2745 = vmatprep.subr.mxu0 0.0
      %2746 = vmatpush1.msra.mxu0 0.0
      %2747 = vmatprep.subr.mxu0 0.0
      %2748 = vmatpush1.msra.mxu0 0.0
      %2749 = vmatprep.subr.mxu0 0.0
      %2750 = vmatpush1.msra.mxu0 0.0
      %2751 = vmatprep.subr.mxu0 0.0
      %2752 = vmatpush1.msra.mxu0 0.0
      %2753 = vmatprep.subr.mxu0 0.0
      %2754 = vmatpush1.msra.mxu0 0.0
      %2755 = vmatprep.subr.mxu0 0.0
      %2756 = vmatpush1.msra.mxu0 0.0
      %2757 = vmatprep.subr.mxu0 0.0
      %2758 = vmatpush1.msra.mxu0 0.0
      %2759 = vmatprep.subr.mxu0 0.0
      %2760 = vmatpush1.msra.mxu0 0.0
      %2761 = vmatprep.subr.mxu0 0.0
      %2762 = vmatpush1.msra.mxu0 0.0
      %2763 = vmatprep.subr.mxu0 0.0
      %2764 = vmatpush1.msra.mxu0 0.0
      %2765 = vmatprep.subr.mxu0 0.0
      %2766 = vmatpush1.msra.mxu0 0.0
      %2767 = vmatprep.subr.mxu0 0.0
      %2768 = vmatpush1.msra.mxu0 0.0
      %2769 = vmatprep.subr.mxu0 0.0
      %2770 = vmatpush1.msra.mxu0 0.0
      %2771 = vmatprep.subr.mxu0 0.0
      %2772 = vmatpush1.msra.mxu0 0.0
      %2773 = vmatprep.subr.mxu0 0.0
      %2774 = vmatpush1.msra.mxu0 0.0
      %2775 = vmatprep.subr.mxu0 0.0
      %2776 = vmatpush1.msra.mxu0 0.0
      %2777 = vmatprep.subr.mxu0 0.0
      %2778 = vmatpush1.msra.mxu0 0.0
      %2779 = vmatprep.subr.mxu0 0.0
      %2780 = vmatpush1.msra.mxu0 0.0
      %2781 = vmatprep.subr.mxu0 0.0
      %2782 = vmatpush1.msra.mxu0 0.0
      %2783 = vmatprep.subr.mxu0 0.0
      %2784 = vmatpush1.msra.mxu0 0.0
      %2785 = vmatprep.subr.mxu0 0.0
      %2786 = vmatpush1.msra.mxu0 0.0
      %2787 = vmatprep.subr.mxu0 0.0
      %2788 = vmatpush1.msra.mxu0 0.0
      %2789 = vmatprep.subr.mxu0 0.0
      %2790 = vmatpush1.msra.mxu0 0.0
      %2791 = vmatprep.mubr.f32.mxu0 0.0
      %2792 = vmatmul.mubr.f32.gmra.mrb[0].mxu0 %v2725
      %v2793 = vpop.f32.mrb[0].mxu0
      %v2794 = vadd.f32 0.0, %v2793
      %v2795 = vpop.f32.mrb[0].mxu0
      %2796 = vdwg.mxu0
      %v2798 = vsel %vm519, %v2581, 0
      %2800 = vmatprep.subr.mxu0 0.0
      %2801 = vmatpush1.msra.mxu0 %v212
      %2802 = vmatprep.subr.mxu0 0.0
      %2803 = vmatpush1.msra.mxu0 %v213
      %2804 = vmatprep.subr.mxu0 0.0
      %2805 = vmatpush1.msra.mxu0 0.0
      %2806 = vmatprep.subr.mxu0 0.0
      %2807 = vmatpush1.msra.mxu0 0.0
      %2808 = vmatprep.subr.mxu0 0.0
      %2809 = vmatpush1.msra.mxu0 0.0
      %2810 = vmatprep.subr.mxu0 0.0
      %2811 = vmatpush1.msra.mxu0 0.0
      %2812 = vmatprep.subr.mxu0 0.0
      %2813 = vmatpush1.msra.mxu0 0.0
      %2814 = vmatprep.subr.mxu0 0.0
      %2815 = vmatpush1.msra.mxu0 0.0
      %2816 = vmatprep.subr.mxu0 0.0
      %2817 = vmatpush1.msra.mxu0 0.0
      %2818 = vmatprep.subr.mxu0 0.0
      %2819 = vmatpush1.msra.mxu0 0.0
      %2820 = vmatprep.subr.mxu0 0.0
      %2821 = vmatpush1.msra.mxu0 0.0
      %2822 = vmatprep.subr.mxu0 0.0
      %2823 = vmatpush1.msra.mxu0 0.0
      %2824 = vmatprep.subr.mxu0 0.0
      %2825 = vmatpush1.msra.mxu0 0.0
      %2826 = vmatprep.subr.mxu0 0.0
      %2827 = vmatpush1.msra.mxu0 0.0
      %2828 = vmatprep.subr.mxu0 0.0
      %2829 = vmatpush1.msra.mxu0 0.0
      %2830 = vmatprep.subr.mxu0 0.0
      %2831 = vmatpush1.msra.mxu0 0.0
      %2832 = vmatprep.subr.mxu0 0.0
      %2833 = vmatpush1.msra.mxu0 0.0
      %2834 = vmatprep.subr.mxu0 0.0
      %2835 = vmatpush1.msra.mxu0 0.0
      %2836 = vmatprep.subr.mxu0 0.0
      %2837 = vmatpush1.msra.mxu0 0.0
      %2838 = vmatprep.subr.mxu0 0.0
      %2839 = vmatpush1.msra.mxu0 0.0
      %2840 = vmatprep.subr.mxu0 0.0
      %2841 = vmatpush1.msra.mxu0 0.0
      %2842 = vmatprep.subr.mxu0 0.0
      %2843 = vmatpush1.msra.mxu0 0.0
      %2844 = vmatprep.subr.mxu0 0.0
      %2845 = vmatpush1.msra.mxu0 0.0
      %2846 = vmatprep.subr.mxu0 0.0
      %2847 = vmatpush1.msra.mxu0 0.0
      %2848 = vmatprep.subr.mxu0 0.0
      %2849 = vmatpush1.msra.mxu0 0.0
      %2850 = vmatprep.subr.mxu0 0.0
      %2851 = vmatpush1.msra.mxu0 0.0
      %2852 = vmatprep.subr.mxu0 0.0
      %2853 = vmatpush1.msra.mxu0 0.0
      %2854 = vmatprep.subr.mxu0 0.0
      %2855 = vmatpush1.msra.mxu0 0.0
      %2856 = vmatprep.subr.mxu0 0.0
      %2857 = vmatpush1.msra.mxu0 0.0
      %2858 = vmatprep.subr.mxu0 0.0
      %2859 = vmatpush1.msra.mxu0 0.0
      %2860 = vmatprep.subr.mxu0 0.0
      %2861 = vmatpush1.msra.mxu0 0.0
      %2862 = vmatprep.subr.mxu0 0.0
      %2863 = vmatpush1.msra.mxu0 0.0
      %2864 = vmatprep.mubr.f32.mxu0 0.0
      %2865 = vmatmul.mubr.f32.gmra.mrb[0].mxu0 %v2798
      %v2866 = vpop.f32.mrb[0].mxu0
      %v2867 = vadd.f32 %v2794, %v2866
      %v2868 = vpop.f32.mrb[0].mxu0
      %2869 = vdwg.mxu0
      %2871 = vrot.lane.b32.xlu0 %v2867, 40
      %v2872 = vpop.permute.xlu0 %2871
      %vm2874 = vcmask 392512
      %2875 = vst.msk [vmem:[%s204] sm:$0xff] %vm2874, %v2872
      %v2876 = vld [vmem:[%s196 + $0x4] sm:$0xf]
      %2878 = vrot.lane.b32.xlu0 %v2876, 48
      %v2879 = vpop.permute.xlu0 %2878
      %v2880 = vsel %vm225, %v2879, 0
      %2882 = vmatprep.subr.mxu0 0.0
      %2883 = vmatpush1.msra.mxu0 %v2880
      %2884 = vmatprep.subr.mxu0 0.0
      %2885 = vmatpush1.msra.mxu0 0.0
      %2886 = vmatprep.subr.mxu0 0.0
      %2887 = vmatpush1.msra.mxu0 0.0
      %2888 = vmatprep.subr.mxu0 0.0
      %2889 = vmatpush1.msra.mxu0 0.0
      %2890 = vmatprep.subr.mxu0 0.0
      %2891 = vmatpush1.msra.mxu0 0.0
      %2892 = vmatprep.subr.mxu0 0.0
      %2893 = vmatpush1.msra.mxu0 0.0
      %2894 = vmatprep.subr.mxu0 0.0
      %2895 = vmatpush1.msra.mxu0 0.0
      %2896 = vmatprep.subr.mxu0 0.0
      %2897 = vmatpush1.msra.mxu0 0.0
      %2898 = vmatprep.subr.mxu0 0.0
      %2899 = vmatpush1.msra.mxu0 0.0
      %2900 = vmatprep.subr.mxu0 0.0
      %2901 = vmatpush1.msra.mxu0 0.0
      %2902 = vmatprep.subr.mxu0 0.0
      %2903 = vmatpush1.msra.mxu0 0.0
      %2904 = vmatprep.subr.mxu0 0.0
      %2905 = vmatpush1.msra.mxu0 0.0
      %2906 = vmatprep.subr.mxu0 0.0
      %2907 = vmatpush1.msra.mxu0 0.0
      %2908 = vmatprep.subr.mxu0 0.0
      %2909 = vmatpush1.msra.mxu0 0.0
      %2910 = vmatprep.subr.mxu0 0.0
      %2911 = vmatpush1.msra.mxu0 0.0
      %2912 = vmatprep.subr.mxu0 0.0
      %2913 = vmatpush1.msra.mxu0 0.0
      %2914 = vmatprep.subr.mxu0 0.0
      %2915 = vmatpush1.msra.mxu0 0.0
      %2916 = vmatprep.subr.mxu0 0.0
      %2917 = vmatpush1.msra.mxu0 0.0
      %2918 = vmatprep.subr.mxu0 0.0
      %2919 = vmatpush1.msra.mxu0 0.0
      %2920 = vmatprep.subr.mxu0 0.0
      %2921 = vmatpush1.msra.mxu0 0.0
      %2922 = vmatprep.subr.mxu0 0.0
      %2923 = vmatpush1.msra.mxu0 0.0
      %2924 = vmatprep.subr.mxu0 0.0
      %2925 = vmatpush1.msra.mxu0 0.0
      %2926 = vmatprep.subr.mxu0 0.0
      %2927 = vmatpush1.msra.mxu0 0.0
      %2928 = vmatprep.subr.mxu0 0.0
      %2929 = vmatpush1.msra.mxu0 0.0
      %2930 = vmatprep.subr.mxu0 0.0
      %2931 = vmatpush1.msra.mxu0 0.0
      %2932 = vmatprep.subr.mxu0 0.0
      %2933 = vmatpush1.msra.mxu0 0.0
      %2934 = vmatprep.subr.mxu0 0.0
      %2935 = vmatpush1.msra.mxu0 0.0
      %2936 = vmatprep.subr.mxu0 0.0
      %2937 = vmatpush1.msra.mxu0 0.0
      %2938 = vmatprep.subr.mxu0 0.0
      %2939 = vmatpush1.msra.mxu0 0.0
      %2940 = vmatprep.subr.mxu0 0.0
      %2941 = vmatpush1.msra.mxu0 0.0
      %2942 = vmatprep.subr.mxu0 0.0
      %2943 = vmatpush1.msra.mxu0 0.0
      %2944 = vmatprep.subr.mxu0 0.0
      %2945 = vmatpush1.msra.mxu0 0.0
      %2946 = vmatprep.mubr.f32.mxu0 0.0
      %2947 = vmatmul.mubr.f32.gmra.mrb[0].mxu0 %v223
      %v2948 = vpop.f32.mrb[0].mxu0
      %v2949 = vadd.f32 0.0, %v2948
      %v2950 = vpop.f32.mrb[0].mxu0
      %2951 = vdwg.mxu0
      %2952 = vrot.lane.b32.xlu0 %v2876, 64
      %v2953 = vpop.permute.xlu0 %2952
      %v2954 = vsel %vm225, %v2953, 0
      %2956 = vmatprep.subr.mxu0 0.0
      %2957 = vmatpush1.msra.mxu0 %v2954
      %2958 = vmatprep.subr.mxu0 0.0
      %2959 = vmatpush1.msra.mxu0 0.0
      %2960 = vmatprep.subr.mxu0 0.0
      %2961 = vmatpush1.msra.mxu0 0.0
      %2962 = vmatprep.subr.mxu0 0.0
      %2963 = vmatpush1.msra.mxu0 0.0
      %2964 = vmatprep.subr.mxu0 0.0
      %2965 = vmatpush1.msra.mxu0 0.0
      %2966 = vmatprep.subr.mxu0 0.0
      %2967 = vmatpush1.msra.mxu0 0.0
      %2968 = vmatprep.subr.mxu0 0.0
      %2969 = vmatpush1.msra.mxu0 0.0
      %2970 = vmatprep.subr.mxu0 0.0
      %2971 = vmatpush1.msra.mxu0 0.0
      %2972 = vmatprep.subr.mxu0 0.0
      %2973 = vmatpush1.msra.mxu0 0.0
      %2974 = vmatprep.subr.mxu0 0.0
      %2975 = vmatpush1.msra.mxu0 0.0
      %2976 = vmatprep.subr.mxu0 0.0
      %2977 = vmatpush1.msra.mxu0 0.0
      %2978 = vmatprep.subr.mxu0 0.0
      %2979 = vmatpush1.msra.mxu0 0.0
      %2980 = vmatprep.subr.mxu0 0.0
      %2981 = vmatpush1.msra.mxu0 0.0
      %2982 = vmatprep.subr.mxu0 0.0
      %2983 = vmatpush1.msra.mxu0 0.0
      %2984 = vmatprep.subr.mxu0 0.0
      %2985 = vmatpush1.msra.mxu0 0.0
      %2986 = vmatprep.subr.mxu0 0.0
      %2987 = vmatpush1.msra.mxu0 0.0
      %2988 = vmatprep.subr.mxu0 0.0
      %2989 = vmatpush1.msra.mxu0 0.0
      %2990 = vmatprep.subr.mxu0 0.0
      %2991 = vmatpush1.msra.mxu0 0.0
      %2992 = vmatprep.subr.mxu0 0.0
      %2993 = vmatpush1.msra.mxu0 0.0
      %2994 = vmatprep.subr.mxu0 0.0
      %2995 = vmatpush1.msra.mxu0 0.0
      %2996 = vmatprep.subr.mxu0 0.0
      %2997 = vmatpush1.msra.mxu0 0.0
      %2998 = vmatprep.subr.mxu0 0.0
      %2999 = vmatpush1.msra.mxu0 0.0
      %3000 = vmatprep.subr.mxu0 0.0
      %3001 = vmatpush1.msra.mxu0 0.0
      %3002 = vmatprep.subr.mxu0 0.0
      %3003 = vmatpush1.msra.mxu0 0.0
      %3004 = vmatprep.subr.mxu0 0.0
      %3005 = vmatpush1.msra.mxu0 0.0
      %3006 = vmatprep.subr.mxu0 0.0
      %3007 = vmatpush1.msra.mxu0 0.0
      %3008 = vmatprep.subr.mxu0 0.0
      %3009 = vmatpush1.msra.mxu0 0.0
      %3010 = vmatprep.subr.mxu0 0.0
      %3011 = vmatpush1.msra.mxu0 0.0
      %3012 = vmatprep.subr.mxu0 0.0
      %3013 = vmatpush1.msra.mxu0 0.0
      %3014 = vmatprep.subr.mxu0 0.0
      %3015 = vmatpush1.msra.mxu0 0.0
      %3016 = vmatprep.subr.mxu0 0.0
      %3017 = vmatpush1.msra.mxu0 0.0
      %3018 = vmatprep.subr.mxu0 0.0
      %3019 = vmatpush1.msra.mxu0 0.0
      %3020 = vmatprep.mubr.f32.mxu0 0.0
      %3021 = vmatmul.mubr.f32.gmra.mrb[0].mxu0 %v299
      %v3022 = vpop.f32.mrb[0].mxu0
      %v3023 = vadd.f32 %v2949, %v3022
      %v3024 = vpop.f32.mrb[0].mxu0
      %3025 = vdwg.mxu0
      %3026 = vmatprep.subr.mxu0 0.0
      %3027 = vmatpush1.msra.mxu0 %v2880
      %3028 = vmatprep.subr.mxu0 0.0
      %3029 = vmatpush1.msra.mxu0 0.0
      %3030 = vmatprep.subr.mxu0 0.0
      %3031 = vmatpush1.msra.mxu0 0.0
      %3032 = vmatprep.subr.mxu0 0.0
      %3033 = vmatpush1.msra.mxu0 0.0
      %3034 = vmatprep.subr.mxu0 0.0
      %3035 = vmatpush1.msra.mxu0 0.0
      %3036 = vmatprep.subr.mxu0 0.0
      %3037 = vmatpush1.msra.mxu0 0.0
      %3038 = vmatprep.subr.mxu0 0.0
      %3039 = vmatpush1.msra.mxu0 0.0
      %3040 = vmatprep.subr.mxu0 0.0
      %3041 = vmatpush1.msra.mxu0 0.0
      %3042 = vmatprep.subr.mxu0 0.0
      %3043 = vmatpush1.msra.mxu0 0.0
      %3044 = vmatprep.subr.mxu0 0.0
      %3045 = vmatpush1.msra.mxu0 0.0
      %3046 = vmatprep.subr.mxu0 0.0
      %3047 = vmatpush1.msra.mxu0 0.0
      %3048 = vmatprep.subr.mxu0 0.0
      %3049 = vmatpush1.msra.mxu0 0.0
      %3050 = vmatprep.subr.mxu0 0.0
      %3051 = vmatpush1.msra.mxu0 0.0
      %3052 = vmatprep.subr.mxu0 0.0
      %3053 = vmatpush1.msra.mxu0 0.0
      %3054 = vmatprep.subr.mxu0 0.0
      %3055 = vmatpush1.msra.mxu0 0.0
      %3056 = vmatprep.subr.mxu0 0.0
      %3057 = vmatpush1.msra.mxu0 0.0
      %3058 = vmatprep.subr.mxu0 0.0
      %3059 = vmatpush1.msra.mxu0 0.0
      %3060 = vmatprep.subr.mxu0 0.0
      %3061 = vmatpush1.msra.mxu0 0.0
      %3062 = vmatprep.subr.mxu0 0.0
      %3063 = vmatpush1.msra.mxu0 0.0
      %3064 = vmatprep.subr.mxu0 0.0
      %3065 = vmatpush1.msra.mxu0 0.0
      %3066 = vmatprep.subr.mxu0 0.0
      %3067 = vmatpush1.msra.mxu0 0.0
      %3068 = vmatprep.subr.mxu0 0.0
      %3069 = vmatpush1.msra.mxu0 0.0
      %3070 = vmatprep.subr.mxu0 0.0
      %3071 = vmatpush1.msra.mxu0 0.0
      %3072 = vmatprep.subr.mxu0 0.0
      %3073 = vmatpush1.msra.mxu0 0.0
      %3074 = vmatprep.subr.mxu0 0.0
      %3075 = vmatpush1.msra.mxu0 0.0
      %3076 = vmatprep.subr.mxu0 0.0
      %3077 = vmatpush1.msra.mxu0 0.0
      %3078 = vmatprep.subr.mxu0 0.0
      %3079 = vmatpush1.msra.mxu0 0.0
      %3080 = vmatprep.subr.mxu0 0.0
      %3081 = vmatpush1.msra.mxu0 0.0
      %3082 = vmatprep.subr.mxu0 0.0
      %3083 = vmatpush1.msra.mxu0 0.0
      %3084 = vmatprep.subr.mxu0 0.0
      %3085 = vmatpush1.msra.mxu0 0.0
      %3086 = vmatprep.subr.mxu0 0.0
      %3087 = vmatpush1.msra.mxu0 0.0
      %3088 = vmatprep.subr.mxu0 0.0
      %3089 = vmatpush1.msra.mxu0 0.0
      %3090 = vmatprep.mubr.f32.mxu0 0.0
      %3091 = vmatmul.mubr.f32.gmra.mrb[0].mxu0 %v374
      %v3092 = vpop.f32.mrb[0].mxu0
      %v3093 = vadd.f32 0.0, %v3092
      %v3094 = vpop.f32.mrb[0].mxu0
      %3095 = vdwg.mxu0
      %3096 = vmatprep.subr.mxu0 0.0
      %3097 = vmatpush1.msra.mxu0 %v2954
      %3098 = vmatprep.subr.mxu0 0.0
      %3099 = vmatpush1.msra.mxu0 0.0
      %3100 = vmatprep.subr.mxu0 0.0
      %3101 = vmatpush1.msra.mxu0 0.0
      %3102 = vmatprep.subr.mxu0 0.0
      %3103 = vmatpush1.msra.mxu0 0.0
      %3104 = vmatprep.subr.mxu0 0.0
      %3105 = vmatpush1.msra.mxu0 0.0
      %3106 = vmatprep.subr.mxu0 0.0
      %3107 = vmatpush1.msra.mxu0 0.0
      %3108 = vmatprep.subr.mxu0 0.0
      %3109 = vmatpush1.msra.mxu0 0.0
      %3110 = vmatprep.subr.mxu0 0.0
      %3111 = vmatpush1.msra.mxu0 0.0
      %3112 = vmatprep.subr.mxu0 0.0
      %3113 = vmatpush1.msra.mxu0 0.0
      %3114 = vmatprep.subr.mxu0 0.0
      %3115 = vmatpush1.msra.mxu0 0.0
      %3116 = vmatprep.subr.mxu0 0.0
      %3117 = vmatpush1.msra.mxu0 0.0
      %3118 = vmatprep.subr.mxu0 0.0
      %3119 = vmatpush1.msra.mxu0 0.0
      %3120 = vmatprep.subr.mxu0 0.0
      %3121 = vmatpush1.msra.mxu0 0.0
      %3122 = vmatprep.subr.mxu0 0.0
      %3123 = vmatpush1.msra.mxu0 0.0
      %3124 = vmatprep.subr.mxu0 0.0
      %3125 = vmatpush1.msra.mxu0 0.0
      %3126 = vmatprep.subr.mxu0 0.0
      %3127 = vmatpush1.msra.mxu0 0.0
      %3128 = vmatprep.subr.mxu0 0.0
      %3129 = vmatpush1.msra.mxu0 0.0
      %3130 = vmatprep.subr.mxu0 0.0
      %3131 = vmatpush1.msra.mxu0 0.0
      %3132 = vmatprep.subr.mxu0 0.0
      %3133 = vmatpush1.msra.mxu0 0.0
      %3134 = vmatprep.subr.mxu0 0.0
      %3135 = vmatpush1.msra.mxu0 0.0
      %3136 = vmatprep.subr.mxu0 0.0
      %3137 = vmatpush1.msra.mxu0 0.0
      %3138 = vmatprep.subr.mxu0 0.0
      %3139 = vmatpush1.msra.mxu0 0.0
      %3140 = vmatprep.subr.mxu0 0.0
      %3141 = vmatpush1.msra.mxu0 0.0
      %3142 = vmatprep.subr.mxu0 0.0
      %3143 = vmatpush1.msra.mxu0 0.0
      %3144 = vmatprep.subr.mxu0 0.0
      %3145 = vmatpush1.msra.mxu0 0.0
      %3146 = vmatprep.subr.mxu0 0.0
      %3147 = vmatpush1.msra.mxu0 0.0
      %3148 = vmatprep.subr.mxu0 0.0
      %3149 = vmatpush1.msra.mxu0 0.0
      %3150 = vmatprep.subr.mxu0 0.0
      %3151 = vmatpush1.msra.mxu0 0.0
      %3152 = vmatprep.subr.mxu0 0.0
      %3153 = vmatpush1.msra.mxu0 0.0
      %3154 = vmatprep.subr.mxu0 0.0
      %3155 = vmatpush1.msra.mxu0 0.0
      %3156 = vmatprep.subr.mxu0 0.0
      %3157 = vmatpush1.msra.mxu0 0.0
      %3158 = vmatprep.subr.mxu0 0.0
      %3159 = vmatpush1.msra.mxu0 0.0
      %3160 = vmatprep.mubr.f32.mxu0 0.0
      %3161 = vmatmul.mubr.f32.gmra.mrb[0].mxu0 %v447
      %v3162 = vpop.f32.mrb[0].mxu0
      %v3163 = vadd.f32 %v3093, %v3162
      %v3164 = vpop.f32.mrb[0].mxu0
      %3165 = vdwg.mxu0
      %v3167 = vsel %vm519, %v3163, 0
      %3169 = vmatprep.subr.mxu0 0.0
      %3170 = vmatpush1.msra.mxu0 %v215
      %3171 = vmatprep.subr.mxu0 0.0
      %3172 = vmatpush1.msra.mxu0 %v216
      %3173 = vmatprep.subr.mxu0 0.0
      %3174 = vmatpush1.msra.mxu0 0.0
      %3175 = vmatprep.subr.mxu0 0.0
      %3176 = vmatpush1.msra.mxu0 0.0
      %3177 = vmatprep.subr.mxu0 0.0
      %3178 = vmatpush1.msra.mxu0 0.0
      %3179 = vmatprep.subr.mxu0 0.0
      %3180 = vmatpush1.msra.mxu0 0.0
      %3181 = vmatprep.subr.mxu0 0.0
      %3182 = vmatpush1.msra.mxu0 0.0
      %3183 = vmatprep.subr.mxu0 0.0
      %3184 = vmatpush1.msra.mxu0 0.0
      %3185 = vmatprep.subr.mxu0 0.0
      %3186 = vmatpush1.msra.mxu0 0.0
      %3187 = vmatprep.subr.mxu0 0.0
      %3188 = vmatpush1.msra.mxu0 0.0
      %3189 = vmatprep.subr.mxu0 0.0
      %3190 = vmatpush1.msra.mxu0 0.0
      %3191 = vmatprep.subr.mxu0 0.0
      %3192 = vmatpush1.msra.mxu0 0.0
      %3193 = vmatprep.subr.mxu0 0.0
      %3194 = vmatpush1.msra.mxu0 0.0
      %3195 = vmatprep.subr.mxu0 0.0
      %3196 = vmatpush1.msra.mxu0 0.0
      %3197 = vmatprep.subr.mxu0 0.0
      %3198 = vmatpush1.msra.mxu0 0.0
      %3199 = vmatprep.subr.mxu0 0.0
      %3200 = vmatpush1.msra.mxu0 0.0
      %3201 = vmatprep.subr.mxu0 0.0
      %3202 = vmatpush1.msra.mxu0 0.0
      %3203 = vmatprep.subr.mxu0 0.0
      %3204 = vmatpush1.msra.mxu0 0.0
      %3205 = vmatprep.subr.mxu0 0.0
      %3206 = vmatpush1.msra.mxu0 0.0
      %3207 = vmatprep.subr.mxu0 0.0
      %3208 = vmatpush1.msra.mxu0 0.0
      %3209 = vmatprep.subr.mxu0 0.0
      %3210 = vmatpush1.msra.mxu0 0.0
      %3211 = vmatprep.subr.mxu0 0.0
      %3212 = vmatpush1.msra.mxu0 0.0
      %3213 = vmatprep.subr.mxu0 0.0
      %3214 = vmatpush1.msra.mxu0 0.0
      %3215 = vmatprep.subr.mxu0 0.0
      %3216 = vmatpush1.msra.mxu0 0.0
      %3217 = vmatprep.subr.mxu0 0.0
      %3218 = vmatpush1.msra.mxu0 0.0
      %3219 = vmatprep.subr.mxu0 0.0
      %3220 = vmatpush1.msra.mxu0 0.0
      %3221 = vmatprep.subr.mxu0 0.0
      %3222 = vmatpush1.msra.mxu0 0.0
      %3223 = vmatprep.subr.mxu0 0.0
      %3224 = vmatpush1.msra.mxu0 0.0
      %3225 = vmatprep.subr.mxu0 0.0
      %3226 = vmatpush1.msra.mxu0 0.0
      %3227 = vmatprep.subr.mxu0 0.0
      %3228 = vmatpush1.msra.mxu0 0.0
      %3229 = vmatprep.subr.mxu0 0.0
      %3230 = vmatpush1.msra.mxu0 0.0
      %3231 = vmatprep.subr.mxu0 0.0
      %3232 = vmatpush1.msra.mxu0 0.0
      %3233 = vmatprep.mubr.f32.mxu0 0.0
      %3234 = vmatmul.mubr.f32.gmra.mrb[0].mxu0 %v3167
      %v3235 = vpop.f32.mrb[0].mxu0
      %v3236 = vadd.f32 0.0, %v3235
      %v3237 = vpop.f32.mrb[0].mxu0
      %3238 = vdwg.mxu0
      %v3240 = vsel %vm519, %v3023, 0
      %3242 = vmatprep.subr.mxu0 0.0
      %3243 = vmatpush1.msra.mxu0 %v212
      %3244 = vmatprep.subr.mxu0 0.0
      %3245 = vmatpush1.msra.mxu0 %v213
      %3246 = vmatprep.subr.mxu0 0.0
      %3247 = vmatpush1.msra.mxu0 0.0
      %3248 = vmatprep.subr.mxu0 0.0
      %3249 = vmatpush1.msra.mxu0 0.0
      %3250 = vmatprep.subr.mxu0 0.0
      %3251 = vmatpush1.msra.mxu0 0.0
      %3252 = vmatprep.subr.mxu0 0.0
      %3253 = vmatpush1.msra.mxu0 0.0
      %3254 = vmatprep.subr.mxu0 0.0
      %3255 = vmatpush1.msra.mxu0 0.0
      %3256 = vmatprep.subr.mxu0 0.0
      %3257 = vmatpush1.msra.mxu0 0.0
      %3258 = vmatprep.subr.mxu0 0.0
      %3259 = vmatpush1.msra.mxu0 0.0
      %3260 = vmatprep.subr.mxu0 0.0
      %3261 = vmatpush1.msra.mxu0 0.0
      %3262 = vmatprep.subr.mxu0 0.0
      %3263 = vmatpush1.msra.mxu0 0.0
      %3264 = vmatprep.subr.mxu0 0.0
      %3265 = vmatpush1.msra.mxu0 0.0
      %3266 = vmatprep.subr.mxu0 0.0
      %3267 = vmatpush1.msra.mxu0 0.0
      %3268 = vmatprep.subr.mxu0 0.0
      %3269 = vmatpush1.msra.mxu0 0.0
      %3270 = vmatprep.subr.mxu0 0.0
      %3271 = vmatpush1.msra.mxu0 0.0
      %3272 = vmatprep.subr.mxu0 0.0
      %3273 = vmatpush1.msra.mxu0 0.0
      %3274 = vmatprep.subr.mxu0 0.0
      %3275 = vmatpush1.msra.mxu0 0.0
      %3276 = vmatprep.subr.mxu0 0.0
      %3277 = vmatpush1.msra.mxu0 0.0
      %3278 = vmatprep.subr.mxu0 0.0
      %3279 = vmatpush1.msra.mxu0 0.0
      %3280 = vmatprep.subr.mxu0 0.0
      %3281 = vmatpush1.msra.mxu0 0.0
      %3282 = vmatprep.subr.mxu0 0.0
      %3283 = vmatpush1.msra.mxu0 0.0
      %3284 = vmatprep.subr.mxu0 0.0
      %3285 = vmatpush1.msra.mxu0 0.0
      %3286 = vmatprep.subr.mxu0 0.0
      %3287 = vmatpush1.msra.mxu0 0.0
      %3288 = vmatprep.subr.mxu0 0.0
      %3289 = vmatpush1.msra.mxu0 0.0
      %3290 = vmatprep.subr.mxu0 0.0
      %3291 = vmatpush1.msra.mxu0 0.0
      %3292 = vmatprep.subr.mxu0 0.0
      %3293 = vmatpush1.msra.mxu0 0.0
      %3294 = vmatprep.subr.mxu0 0.0
      %3295 = vmatpush1.msra.mxu0 0.0
      %3296 = vmatprep.subr.mxu0 0.0
      %3297 = vmatpush1.msra.mxu0 0.0
      %3298 = vmatprep.subr.mxu0 0.0
      %3299 = vmatpush1.msra.mxu0 0.0
      %3300 = vmatprep.subr.mxu0 0.0
      %3301 = vmatpush1.msra.mxu0 0.0
      %3302 = vmatprep.subr.mxu0 0.0
      %3303 = vmatpush1.msra.mxu0 0.0
      %3304 = vmatprep.subr.mxu0 0.0
      %3305 = vmatpush1.msra.mxu0 0.0
      %3306 = vmatprep.mubr.f32.mxu0 0.0
      %3307 = vmatmul.mubr.f32.gmra.mrb[0].mxu0 %v3240
      %v3308 = vpop.f32.mrb[0].mxu0
      %v3309 = vadd.f32 %v3236, %v3308
      %v3310 = vpop.f32.mrb[0].mxu0
      %3311 = vdwg.mxu0
      %3313 = vrot.lane.b32.xlu0 %v3309, 48
      %v3314 = vpop.permute.xlu0 %3313
      %vm3316 = vcmask 458112
      %3317 = vst.msk [vmem:[%s204] sm:$0xff] %vm3316, %v3314
      %v3318 = vld [vmem:[%s196 + $0x4] sm:$0xf]
      %3320 = vrot.lane.b32.xlu0 %v3318, 16
      %v3321 = vpop.permute.xlu0 %3320
      %v3322 = vsel %vm225, %v3321, 0
      %3324 = vmatprep.subr.mxu0 0.0
      %3325 = vmatpush1.msra.mxu0 %v3322
      %3326 = vmatprep.subr.mxu0 0.0
      %3327 = vmatpush1.msra.mxu0 0.0
      %3328 = vmatprep.subr.mxu0 0.0
      %3329 = vmatpush1.msra.mxu0 0.0
      %3330 = vmatprep.subr.mxu0 0.0
      %3331 = vmatpush1.msra.mxu0 0.0
      %3332 = vmatprep.subr.mxu0 0.0
      %3333 = vmatpush1.msra.mxu0 0.0
      %3334 = vmatprep.subr.mxu0 0.0
      %3335 = vmatpush1.msra.mxu0 0.0
      %3336 = vmatprep.subr.mxu0 0.0
      %3337 = vmatpush1.msra.mxu0 0.0
      %3338 = vmatprep.subr.mxu0 0.0
      %3339 = vmatpush1.msra.mxu0 0.0
      %3340 = vmatprep.subr.mxu0 0.0
      %3341 = vmatpush1.msra.mxu0 0.0
      %3342 = vmatprep.subr.mxu0 0.0
      %3343 = vmatpush1.msra.mxu0 0.0
      %3344 = vmatprep.subr.mxu0 0.0
      %3345 = vmatpush1.msra.mxu0 0.0
      %3346 = vmatprep.subr.mxu0 0.0
      %3347 = vmatpush1.msra.mxu0 0.0
      %3348 = vmatprep.subr.mxu0 0.0
      %3349 = vmatpush1.msra.mxu0 0.0
      %3350 = vmatprep.subr.mxu0 0.0
      %3351 = vmatpush1.msra.mxu0 0.0
      %3352 = vmatprep.subr.mxu0 0.0
      %3353 = vmatpush1.msra.mxu0 0.0
      %3354 = vmatprep.subr.mxu0 0.0
      %3355 = vmatpush1.msra.mxu0 0.0
      %3356 = vmatprep.subr.mxu0 0.0
      %3357 = vmatpush1.msra.mxu0 0.0
      %3358 = vmatprep.subr.mxu0 0.0
      %3359 = vmatpush1.msra.mxu0 0.0
      %3360 = vmatprep.subr.mxu0 0.0
      %3361 = vmatpush1.msra.mxu0 0.0
      %3362 = vmatprep.subr.mxu0 0.0
      %3363 = vmatpush1.msra.mxu0 0.0
      %3364 = vmatprep.subr.mxu0 0.0
      %3365 = vmatpush1.msra.mxu0 0.0
      %3366 = vmatprep.subr.mxu0 0.0
      %3367 = vmatpush1.msra.mxu0 0.0
      %3368 = vmatprep.subr.mxu0 0.0
      %3369 = vmatpush1.msra.mxu0 0.0
      %3370 = vmatprep.subr.mxu0 0.0
      %3371 = vmatpush1.msra.mxu0 0.0
      %3372 = vmatprep.subr.mxu0 0.0
      %3373 = vmatpush1.msra.mxu0 0.0
      %3374 = vmatprep.subr.mxu0 0.0
      %3375 = vmatpush1.msra.mxu0 0.0
      %3376 = vmatprep.subr.mxu0 0.0
      %3377 = vmatpush1.msra.mxu0 0.0
      %3378 = vmatprep.subr.mxu0 0.0
      %3379 = vmatpush1.msra.mxu0 0.0
      %3380 = vmatprep.subr.mxu0 0.0
      %3381 = vmatpush1.msra.mxu0 0.0
      %3382 = vmatprep.subr.mxu0 0.0
      %3383 = vmatpush1.msra.mxu0 0.0
      %3384 = vmatprep.subr.mxu0 0.0
      %3385 = vmatpush1.msra.mxu0 0.0
      %3386 = vmatprep.subr.mxu0 0.0
      %3387 = vmatpush1.msra.mxu0 0.0
      %3388 = vmatprep.mubr.f32.mxu0 0.0
      %3389 = vmatmul.mubr.f32.gmra.mrb[0].mxu0 %v223
      %v3390 = vpop.f32.mrb[0].mxu0
      %v3391 = vadd.f32 0.0, %v3390
      %v3392 = vpop.f32.mrb[0].mxu0
      %3393 = vdwg.mxu0
      %3394 = vrot.lane.b32.xlu0 %v3318, 32
      %v3395 = vpop.permute.xlu0 %3394
      %v3396 = vsel %vm225, %v3395, 0
      %3398 = vmatprep.subr.mxu0 0.0
      %3399 = vmatpush1.msra.mxu0 %v3396
      %3400 = vmatprep.subr.mxu0 0.0
      %3401 = vmatpush1.msra.mxu0 0.0
      %3402 = vmatprep.subr.mxu0 0.0
      %3403 = vmatpush1.msra.mxu0 0.0
      %3404 = vmatprep.subr.mxu0 0.0
      %3405 = vmatpush1.msra.mxu0 0.0
      %3406 = vmatprep.subr.mxu0 0.0
      %3407 = vmatpush1.msra.mxu0 0.0
      %3408 = vmatprep.subr.mxu0 0.0
      %3409 = vmatpush1.msra.mxu0 0.0
      %3410 = vmatprep.subr.mxu0 0.0
      %3411 = vmatpush1.msra.mxu0 0.0
      %3412 = vmatprep.subr.mxu0 0.0
      %3413 = vmatpush1.msra.mxu0 0.0
      %3414 = vmatprep.subr.mxu0 0.0
      %3415 = vmatpush1.msra.mxu0 0.0
      %3416 = vmatprep.subr.mxu0 0.0
      %3417 = vmatpush1.msra.mxu0 0.0
      %3418 = vmatprep.subr.mxu0 0.0
      %3419 = vmatpush1.msra.mxu0 0.0
      %3420 = vmatprep.subr.mxu0 0.0
      %3421 = vmatpush1.msra.mxu0 0.0
      %3422 = vmatprep.subr.mxu0 0.0
      %3423 = vmatpush1.msra.mxu0 0.0
      %3424 = vmatprep.subr.mxu0 0.0
      %3425 = vmatpush1.msra.mxu0 0.0
      %3426 = vmatprep.subr.mxu0 0.0
      %3427 = vmatpush1.msra.mxu0 0.0
      %3428 = vmatprep.subr.mxu0 0.0
      %3429 = vmatpush1.msra.mxu0 0.0
      %3430 = vmatprep.subr.mxu0 0.0
      %3431 = vmatpush1.msra.mxu0 0.0
      %3432 = vmatprep.subr.mxu0 0.0
      %3433 = vmatpush1.msra.mxu0 0.0
      %3434 = vmatprep.subr.mxu0 0.0
      %3435 = vmatpush1.msra.mxu0 0.0
      %3436 = vmatprep.subr.mxu0 0.0
      %3437 = vmatpush1.msra.mxu0 0.0
      %3438 = vmatprep.subr.mxu0 0.0
      %3439 = vmatpush1.msra.mxu0 0.0
      %3440 = vmatprep.subr.mxu0 0.0
      %3441 = vmatpush1.msra.mxu0 0.0
      %3442 = vmatprep.subr.mxu0 0.0
      %3443 = vmatpush1.msra.mxu0 0.0
      %3444 = vmatprep.subr.mxu0 0.0
      %3445 = vmatpush1.msra.mxu0 0.0
      %3446 = vmatprep.subr.mxu0 0.0
      %3447 = vmatpush1.msra.mxu0 0.0
      %3448 = vmatprep.subr.mxu0 0.0
      %3449 = vmatpush1.msra.mxu0 0.0
      %3450 = vmatprep.subr.mxu0 0.0
      %3451 = vmatpush1.msra.mxu0 0.0
      %3452 = vmatprep.subr.mxu0 0.0
      %3453 = vmatpush1.msra.mxu0 0.0
      %3454 = vmatprep.subr.mxu0 0.0
      %3455 = vmatpush1.msra.mxu0 0.0
      %3456 = vmatprep.subr.mxu0 0.0
      %3457 = vmatpush1.msra.mxu0 0.0
      %3458 = vmatprep.subr.mxu0 0.0
      %3459 = vmatpush1.msra.mxu0 0.0
      %3460 = vmatprep.subr.mxu0 0.0
      %3461 = vmatpush1.msra.mxu0 0.0
      %3462 = vmatprep.mubr.f32.mxu0 0.0
      %3463 = vmatmul.mubr.f32.gmra.mrb[0].mxu0 %v299
      %v3464 = vpop.f32.mrb[0].mxu0
      %v3465 = vadd.f32 %v3391, %v3464
      %v3466 = vpop.f32.mrb[0].mxu0
      %3467 = vdwg.mxu0
      %3468 = vmatprep.subr.mxu0 0.0
      %3469 = vmatpush1.msra.mxu0 %v3322
      %3470 = vmatprep.subr.mxu0 0.0
      %3471 = vmatpush1.msra.mxu0 0.0
      %3472 = vmatprep.subr.mxu0 0.0
      %3473 = vmatpush1.msra.mxu0 0.0
      %3474 = vmatprep.subr.mxu0 0.0
      %3475 = vmatpush1.msra.mxu0 0.0
      %3476 = vmatprep.subr.mxu0 0.0
      %3477 = vmatpush1.msra.mxu0 0.0
      %3478 = vmatprep.subr.mxu0 0.0
      %3479 = vmatpush1.msra.mxu0 0.0
      %3480 = vmatprep.subr.mxu0 0.0
      %3481 = vmatpush1.msra.mxu0 0.0
      %3482 = vmatprep.subr.mxu0 0.0
      %3483 = vmatpush1.msra.mxu0 0.0
      %3484 = vmatprep.subr.mxu0 0.0
      %3485 = vmatpush1.msra.mxu0 0.0
      %3486 = vmatprep.subr.mxu0 0.0
      %3487 = vmatpush1.msra.mxu0 0.0
      %3488 = vmatprep.subr.mxu0 0.0
      %3489 = vmatpush1.msra.mxu0 0.0
      %3490 = vmatprep.subr.mxu0 0.0
      %3491 = vmatpush1.msra.mxu0 0.0
      %3492 = vmatprep.subr.mxu0 0.0
      %3493 = vmatpush1.msra.mxu0 0.0
      %3494 = vmatprep.subr.mxu0 0.0
      %3495 = vmatpush1.msra.mxu0 0.0
      %3496 = vmatprep.subr.mxu0 0.0
      %3497 = vmatpush1.msra.mxu0 0.0
      %3498 = vmatprep.subr.mxu0 0.0
      %3499 = vmatpush1.msra.mxu0 0.0
      %3500 = vmatprep.subr.mxu0 0.0
      %3501 = vmatpush1.msra.mxu0 0.0
      %3502 = vmatprep.subr.mxu0 0.0
      %3503 = vmatpush1.msra.mxu0 0.0
      %3504 = vmatprep.subr.mxu0 0.0
      %3505 = vmatpush1.msra.mxu0 0.0
      %3506 = vmatprep.subr.mxu0 0.0
      %3507 = vmatpush1.msra.mxu0 0.0
      %3508 = vmatprep.subr.mxu0 0.0
      %3509 = vmatpush1.msra.mxu0 0.0
      %3510 = vmatprep.subr.mxu0 0.0
      %3511 = vmatpush1.msra.mxu0 0.0
      %3512 = vmatprep.subr.mxu0 0.0
      %3513 = vmatpush1.msra.mxu0 0.0
      %3514 = vmatprep.subr.mxu0 0.0
      %3515 = vmatpush1.msra.mxu0 0.0
      %3516 = vmatprep.subr.mxu0 0.0
      %3517 = vmatpush1.msra.mxu0 0.0
      %3518 = vmatprep.subr.mxu0 0.0
      %3519 = vmatpush1.msra.mxu0 0.0
      %3520 = vmatprep.subr.mxu0 0.0
      %3521 = vmatpush1.msra.mxu0 0.0
      %3522 = vmatprep.subr.mxu0 0.0
      %3523 = vmatpush1.msra.mxu0 0.0
      %3524 = vmatprep.subr.mxu0 0.0
      %3525 = vmatpush1.msra.mxu0 0.0
      %3526 = vmatprep.subr.mxu0 0.0
      %3527 = vmatpush1.msra.mxu0 0.0
      %3528 = vmatprep.subr.mxu0 0.0
      %3529 = vmatpush1.msra.mxu0 0.0
      %3530 = vmatprep.subr.mxu0 0.0
      %3531 = vmatpush1.msra.mxu0 0.0
      %3532 = vmatprep.mubr.f32.mxu0 0.0
      %3533 = vmatmul.mubr.f32.gmra.mrb[0].mxu0 %v374
      %v3534 = vpop.f32.mrb[0].mxu0
      %v3535 = vadd.f32 0.0, %v3534
      %v3536 = vpop.f32.mrb[0].mxu0
      %3537 = vdwg.mxu0
      %3538 = vmatprep.subr.mxu0 0.0
      %3539 = vmatpush1.msra.mxu0 %v3396
      %3540 = vmatprep.subr.mxu0 0.0
      %3541 = vmatpush1.msra.mxu0 0.0
      %3542 = vmatprep.subr.mxu0 0.0
      %3543 = vmatpush1.msra.mxu0 0.0
      %3544 = vmatprep.subr.mxu0 0.0
      %3545 = vmatpush1.msra.mxu0 0.0
      %3546 = vmatprep.subr.mxu0 0.0
      %3547 = vmatpush1.msra.mxu0 0.0
      %3548 = vmatprep.subr.mxu0 0.0
      %3549 = vmatpush1.msra.mxu0 0.0
      %3550 = vmatprep.subr.mxu0 0.0
      %3551 = vmatpush1.msra.mxu0 0.0
      %3552 = vmatprep.subr.mxu0 0.0
      %3553 = vmatpush1.msra.mxu0 0.0
      %3554 = vmatprep.subr.mxu0 0.0
      %3555 = vmatpush1.msra.mxu0 0.0
      %3556 = vmatprep.subr.mxu0 0.0
      %3557 = vmatpush1.msra.mxu0 0.0
      %3558 = vmatprep.subr.mxu0 0.0
      %3559 = vmatpush1.msra.mxu0 0.0
      %3560 = vmatprep.subr.mxu0 0.0
      %3561 = vmatpush1.msra.mxu0 0.0
      %3562 = vmatprep.subr.mxu0 0.0
      %3563 = vmatpush1.msra.mxu0 0.0
      %3564 = vmatprep.subr.mxu0 0.0
      %3565 = vmatpush1.msra.mxu0 0.0
      %3566 = vmatprep.subr.mxu0 0.0
      %3567 = vmatpush1.msra.mxu0 0.0
      %3568 = vmatprep.subr.mxu0 0.0
      %3569 = vmatpush1.msra.mxu0 0.0
      %3570 = vmatprep.subr.mxu0 0.0
      %3571 = vmatpush1.msra.mxu0 0.0
      %3572 = vmatprep.subr.mxu0 0.0
      %3573 = vmatpush1.msra.mxu0 0.0
      %3574 = vmatprep.subr.mxu0 0.0
      %3575 = vmatpush1.msra.mxu0 0.0
      %3576 = vmatprep.subr.mxu0 0.0
      %3577 = vmatpush1.msra.mxu0 0.0
      %3578 = vmatprep.subr.mxu0 0.0
      %3579 = vmatpush1.msra.mxu0 0.0
      %3580 = vmatprep.subr.mxu0 0.0
      %3581 = vmatpush1.msra.mxu0 0.0
      %3582 = vmatprep.subr.mxu0 0.0
      %3583 = vmatpush1.msra.mxu0 0.0
      %3584 = vmatprep.subr.mxu0 0.0
      %3585 = vmatpush1.msra.mxu0 0.0
      %3586 = vmatprep.subr.mxu0 0.0
      %3587 = vmatpush1.msra.mxu0 0.0
      %3588 = vmatprep.subr.mxu0 0.0
      %3589 = vmatpush1.msra.mxu0 0.0
      %3590 = vmatprep.subr.mxu0 0.0
      %3591 = vmatpush1.msra.mxu0 0.0
      %3592 = vmatprep.subr.mxu0 0.0
      %3593 = vmatpush1.msra.mxu0 0.0
      %3594 = vmatprep.subr.mxu0 0.0
      %3595 = vmatpush1.msra.mxu0 0.0
      %3596 = vmatprep.subr.mxu0 0.0
      %3597 = vmatpush1.msra.mxu0 0.0
      %3598 = vmatprep.subr.mxu0 0.0
      %3599 = vmatpush1.msra.mxu0 0.0
      %3600 = vmatprep.subr.mxu0 0.0
      %3601 = vmatpush1.msra.mxu0 0.0
      %3602 = vmatprep.mubr.f32.mxu0 0.0
      %3603 = vmatmul.mubr.f32.gmra.mrb[0].mxu0 %v447
      %v3604 = vpop.f32.mrb[0].mxu0
      %v3605 = vadd.f32 %v3535, %v3604
      %v3606 = vpop.f32.mrb[0].mxu0
      %3607 = vdwg.mxu0
      %v3609 = vsel %vm519, %v3605, 0
      %3611 = vmatprep.subr.mxu0 0.0
      %3612 = vmatpush1.msra.mxu0 %v215
      %3613 = vmatprep.subr.mxu0 0.0
      %3614 = vmatpush1.msra.mxu0 %v216
      %3615 = vmatprep.subr.mxu0 0.0
      %3616 = vmatpush1.msra.mxu0 0.0
      %3617 = vmatprep.subr.mxu0 0.0
      %3618 = vmatpush1.msra.mxu0 0.0
      %3619 = vmatprep.subr.mxu0 0.0
      %3620 = vmatpush1.msra.mxu0 0.0
      %3621 = vmatprep.subr.mxu0 0.0
      %3622 = vmatpush1.msra.mxu0 0.0
      %3623 = vmatprep.subr.mxu0 0.0
      %3624 = vmatpush1.msra.mxu0 0.0
      %3625 = vmatprep.subr.mxu0 0.0
      %3626 = vmatpush1.msra.mxu0 0.0
      %3627 = vmatprep.subr.mxu0 0.0
      %3628 = vmatpush1.msra.mxu0 0.0
      %3629 = vmatprep.subr.mxu0 0.0
      %3630 = vmatpush1.msra.mxu0 0.0
      %3631 = vmatprep.subr.mxu0 0.0
      %3632 = vmatpush1.msra.mxu0 0.0
      %3633 = vmatprep.subr.mxu0 0.0
      %3634 = vmatpush1.msra.mxu0 0.0
      %3635 = vmatprep.subr.mxu0 0.0
      %3636 = vmatpush1.msra.mxu0 0.0
      %3637 = vmatprep.subr.mxu0 0.0
      %3638 = vmatpush1.msra.mxu0 0.0
      %3639 = vmatprep.subr.mxu0 0.0
      %3640 = vmatpush1.msra.mxu0 0.0
      %3641 = vmatprep.subr.mxu0 0.0
      %3642 = vmatpush1.msra.mxu0 0.0
      %3643 = vmatprep.subr.mxu0 0.0
      %3644 = vmatpush1.msra.mxu0 0.0
      %3645 = vmatprep.subr.mxu0 0.0
      %3646 = vmatpush1.msra.mxu0 0.0
      %3647 = vmatprep.subr.mxu0 0.0
      %3648 = vmatpush1.msra.mxu0 0.0
      %3649 = vmatprep.subr.mxu0 0.0
      %3650 = vmatpush1.msra.mxu0 0.0
      %3651 = vmatprep.subr.mxu0 0.0
      %3652 = vmatpush1.msra.mxu0 0.0
      %3653 = vmatprep.subr.mxu0 0.0
      %3654 = vmatpush1.msra.mxu0 0.0
      %3655 = vmatprep.subr.mxu0 0.0
      %3656 = vmatpush1.msra.mxu0 0.0
      %3657 = vmatprep.subr.mxu0 0.0
      %3658 = vmatpush1.msra.mxu0 0.0
      %3659 = vmatprep.subr.mxu0 0.0
      %3660 = vmatpush1.msra.mxu0 0.0
      %3661 = vmatprep.subr.mxu0 0.0
      %3662 = vmatpush1.msra.mxu0 0.0
      %3663 = vmatprep.subr.mxu0 0.0
      %3664 = vmatpush1.msra.mxu0 0.0
      %3665 = vmatprep.subr.mxu0 0.0
      %3666 = vmatpush1.msra.mxu0 0.0
      %3667 = vmatprep.subr.mxu0 0.0
      %3668 = vmatpush1.msra.mxu0 0.0
      %3669 = vmatprep.subr.mxu0 0.0
      %3670 = vmatpush1.msra.mxu0 0.0
      %3671 = vmatprep.subr.mxu0 0.0
      %3672 = vmatpush1.msra.mxu0 0.0
      %3673 = vmatprep.subr.mxu0 0.0
      %3674 = vmatpush1.msra.mxu0 0.0
      %3675 = vmatprep.mubr.f32.mxu0 0.0
      %3676 = vmatmul.mubr.f32.gmra.mrb[0].mxu0 %v3609
      %v3677 = vpop.f32.mrb[0].mxu0
      %v3678 = vadd.f32 0.0, %v3677
      %v3679 = vpop.f32.mrb[0].mxu0
      %3680 = vdwg.mxu0
      %v3682 = vsel %vm519, %v3465, 0
      %3684 = vmatprep.subr.mxu0 0.0
      %3685 = vmatpush1.msra.mxu0 %v212
      %3686 = vmatprep.subr.mxu0 0.0
      %3687 = vmatpush1.msra.mxu0 %v213
      %3688 = vmatprep.subr.mxu0 0.0
      %3689 = vmatpush1.msra.mxu0 0.0
      %3690 = vmatprep.subr.mxu0 0.0
      %3691 = vmatpush1.msra.mxu0 0.0
      %3692 = vmatprep.subr.mxu0 0.0
      %3693 = vmatpush1.msra.mxu0 0.0
      %3694 = vmatprep.subr.mxu0 0.0
      %3695 = vmatpush1.msra.mxu0 0.0
      %3696 = vmatprep.subr.mxu0 0.0
      %3697 = vmatpush1.msra.mxu0 0.0
      %3698 = vmatprep.subr.mxu0 0.0
      %3699 = vmatpush1.msra.mxu0 0.0
      %3700 = vmatprep.subr.mxu0 0.0
      %3701 = vmatpush1.msra.mxu0 0.0
      %3702 = vmatprep.subr.mxu0 0.0
      %3703 = vmatpush1.msra.mxu0 0.0
      %3704 = vmatprep.subr.mxu0 0.0
      %3705 = vmatpush1.msra.mxu0 0.0
      %3706 = vmatprep.subr.mxu0 0.0
      %3707 = vmatpush1.msra.mxu0 0.0
      %3708 = vmatprep.subr.mxu0 0.0
      %3709 = vmatpush1.msra.mxu0 0.0
      %3710 = vmatprep.subr.mxu0 0.0
      %3711 = vmatpush1.msra.mxu0 0.0
      %3712 = vmatprep.subr.mxu0 0.0
      %3713 = vmatpush1.msra.mxu0 0.0
      %3714 = vmatprep.subr.mxu0 0.0
      %3715 = vmatpush1.msra.mxu0 0.0
      %3716 = vmatprep.subr.mxu0 0.0
      %3717 = vmatpush1.msra.mxu0 0.0
      %3718 = vmatprep.subr.mxu0 0.0
      %3719 = vmatpush1.msra.mxu0 0.0
      %3720 = vmatprep.subr.mxu0 0.0
      %3721 = vmatpush1.msra.mxu0 0.0
      %3722 = vmatprep.subr.mxu0 0.0
      %3723 = vmatpush1.msra.mxu0 0.0
      %3724 = vmatprep.subr.mxu0 0.0
      %3725 = vmatpush1.msra.mxu0 0.0
      %3726 = vmatprep.subr.mxu0 0.0
      %3727 = vmatpush1.msra.mxu0 0.0
      %3728 = vmatprep.subr.mxu0 0.0
      %3729 = vmatpush1.msra.mxu0 0.0
      %3730 = vmatprep.subr.mxu0 0.0
      %3731 = vmatpush1.msra.mxu0 0.0
      %3732 = vmatprep.subr.mxu0 0.0
      %3733 = vmatpush1.msra.mxu0 0.0
      %3734 = vmatprep.subr.mxu0 0.0
      %3735 = vmatpush1.msra.mxu0 0.0
      %3736 = vmatprep.subr.mxu0 0.0
      %3737 = vmatpush1.msra.mxu0 0.0
      %3738 = vmatprep.subr.mxu0 0.0
      %3739 = vmatpush1.msra.mxu0 0.0
      %3740 = vmatprep.subr.mxu0 0.0
      %3741 = vmatpush1.msra.mxu0 0.0
      %3742 = vmatprep.subr.mxu0 0.0
      %3743 = vmatpush1.msra.mxu0 0.0
      %3744 = vmatprep.subr.mxu0 0.0
      %3745 = vmatpush1.msra.mxu0 0.0
      %3746 = vmatprep.subr.mxu0 0.0
      %3747 = vmatpush1.msra.mxu0 0.0
      %3748 = vmatprep.mubr.f32.mxu0 0.0
      %3749 = vmatmul.mubr.f32.gmra.mrb[0].mxu0 %v3682
      %v3750 = vpop.f32.mrb[0].mxu0
      %v3751 = vadd.f32 %v3678, %v3750
      %v3752 = vpop.f32.mrb[0].mxu0
      %3753 = vdwg.mxu0
      %3755 = vrot.lane.b32.xlu0 %v3751, 56
      %v3756 = vpop.permute.xlu0 %3755
      %vm3758 = vcmask 523712
      %3759 = vst.msk [vmem:[%s204] sm:$0xff] %vm3758, %v3756
      %p3760 = scmp.lt.s32.totalorder %s18, 1
      %s3761 = scalar_select %p3760, %s18, 1
      %p3762 = scmp.lt.s32.totalorder %s19, 0
      %s3763 = scalar_select %p3762, %s19, 0
      %s3764 = sadd.s32 %s3763, %s3761
      %s3765 = smul.addr %s3764, 8
      %s3766 = scalar_lea.vmem %s3, %s3765
      // Predicated region
      $region33: #{downscaling_forward.1} parent=31 // pred_check
        %p3767 = pneg %p116
      $region34: #{downscaling_forward.1} parent=31 // pred_check_branch
        %3769 = sbr.rel (%p3767) target = $region36
      $region35: #{downscaling_forward.1} parent=31 // pred_region
        _
      $region36: #{downscaling_forward.1} parent=31 // pred_fallthru
        _
    $region32: #{downscaling_forward.1} parent=5 // pred_fallthru
      _
    %p3770 = scmp.le.s32.totalorder 2, %s9
    // Predicated region
    $region37: #{downscaling_forward.1} parent=5 // pred_check
      %p3771 = pneg %p3770
    $region38: #{downscaling_forward.1} parent=5 // pred_check_branch
      %3773 = sbr.rel (%p3771) target = $region40
    $region39: #{downscaling_forward.1} parent=5 // pred_region
      %s3774 = ssub.s32 %s9, 2
      // Predicated region
      $region41: #{downscaling_forward.1} parent=39 // pred_check
        %p3775 = pneg %p122
      $region42: #{downscaling_forward.1} parent=39 // pred_check_branch
        %3777 = sbr.rel (%p3775) target = $region44
      $region43: #{downscaling_forward.1} parent=39 // pred_region
        %p3778 = scmp.lt.s32.totalorder %s20, 1
        %s3779 = scalar_select %p3778, %s20, 1
        %p3780 = scmp.lt.s32.totalorder %s21, 0
        %s3781 = scalar_select %p3780, %s21, 0
        %s3782 = sadd.s32 %s3781, %s3779
        %s3783 = smul.addr %s3782, 8
        %s3784 = scalar_lea.vmem %s3, %s3783
      $region44: #{downscaling_forward.1} parent=39 // pred_fallthru
        _
    $region40: #{downscaling_forward.1} parent=5 // pred_fallthru
      _
  $region6: #{downscaling_forward.1} parent=0 // loop_footer
    %s13 = sadd.s32 1, %s9
  $region7: #{downscaling_forward.1} parent=0 // loop_footer_branch
    %8 = sbr.rel target = $region3
  $region8: #{downscaling_forward.1} parent=0 // loop_exit
    _

</llo_original>
